<compile_context>
chip_gen: v5e
topology: v5e:2x2
jax: 0.10.0
libtpu: 0.0.40
codegen_flags: <defaults>
</compile_context>

<pallas_src>
import math

import jax
import jax.numpy as jnp
from jax.experimental import pallas as pl
from jax.experimental.pallas import tpu as pltpu


def lstm_kernel(x_ref, w1_ref, w2_ref, b_ref, h0_ref, c0_ref,
                out_bm_ref, out_tm_ref, hF_ref, cF_ref,
                h_sc, c_sc):
    ci = pl.program_id(1)                       # time-chunk index (sequential)
    bblk, tc, C = x_ref.shape
    es = h0_ref.shape[-1]

    # Load the carried state from the provided initial state at the start of
    # each batch block's chain.
    @pl.when(ci == 0)
    def _():
        h_sc[...] = h0_ref[...].astype(jnp.float32)
        c_sc[...] = c0_ref[...].astype(jnp.float32)

    # ---- hoisted, time-parallel input projection for the whole chunk -------
    #   gx = x_chunk @ W1 + (b1 + b2)   -> (bblk, tc, 4*es), stays in VMEM.
    x2d = x_ref[...].reshape(bblk * tc, C)
    gx = (jnp.dot(x2d, w1_ref[...], preferred_element_type=jnp.float32)
          + b_ref[...]).reshape(bblk, tc, 4 * es)

    w2 = w2_ref[...]
    h = h_sc[...]
    c = c_sc[...]

    # ---- sequential recurrence over the chunk ------------------------------
    # tc is a compile-time constant -> fully unrolled, all slices static.
    for t in range(tc):
        v = gx[:, t, :] + jnp.dot(h, w2, preferred_element_type=jnp.float32)
        f_g = jax.nn.sigmoid(v[:, 0 * es:1 * es])
        i_g = jax.nn.sigmoid(v[:, 1 * es:2 * es])
        o_g = jax.nn.sigmoid(v[:, 2 * es:3 * es])
        g_g = jnp.tanh(v[:, 3 * es:4 * es])
        c = f_g * c + i_g * g_g
        h = o_g * jnp.tanh(c)
        # Per-step stores go to the VMEM output blocks; the HBM writeback is a
        # single block DMA per chunk (lane-dense tc*es columns for out_bm).
        out_tm_ref[t] = h.astype(out_tm_ref.dtype)
        out_bm_ref[:, t * es:(t + 1) * es] = h.astype(out_bm_ref.dtype)

    # Persist the carry for the next chunk of this batch block.
    h_sc[...] = h
    c_sc[...] = c

    @pl.when(ci == pl.num_programs(1) - 1)
    def _():
        hF_ref[...] = h.astype(hF_ref.dtype)
        cF_ref[...] = c.astype(cF_ref.dtype)


def lstm_forward(x, W1, W2, b1, b2, initial_state=None, *, tc=None):
    """x: [B, T, C] float32.

    Returns (out_h_1 [B, T*es], out_h_2 [T, B, es], (h [B, es], c [B, es])),
    matching the PyTorch module's forward.
    """
    B, T, C = x.shape
    es = W2.shape[0]
    dt = x.dtype

    if initial_state is None:
        h0 = jnp.zeros((B, es), dt)
        c0 = jnp.zeros((B, es), dt)
    else:
        h0, c0 = initial_state

    # Fold the two biases once (removes a per-step VPU add + one resident buf).
    b = (b1 + b2).reshape(1, 4 * es)

    # Time chunking: Tc must divide T and (unless Tc == T) be a multiple of 8.
    if tc is None:
        tc = next((t for t in (16, 8) if T % t == 0), T)
    assert T % tc == 0, "T must be divisible by the time-chunk size"

    # Batch blocking: gives a 'parallel' grid axis (megacore sharding on v7x).
    # Block must be a multiple of 8 or equal to B (TPU (8,128) block rule).
    if B >= 8:
        bblk = next((bb for bb in (64, 32, 16, 8) if B % bb == 0), B)
    else:
        bblk = B
    assert B % bblk == 0

    grid = (B // bblk, T // tc)

    # Explicit VMEM budget (resident weights + double-buffered chunks + temps).
    fbytes = 4
    est = fbytes * (
        C * 4 * es + es * 4 * es + 4 * es          # resident W1, W2, bias
        + 2 * bblk * tc * C                        # x chunk (double buffered)
        + 2 * (bblk * tc * es + tc * bblk * es)    # output chunks (double buf)
        + 6 * bblk * es                            # h0/c0, final h/c, scratch
        + 4 * bblk * tc * 4 * es                   # gx + temporaries
    )
    vmem_limit = int(min(max(2 * est, 32 * 1024 * 1024), 64 * 1024 * 1024))

    grid_spec = pltpu.PrefetchScalarGridSpec(
        num_scalar_prefetch=0,
        grid=grid,
        in_specs=[
            pl.BlockSpec((bblk, tc, C), lambda bi, ci: (bi, ci, 0)),    # x chunk
            pl.BlockSpec((C, 4 * es), lambda bi, ci: (0, 0)),           # W1 (resident)
            pl.BlockSpec((es, 4 * es), lambda bi, ci: (0, 0)),          # W2 (resident)
            pl.BlockSpec((1, 4 * es), lambda bi, ci: (0, 0)),           # folded bias
            pl.BlockSpec((bblk, es), lambda bi, ci: (bi, 0)),           # h0
            pl.BlockSpec((bblk, es), lambda bi, ci: (bi, 0)),           # c0
        ],
        out_specs=[
            pl.BlockSpec((bblk, tc * es), lambda bi, ci: (bi, ci)),     # [B, T*es]
            pl.BlockSpec((tc, bblk, es), lambda bi, ci: (ci, bi, 0)),   # [T, B, es]
            pl.BlockSpec((bblk, es), lambda bi, ci: (bi, 0)),           # final h
            pl.BlockSpec((bblk, es), lambda bi, ci: (bi, 0)),           # final c
        ],
        scratch_shapes=[
            pltpu.VMEM((bblk, es), jnp.float32),                        # h carry
            pltpu.VMEM((bblk, es), jnp.float32),                        # c carry
        ],
    )

    out_bm, out_tm, h_last, c_last = pl.pallas_call(
        lstm_kernel,
        out_shape=(
            jax.ShapeDtypeStruct((B, T * es), dt),
            jax.ShapeDtypeStruct((T, B, es), dt),
            jax.ShapeDtypeStruct((B, es), dt),
            jax.ShapeDtypeStruct((B, es), dt),
        ),
        grid_spec=grid_spec,
        compiler_params=pltpu.CompilerParams(
            dimension_semantics=("parallel", "arbitrary"),
            vmem_limit_bytes=vmem_limit,
        ),
    )(x, W1, W2, b, h0, c0)

    # Both output layouts come straight from the kernel -> no wrapper transposes.
    out_h_1 = out_bm                  # torch.cat(out_h, dim=-1)
    out_h_2 = out_tm                  # torch.stack(out_h)
    return out_h_1, out_h_2, (h_last, c_last)


def lstm_reference(x, W1, W2, b1, b2, initial_state=None):
    """Pure-JAX reference matching the PyTorch forward exactly."""
    B, T, C = x.shape
    es = W2.shape[0]
    if initial_state is None:
        h = jnp.zeros((B, es), x.dtype)
        c = jnp.zeros((B, es), x.dtype)
    else:
        h, c = initial_state
    outs = []
    for t in range(T):
        xt = x[:, t, :]
        v = xt @ W1 + b1 + h @ W2 + b2
        f = jax.nn.sigmoid(v[:, :es])
        i = jax.nn.sigmoid(v[:, es:2 * es])
        o = jax.nn.sigmoid(v[:, 2 * es:3 * es])
        c_hat = jnp.tanh(v[:, 3 * es:])
        c = f * c + i * c_hat
        h = o * jnp.tanh(c)
        outs.append(h)
    return jnp.concatenate(outs, axis=-1), jnp.stack(outs), (h, c)


if __name__ == "__main__":
    B, T, C, ES = 4, 32, 16, 32    # T=32 with Tc=16 -> 2 sequential chunks

    key = jax.random.PRNGKey(0)
    kx, k1, k2, k3, k4, kh, kc = jax.random.split(key, 7)

    stdv = 1.0 / math.sqrt(ES)
    W1 = jax.random.uniform(k1, (C, 4 * ES), jnp.float32, -stdv, stdv)
    W2 = jax.random.uniform(k2, (ES, 4 * ES), jnp.float32, -stdv, stdv)
    b1 = jax.random.uniform(k3, (4 * ES,), jnp.float32, -stdv, stdv)
    b2 = jax.random.uniform(k4, (4 * ES,), jnp.float32, -stdv, stdv)
    x = jax.random.normal(kx, (B, T, C), jnp.float32)

    # Case 1: default (zero) initial state.
    out_h_1, out_h_2, (h, c) = lstm_forward(x, W1, W2, b1, b2, initial_state=None)
    jax.block_until_ready((out_h_1, out_h_2, h, c))

    r1, r2, (rh, rc) = lstm_reference(x, W1, W2, b1, b2, initial_state=None)
    assert out_h_1.shape == (B, T * ES)
    assert out_h_2.shape == (T, B, ES)
    assert jnp.allclose(out_h_1, r1, atol=1e-5)
    assert jnp.allclose(out_h_2, r2, atol=1e-5)
    assert jnp.allclose(h, rh, atol=1e-5)
    assert jnp.allclose(c, rc, atol=1e-5)

    # Case 2: user-provided initial state.
    h0 = jax.random.normal(kh, (B, ES), jnp.float32)
    c0 = jax.random.normal(kc, (B, ES), jnp.float32)
    o1, o2, (h2, c2) = lstm_forward(x, W1, W2, b1, b2, initial_state=(h0, c0))
    jax.block_until_ready((o1, o2, h2, c2))
    q1, q2, (qh, qc) = lstm_reference(x, W1, W2, b1, b2, initial_state=(h0, c0))
    assert jnp.allclose(o1, q1, atol=1e-5)
    assert jnp.allclose(o2, q2, atol=1e-5)
    assert jnp.allclose(h2, qh, atol=1e-5)
    assert jnp.allclose(c2, qc, atol=1e-5)

    print("KERNEL_OK")
</pallas_src>

<mosaic_0001>
module attributes {stable_mosaic.version = 11 : i64} {
  func.func @lstm_kernel(%arg0: i32, %arg1: i32, %arg2: memref<4x16x16xf32, #tpu.memory_space<vmem>>, %arg3: memref<16x128xf32, #tpu.memory_space<vmem>>, %arg4: memref<32x128xf32, #tpu.memory_space<vmem>>, %arg5: memref<1x128xf32, #tpu.memory_space<vmem>>, %arg6: memref<4x32xf32, #tpu.memory_space<vmem>>, %arg7: memref<4x32xf32, #tpu.memory_space<vmem>>, %arg8: memref<4x512xf32, #tpu.memory_space<vmem>>, %arg9: memref<16x4x32xf32, #tpu.memory_space<vmem>>, %arg10: memref<4x32xf32, #tpu.memory_space<vmem>>, %arg11: memref<4x32xf32, #tpu.memory_space<vmem>>, %arg12: memref<4x32xf32, #tpu.memory_space<vmem>>, %arg13: memref<4x32xf32, #tpu.memory_space<vmem>>) attributes {dimension_semantics = [#tpu.dimension_semantics<parallel>, #tpu.dimension_semantics<arbitrary>], iteration_bounds = array<i64: 1, 2>, scalar_prefetch = 0 : i64, scratch_operands = 2 : i64, tpu.core_type = #tpu.core_type<tc>, window_params = [{transform_indices = @transform_0, window_bounds = array<i64: 4, 16, 16>}, {pipeline_mode = #tpu.pipeline_mode<synchronous>, transform_indices = @transform_1, window_bounds = array<i64: 16, 128>}, {pipeline_mode = #tpu.pipeline_mode<synchronous>, transform_indices = @transform_2, window_bounds = array<i64: 32, 128>}, {pipeline_mode = #tpu.pipeline_mode<synchronous>, transform_indices = @transform_3, window_bounds = array<i64: 1, 128>}, {transform_indices = @transform_4, window_bounds = array<i64: 4, 32>}, {transform_indices = @transform_5, window_bounds = array<i64: 4, 32>}, {transform_indices = @transform_6, window_bounds = array<i64: 4, 512>}, {transform_indices = @transform_7, window_bounds = array<i64: 16, 4, 32>}, {transform_indices = @transform_8, window_bounds = array<i64: 4, 32>}, {transform_indices = @transform_9, window_bounds = array<i64: 4, 32>}]} {
    %c0_i32 = arith.constant 0 : i32
    %0 = arith.cmpi eq, %arg1, %c0_i32 : i32
    %1 = arith.extui %0 : i1 to i32
    %c0_i32_0 = arith.constant 0 : i32
    %2 = arith.cmpi ne, %1, %c0_i32_0 : i32
    scf.if %2 {
      %c0_132 = arith.constant 0 : index
      %c0_133 = arith.constant 0 : index
      %547 = vector.load %arg6[%c0_132, %c0_133] : memref<4x32xf32, #tpu.memory_space<vmem>>, vector<4x32xf32>
      %c0_134 = arith.constant 0 : index
      %c0_135 = arith.constant 0 : index
      %548 = vector.load %arg12[%c0_134, %c0_135] : memref<4x32xf32, #tpu.memory_space<vmem>>, vector<4x32xf32>
      tpu.vector_store %arg12[%c0_134, %c0_135], %547 {strides = array<i32>} : memref<4x32xf32, #tpu.memory_space<vmem>>, vector<4x32xf32>,
      %c0_136 = arith.constant 0 : index
      %c0_137 = arith.constant 0 : index
      %549 = vector.load %arg7[%c0_136, %c0_137] : memref<4x32xf32, #tpu.memory_space<vmem>>, vector<4x32xf32>
      %c0_138 = arith.constant 0 : index
      %c0_139 = arith.constant 0 : index
      %550 = vector.load %arg13[%c0_138, %c0_139] : memref<4x32xf32, #tpu.memory_space<vmem>>, vector<4x32xf32>
      tpu.vector_store %arg13[%c0_138, %c0_139], %549 {strides = array<i32>} : memref<4x32xf32, #tpu.memory_space<vmem>>, vector<4x32xf32>,
    } else {
    }
    %c0 = arith.constant 0 : index
    %c0_1 = arith.constant 0 : index
    %c0_2 = arith.constant 0 : index
    %3 = vector.load %arg2[%c0, %c0_1, %c0_2] : memref<4x16x16xf32, #tpu.memory_space<vmem>>, vector<4x16x16xf32>
    %4 = vector.shape_cast %3 : vector<4x16x16xf32> to vector<64x16xf32>
    %c0_3 = arith.constant 0 : index
    %c0_4 = arith.constant 0 : index
    %5 = vector.load %arg3[%c0_3, %c0_4] : memref<16x128xf32, #tpu.memory_space<vmem>>, vector<16x128xf32>
    %cst = arith.constant dense<0.000000e+00> : vector<64x128xf32>
    %6 = tpu.matmul %4, %5, %cst {dimension_numbers = #tpu.dot_dimension_numbers<[1], [0], [0], [1], [0, 0, 1, 1], [], []>} : vector<64x16xf32>, vector<16x128xf32>, vector<64x128xf32> -> vector<64x128xf32>
    %c0_5 = arith.constant 0 : index
    %c0_6 = arith.constant 0 : index
    %7 = vector.load %arg5[%c0_5, %c0_6] : memref<1x128xf32, #tpu.memory_space<vmem>>, vector<1x128xf32>
    %8 = vector.broadcast %7 : vector<1x128xf32> to vector<64x128xf32>
    %9 = arith.addf %6, %8 : vector<64x128xf32>
    %10 = vector.shape_cast %9 : vector<64x128xf32> to vector<4x16x128xf32>
    %c0_7 = arith.constant 0 : index
    %c0_8 = arith.constant 0 : index
    %11 = vector.load %arg4[%c0_7, %c0_8] : memref<32x128xf32, #tpu.memory_space<vmem>>, vector<32x128xf32>
    %c0_9 = arith.constant 0 : index
    %c0_10 = arith.constant 0 : index
    %12 = vector.load %arg12[%c0_9, %c0_10] : memref<4x32xf32, #tpu.memory_space<vmem>>, vector<4x32xf32>
    %c0_11 = arith.constant 0 : index
    %c0_12 = arith.constant 0 : index
    %13 = vector.load %arg13[%c0_11, %c0_12] : memref<4x32xf32, #tpu.memory_space<vmem>>, vector<4x32xf32>
    %14 = vector.extract_strided_slice %10 {offsets = [0, 0, 0], sizes = [4, 1, 128], strides = [1, 1, 1]} : vector<4x16x128xf32> to vector<4x1x128xf32>
    %15 = vector.shape_cast %14 : vector<4x1x128xf32> to vector<4x128xf32>
    %cst_13 = arith.constant dense<0.000000e+00> : vector<4x128xf32>
    %16 = tpu.matmul %12, %11, %cst_13 {dimension_numbers = #tpu.dot_dimension_numbers<[1], [0], [0], [1], [0, 0, 1, 1], [], []>} : vector<4x32xf32>, vector<32x128xf32>, vector<4x128xf32> -> vector<4x128xf32>
    %17 = arith.addf %15, %16 : vector<4x128xf32>
    %18 = vector.extract_strided_slice %17 {offsets = [0, 0], sizes = [4, 32], strides = [1, 1]} : vector<4x128xf32> to vector<4x32xf32>
    %19 = arith.negf %18 : vector<4x32xf32>
    %20 = math.exp %19 : vector<4x32xf32>
    %cst_14 = arith.constant 1.000000e+00 : f32
    %21 = vector.broadcast %cst_14 : f32 to vector<4x32xf32>
    %22 = arith.addf %21, %20 : vector<4x32xf32>
    %23 = arith.divf %21, %22 : vector<4x32xf32>
    %24 = vector.extract_strided_slice %17 {offsets = [0, 32], sizes = [4, 32], strides = [1, 1]} : vector<4x128xf32> to vector<4x32xf32>
    %25 = arith.negf %24 : vector<4x32xf32>
    %26 = math.exp %25 : vector<4x32xf32>
    %cst_15 = arith.constant 1.000000e+00 : f32
    %27 = vector.broadcast %cst_15 : f32 to vector<4x32xf32>
    %28 = arith.addf %27, %26 : vector<4x32xf32>
    %29 = arith.divf %27, %28 : vector<4x32xf32>
    %30 = vector.extract_strided_slice %17 {offsets = [0, 64], sizes = [4, 32], strides = [1, 1]} : vector<4x128xf32> to vector<4x32xf32>
    %31 = arith.negf %30 : vector<4x32xf32>
    %32 = math.exp %31 : vector<4x32xf32>
    %cst_16 = arith.constant 1.000000e+00 : f32
    %33 = vector.broadcast %cst_16 : f32 to vector<4x32xf32>
    %34 = arith.addf %33, %32 : vector<4x32xf32>
    %35 = arith.divf %33, %34 : vector<4x32xf32>
    %36 = vector.extract_strided_slice %17 {offsets = [0, 96], sizes = [4, 32], strides = [1, 1]} : vector<4x128xf32> to vector<4x32xf32>
    %37 = math.tanh %36 : vector<4x32xf32>
    %38 = arith.mulf %23, %13 : vector<4x32xf32>
    %39 = arith.mulf %29, %37 : vector<4x32xf32>
    %40 = arith.addf %38, %39 : vector<4x32xf32>
    %41 = math.tanh %40 : vector<4x32xf32>
    %42 = arith.mulf %35, %41 : vector<4x32xf32>
    %c0_17 = arith.constant 0 : index
    %c0_18 = arith.constant 0 : index
    %c0_19 = arith.constant 0 : index
    %43 = vector.load %arg9[%c0_17, %c0_18, %c0_19] : memref<16x4x32xf32, #tpu.memory_space<vmem>>, vector<1x4x32xf32>
    %44 = vector.shape_cast %43 : vector<1x4x32xf32> to vector<4x32xf32>
    %45 = vector.shape_cast %42 : vector<4x32xf32> to vector<1x4x32xf32>
    tpu.vector_store %arg9[%c0_17, %c0_18, %c0_19], %45 {strides = array<i32>} : memref<16x4x32xf32, #tpu.memory_space<vmem>>, vector<1x4x32xf32>,
    %c0_20 = arith.constant 0 : index
    %c0_21 = arith.constant 0 : index
    %46 = vector.load %arg8[%c0_20, %c0_21] : memref<4x512xf32, #tpu.memory_space<vmem>>, vector<4x32xf32>
    tpu.vector_store %arg8[%c0_20, %c0_21], %42 {strides = array<i32>} : memref<4x512xf32, #tpu.memory_space<vmem>>, vector<4x32xf32>,
    %47 = vector.extract_strided_slice %10 {offsets = [0, 1, 0], sizes = [4, 1, 128], strides = [1, 1, 1]} : vector<4x16x128xf32> to vector<4x1x128xf32>
    %48 = vector.shape_cast %47 : vector<4x1x128xf32> to vector<4x128xf32>
    %cst_22 = arith.constant dense<0.000000e+00> : vector<4x128xf32>
    %49 = tpu.matmul %42, %11, %cst_22 {dimension_numbers = #tpu.dot_dimension_numbers<[1], [0], [0], [1], [0, 0, 1, 1], [], []>} : vector<4x32xf32>, vector<32x128xf32>, vector<4x128xf32> -> vector<4x128xf32>
    %50 = arith.addf %48, %49 : vector<4x128xf32>
    %51 = vector.extract_strided_slice %50 {offsets = [0, 0], sizes = [4, 32], strides = [1, 1]} : vector<4x128xf32> to vector<4x32xf32>
    %52 = arith.negf %51 : vector<4x32xf32>
    %53 = math.exp %52 : vector<4x32xf32>
    %cst_23 = arith.constant 1.000000e+00 : f32
    %54 = vector.broadcast %cst_23 : f32 to vector<4x32xf32>
    %55 = arith.addf %54, %53 : vector<4x32xf32>
    %56 = arith.divf %54, %55 : vector<4x32xf32>
    %57 = vector.extract_strided_slice %50 {offsets = [0, 32], sizes = [4, 32], strides = [1, 1]} : vector<4x128xf32> to vector<4x32xf32>
    %58 = arith.negf %57 : vector<4x32xf32>
    %59 = math.exp %58 : vector<4x32xf32>
    %cst_24 = arith.constant 1.000000e+00 : f32
    %60 = vector.broadcast %cst_24 : f32 to vector<4x32xf32>
    %61 = arith.addf %60, %59 : vector<4x32xf32>
    %62 = arith.divf %60, %61 : vector<4x32xf32>
    %63 = vector.extract_strided_slice %50 {offsets = [0, 64], sizes = [4, 32], strides = [1, 1]} : vector<4x128xf32> to vector<4x32xf32>
    %64 = arith.negf %63 : vector<4x32xf32>
    %65 = math.exp %64 : vector<4x32xf32>
    %cst_25 = arith.constant 1.000000e+00 : f32
    %66 = vector.broadcast %cst_25 : f32 to vector<4x32xf32>
    %67 = arith.addf %66, %65 : vector<4x32xf32>
    %68 = arith.divf %66, %67 : vector<4x32xf32>
    %69 = vector.extract_strided_slice %50 {offsets = [0, 96], sizes = [4, 32], strides = [1, 1]} : vector<4x128xf32> to vector<4x32xf32>
    %70 = math.tanh %69 : vector<4x32xf32>
    %71 = arith.mulf %56, %40 : vector<4x32xf32>
    %72 = arith.mulf %62, %70 : vector<4x32xf32>
    %73 = arith.addf %71, %72 : vector<4x32xf32>
    %74 = math.tanh %73 : vector<4x32xf32>
    %75 = arith.mulf %68, %74 : vector<4x32xf32>
    %c1 = arith.constant 1 : index
    %c0_26 = arith.constant 0 : index
    %c0_27 = arith.constant 0 : index
    %76 = vector.load %arg9[%c1, %c0_26, %c0_27] : memref<16x4x32xf32, #tpu.memory_space<vmem>>, vector<1x4x32xf32>
    %77 = vector.shape_cast %76 : vector<1x4x32xf32> to vector<4x32xf32>
    %78 = vector.shape_cast %75 : vector<4x32xf32> to vector<1x4x32xf32>
    tpu.vector_store %arg9[%c1, %c0_26, %c0_27], %78 {strides = array<i32>} : memref<16x4x32xf32, #tpu.memory_space<vmem>>, vector<1x4x32xf32>,
    %c0_28 = arith.constant 0 : index
    %c32 = arith.constant 32 : index
    %79 = vector.load %arg8[%c0_28, %c32] : memref<4x512xf32, #tpu.memory_space<vmem>>, vector<4x32xf32>
    tpu.vector_store %arg8[%c0_28, %c32], %75 {strides = array<i32>} : memref<4x512xf32, #tpu.memory_space<vmem>>, vector<4x32xf32>,
    %80 = vector.extract_strided_slice %10 {offsets = [0, 2, 0], sizes = [4, 1, 128], strides = [1, 1, 1]} : vector<4x16x128xf32> to vector<4x1x128xf32>
    %81 = vector.shape_cast %80 : vector<4x1x128xf32> to vector<4x128xf32>
    %cst_29 = arith.constant dense<0.000000e+00> : vector<4x128xf32>
    %82 = tpu.matmul %75, %11, %cst_29 {dimension_numbers = #tpu.dot_dimension_numbers<[1], [0], [0], [1], [0, 0, 1, 1], [], []>} : vector<4x32xf32>, vector<32x128xf32>, vector<4x128xf32> -> vector<4x128xf32>
    %83 = arith.addf %81, %82 : vector<4x128xf32>
    %84 = vector.extract_strided_slice %83 {offsets = [0, 0], sizes = [4, 32], strides = [1, 1]} : vector<4x128xf32> to vector<4x32xf32>
    %85 = arith.negf %84 : vector<4x32xf32>
    %86 = math.exp %85 : vector<4x32xf32>
    %cst_30 = arith.constant 1.000000e+00 : f32
    %87 = vector.broadcast %cst_30 : f32 to vector<4x32xf32>
    %88 = arith.addf %87, %86 : vector<4x32xf32>
    %89 = arith.divf %87, %88 : vector<4x32xf32>
    %90 = vector.extract_strided_slice %83 {offsets = [0, 32], sizes = [4, 32], strides = [1, 1]} : vector<4x128xf32> to vector<4x32xf32>
    %91 = arith.negf %90 : vector<4x32xf32>
    %92 = math.exp %91 : vector<4x32xf32>
    %cst_31 = arith.constant 1.000000e+00 : f32
    %93 = vector.broadcast %cst_31 : f32 to vector<4x32xf32>
    %94 = arith.addf %93, %92 : vector<4x32xf32>
    %95 = arith.divf %93, %94 : vector<4x32xf32>
    %96 = vector.extract_strided_slice %83 {offsets = [0, 64], sizes = [4, 32], strides = [1, 1]} : vector<4x128xf32> to vector<4x32xf32>
    %97 = arith.negf %96 : vector<4x32xf32>
    %98 = math.exp %97 : vector<4x32xf32>
    %cst_32 = arith.constant 1.000000e+00 : f32
    %99 = vector.broadcast %cst_32 : f32 to vector<4x32xf32>
    %100 = arith.addf %99, %98 : vector<4x32xf32>
    %101 = arith.divf %99, %100 : vector<4x32xf32>
    %102 = vector.extract_strided_slice %83 {offsets = [0, 96], sizes = [4, 32], strides = [1, 1]} : vector<4x128xf32> to vector<4x32xf32>
    %103 = math.tanh %102 : vector<4x32xf32>
    %104 = arith.mulf %89, %73 : vector<4x32xf32>
    %105 = arith.mulf %95, %103 : vector<4x32xf32>
    %106 = arith.addf %104, %105 : vector<4x32xf32>
    %107 = math.tanh %106 : vector<4x32xf32>
    %108 = arith.mulf %101, %107 : vector<4x32xf32>
    %c2 = arith.constant 2 : index
    %c0_33 = arith.constant 0 : index
    %c0_34 = arith.constant 0 : index
    %109 = vector.load %arg9[%c2, %c0_33, %c0_34] : memref<16x4x32xf32, #tpu.memory_space<vmem>>, vector<1x4x32xf32>
    %110 = vector.shape_cast %109 : vector<1x4x32xf32> to vector<4x32xf32>
    %111 = vector.shape_cast %108 : vector<4x32xf32> to vector<1x4x32xf32>
    tpu.vector_store %arg9[%c2, %c0_33, %c0_34], %111 {strides = array<i32>} : memref<16x4x32xf32, #tpu.memory_space<vmem>>, vector<1x4x32xf32>,
    %c0_35 = arith.constant 0 : index
    %c64 = arith.constant 64 : index
    %112 = vector.load %arg8[%c0_35, %c64] : memref<4x512xf32, #tpu.memory_space<vmem>>, vector<4x32xf32>
    tpu.vector_store %arg8[%c0_35, %c64], %108 {strides = array<i32>} : memref<4x512xf32, #tpu.memory_space<vmem>>, vector<4x32xf32>,
    %113 = vector.extract_strided_slice %10 {offsets = [0, 3, 0], sizes = [4, 1, 128], strides = [1, 1, 1]} : vector<4x16x128xf32> to vector<4x1x128xf32>
    %114 = vector.shape_cast %113 : vector<4x1x128xf32> to vector<4x128xf32>
    %cst_36 = arith.constant dense<0.000000e+00> : vector<4x128xf32>
    %115 = tpu.matmul %108, %11, %cst_36 {dimension_numbers = #tpu.dot_dimension_numbers<[1], [0], [0], [1], [0, 0, 1, 1], [], []>} : vector<4x32xf32>, vector<32x128xf32>, vector<4x128xf32> -> vector<4x128xf32>
    %116 = arith.addf %114, %115 : vector<4x128xf32>
    %117 = vector.extract_strided_slice %116 {offsets = [0, 0], sizes = [4, 32], strides = [1, 1]} : vector<4x128xf32> to vector<4x32xf32>
    %118 = arith.negf %117 : vector<4x32xf32>
    %119 = math.exp %118 : vector<4x32xf32>
    %cst_37 = arith.constant 1.000000e+00 : f32
    %120 = vector.broadcast %cst_37 : f32 to vector<4x32xf32>
    %121 = arith.addf %120, %119 : vector<4x32xf32>
    %122 = arith.divf %120, %121 : vector<4x32xf32>
    %123 = vector.extract_strided_slice %116 {offsets = [0, 32], sizes = [4, 32], strides = [1, 1]} : vector<4x128xf32> to vector<4x32xf32>
    %124 = arith.negf %123 : vector<4x32xf32>
    %125 = math.exp %124 : vector<4x32xf32>
    %cst_38 = arith.constant 1.000000e+00 : f32
    %126 = vector.broadcast %cst_38 : f32 to vector<4x32xf32>
    %127 = arith.addf %126, %125 : vector<4x32xf32>
    %128 = arith.divf %126, %127 : vector<4x32xf32>
    %129 = vector.extract_strided_slice %116 {offsets = [0, 64], sizes = [4, 32], strides = [1, 1]} : vector<4x128xf32> to vector<4x32xf32>
    %130 = arith.negf %129 : vector<4x32xf32>
    %131 = math.exp %130 : vector<4x32xf32>
    %cst_39 = arith.constant 1.000000e+00 : f32
    %132 = vector.broadcast %cst_39 : f32 to vector<4x32xf32>
    %133 = arith.addf %132, %131 : vector<4x32xf32>
    %134 = arith.divf %132, %133 : vector<4x32xf32>
    %135 = vector.extract_strided_slice %116 {offsets = [0, 96], sizes = [4, 32], strides = [1, 1]} : vector<4x128xf32> to vector<4x32xf32>
    %136 = math.tanh %135 : vector<4x32xf32>
    %137 = arith.mulf %122, %106 : vector<4x32xf32>
    %138 = arith.mulf %128, %136 : vector<4x32xf32>
    %139 = arith.addf %137, %138 : vector<4x32xf32>
    %140 = math.tanh %139 : vector<4x32xf32>
    %141 = arith.mulf %134, %140 : vector<4x32xf32>
    %c3 = arith.constant 3 : index
    %c0_40 = arith.constant 0 : index
    %c0_41 = arith.constant 0 : index
    %142 = vector.load %arg9[%c3, %c0_40, %c0_41] : memref<16x4x32xf32, #tpu.memory_space<vmem>>, vector<1x4x32xf32>
    %143 = vector.shape_cast %142 : vector<1x4x32xf32> to vector<4x32xf32>
    %144 = vector.shape_cast %141 : vector<4x32xf32> to vector<1x4x32xf32>
    tpu.vector_store %arg9[%c3, %c0_40, %c0_41], %144 {strides = array<i32>} : memref<16x4x32xf32, #tpu.memory_space<vmem>>, vector<1x4x32xf32>,
    %c0_42 = arith.constant 0 : index
    %c96 = arith.constant 96 : index
    %145 = vector.load %arg8[%c0_42, %c96] : memref<4x512xf32, #tpu.memory_space<vmem>>, vector<4x32xf32>
    tpu.vector_store %arg8[%c0_42, %c96], %141 {strides = array<i32>} : memref<4x512xf32, #tpu.memory_space<vmem>>, vector<4x32xf32>,
    %146 = vector.extract_strided_slice %10 {offsets = [0, 4, 0], sizes = [4, 1, 128], strides = [1, 1, 1]} : vector<4x16x128xf32> to vector<4x1x128xf32>
    %147 = vector.shape_cast %146 : vector<4x1x128xf32> to vector<4x128xf32>
    %cst_43 = arith.constant dense<0.000000e+00> : vector<4x128xf32>
    %148 = tpu.matmul %141, %11, %cst_43 {dimension_numbers = #tpu.dot_dimension_numbers<[1], [0], [0], [1], [0, 0, 1, 1], [], []>} : vector<4x32xf32>, vector<32x128xf32>, vector<4x128xf32> -> vector<4x128xf32>
    %149 = arith.addf %147, %148 : vector<4x128xf32>
    %150 = vector.extract_strided_slice %149 {offsets = [0, 0], sizes = [4, 32], strides = [1, 1]} : vector<4x128xf32> to vector<4x32xf32>
    %151 = arith.negf %150 : vector<4x32xf32>
    %152 = math.exp %151 : vector<4x32xf32>
    %cst_44 = arith.constant 1.000000e+00 : f32
    %153 = vector.broadcast %cst_44 : f32 to vector<4x32xf32>
    %154 = arith.addf %153, %152 : vector<4x32xf32>
    %155 = arith.divf %153, %154 : vector<4x32xf32>
    %156 = vector.extract_strided_slice %149 {offsets = [0, 32], sizes = [4, 32], strides = [1, 1]} : vector<4x128xf32> to vector<4x32xf32>
    %157 = arith.negf %156 : vector<4x32xf32>
    %158 = math.exp %157 : vector<4x32xf32>
    %cst_45 = arith.constant 1.000000e+00 : f32
    %159 = vector.broadcast %cst_45 : f32 to vector<4x32xf32>
    %160 = arith.addf %159, %158 : vector<4x32xf32>
    %161 = arith.divf %159, %160 : vector<4x32xf32>
    %162 = vector.extract_strided_slice %149 {offsets = [0, 64], sizes = [4, 32], strides = [1, 1]} : vector<4x128xf32> to vector<4x32xf32>
    %163 = arith.negf %162 : vector<4x32xf32>
    %164 = math.exp %163 : vector<4x32xf32>
    %cst_46 = arith.constant 1.000000e+00 : f32
    %165 = vector.broadcast %cst_46 : f32 to vector<4x32xf32>
    %166 = arith.addf %165, %164 : vector<4x32xf32>
    %167 = arith.divf %165, %166 : vector<4x32xf32>
    %168 = vector.extract_strided_slice %149 {offsets = [0, 96], sizes = [4, 32], strides = [1, 1]} : vector<4x128xf32> to vector<4x32xf32>
    %169 = math.tanh %168 : vector<4x32xf32>
    %170 = arith.mulf %155, %139 : vector<4x32xf32>
    %171 = arith.mulf %161, %169 : vector<4x32xf32>
    %172 = arith.addf %170, %171 : vector<4x32xf32>
    %173 = math.tanh %172 : vector<4x32xf32>
    %174 = arith.mulf %167, %173 : vector<4x32xf32>
    %c4 = arith.constant 4 : index
    %c0_47 = arith.constant 0 : index
    %c0_48 = arith.constant 0 : index
    %175 = vector.load %arg9[%c4, %c0_47, %c0_48] : memref<16x4x32xf32, #tpu.memory_space<vmem>>, vector<1x4x32xf32>
    %176 = vector.shape_cast %175 : vector<1x4x32xf32> to vector<4x32xf32>
    %177 = vector.shape_cast %174 : vector<4x32xf32> to vector<1x4x32xf32>
    tpu.vector_store %arg9[%c4, %c0_47, %c0_48], %177 {strides = array<i32>} : memref<16x4x32xf32, #tpu.memory_space<vmem>>, vector<1x4x32xf32>,
    %c0_49 = arith.constant 0 : index
    %c128 = arith.constant 128 : index
    %178 = vector.load %arg8[%c0_49, %c128] : memref<4x512xf32, #tpu.memory_space<vmem>>, vector<4x32xf32>
    tpu.vector_store %arg8[%c0_49, %c128], %174 {strides = array<i32>} : memref<4x512xf32, #tpu.memory_space<vmem>>, vector<4x32xf32>,
    %179 = vector.extract_strided_slice %10 {offsets = [0, 5, 0], sizes = [4, 1, 128], strides = [1, 1, 1]} : vector<4x16x128xf32> to vector<4x1x128xf32>
    %180 = vector.shape_cast %179 : vector<4x1x128xf32> to vector<4x128xf32>
    %cst_50 = arith.constant dense<0.000000e+00> : vector<4x128xf32>
    %181 = tpu.matmul %174, %11, %cst_50 {dimension_numbers = #tpu.dot_dimension_numbers<[1], [0], [0], [1], [0, 0, 1, 1], [], []>} : vector<4x32xf32>, vector<32x128xf32>, vector<4x128xf32> -> vector<4x128xf32>
    %182 = arith.addf %180, %181 : vector<4x128xf32>
    %183 = vector.extract_strided_slice %182 {offsets = [0, 0], sizes = [4, 32], strides = [1, 1]} : vector<4x128xf32> to vector<4x32xf32>
    %184 = arith.negf %183 : vector<4x32xf32>
    %185 = math.exp %184 : vector<4x32xf32>
    %cst_51 = arith.constant 1.000000e+00 : f32
    %186 = vector.broadcast %cst_51 : f32 to vector<4x32xf32>
    %187 = arith.addf %186, %185 : vector<4x32xf32>
    %188 = arith.divf %186, %187 : vector<4x32xf32>
    %189 = vector.extract_strided_slice %182 {offsets = [0, 32], sizes = [4, 32], strides = [1, 1]} : vector<4x128xf32> to vector<4x32xf32>
    %190 = arith.negf %189 : vector<4x32xf32>
    %191 = math.exp %190 : vector<4x32xf32>
    %cst_52 = arith.constant 1.000000e+00 : f32
    %192 = vector.broadcast %cst_52 : f32 to vector<4x32xf32>
    %193 = arith.addf %192, %191 : vector<4x32xf32>
    %194 = arith.divf %192, %193 : vector<4x32xf32>
    %195 = vector.extract_strided_slice %182 {offsets = [0, 64], sizes = [4, 32], strides = [1, 1]} : vector<4x128xf32> to vector<4x32xf32>
    %196 = arith.negf %195 : vector<4x32xf32>
    %197 = math.exp %196 : vector<4x32xf32>
    %cst_53 = arith.constant 1.000000e+00 : f32
    %198 = vector.broadcast %cst_53 : f32 to vector<4x32xf32>
    %199 = arith.addf %198, %197 : vector<4x32xf32>
    %200 = arith.divf %198, %199 : vector<4x32xf32>
    %201 = vector.extract_strided_slice %182 {offsets = [0, 96], sizes = [4, 32], strides = [1, 1]} : vector<4x128xf32> to vector<4x32xf32>
    %202 = math.tanh %201 : vector<4x32xf32>
    %203 = arith.mulf %188, %172 : vector<4x32xf32>
    %204 = arith.mulf %194, %202 : vector<4x32xf32>
    %205 = arith.addf %203, %204 : vector<4x32xf32>
    %206 = math.tanh %205 : vector<4x32xf32>
    %207 = arith.mulf %200, %206 : vector<4x32xf32>
    %c5 = arith.constant 5 : index
    %c0_54 = arith.constant 0 : index
    %c0_55 = arith.constant 0 : index
    %208 = vector.load %arg9[%c5, %c0_54, %c0_55] : memref<16x4x32xf32, #tpu.memory_space<vmem>>, vector<1x4x32xf32>
    %209 = vector.shape_cast %208 : vector<1x4x32xf32> to vector<4x32xf32>
    %210 = vector.shape_cast %207 : vector<4x32xf32> to vector<1x4x32xf32>
    tpu.vector_store %arg9[%c5, %c0_54, %c0_55], %210 {strides = array<i32>} : memref<16x4x32xf32, #tpu.memory_space<vmem>>, vector<1x4x32xf32>,
    %c0_56 = arith.constant 0 : index
    %c160 = arith.constant 160 : index
    %211 = vector.load %arg8[%c0_56, %c160] : memref<4x512xf32, #tpu.memory_space<vmem>>, vector<4x32xf32>
    tpu.vector_store %arg8[%c0_56, %c160], %207 {strides = array<i32>} : memref<4x512xf32, #tpu.memory_space<vmem>>, vector<4x32xf32>,
    %212 = vector.extract_strided_slice %10 {offsets = [0, 6, 0], sizes = [4, 1, 128], strides = [1, 1, 1]} : vector<4x16x128xf32> to vector<4x1x128xf32>
    %213 = vector.shape_cast %212 : vector<4x1x128xf32> to vector<4x128xf32>
    %cst_57 = arith.constant dense<0.000000e+00> : vector<4x128xf32>
    %214 = tpu.matmul %207, %11, %cst_57 {dimension_numbers = #tpu.dot_dimension_numbers<[1], [0], [0], [1], [0, 0, 1, 1], [], []>} : vector<4x32xf32>, vector<32x128xf32>, vector<4x128xf32> -> vector<4x128xf32>
    %215 = arith.addf %213, %214 : vector<4x128xf32>
    %216 = vector.extract_strided_slice %215 {offsets = [0, 0], sizes = [4, 32], strides = [1, 1]} : vector<4x128xf32> to vector<4x32xf32>
    %217 = arith.negf %216 : vector<4x32xf32>
    %218 = math.exp %217 : vector<4x32xf32>
    %cst_58 = arith.constant 1.000000e+00 : f32
    %219 = vector.broadcast %cst_58 : f32 to vector<4x32xf32>
    %220 = arith.addf %219, %218 : vector<4x32xf32>
    %221 = arith.divf %219, %220 : vector<4x32xf32>
    %222 = vector.extract_strided_slice %215 {offsets = [0, 32], sizes = [4, 32], strides = [1, 1]} : vector<4x128xf32> to vector<4x32xf32>
    %223 = arith.negf %222 : vector<4x32xf32>
    %224 = math.exp %223 : vector<4x32xf32>
    %cst_59 = arith.constant 1.000000e+00 : f32
    %225 = vector.broadcast %cst_59 : f32 to vector<4x32xf32>
    %226 = arith.addf %225, %224 : vector<4x32xf32>
    %227 = arith.divf %225, %226 : vector<4x32xf32>
    %228 = vector.extract_strided_slice %215 {offsets = [0, 64], sizes = [4, 32], strides = [1, 1]} : vector<4x128xf32> to vector<4x32xf32>
    %229 = arith.negf %228 : vector<4x32xf32>
    %230 = math.exp %229 : vector<4x32xf32>
    %cst_60 = arith.constant 1.000000e+00 : f32
    %231 = vector.broadcast %cst_60 : f32 to vector<4x32xf32>
    %232 = arith.addf %231, %230 : vector<4x32xf32>
    %233 = arith.divf %231, %232 : vector<4x32xf32>
    %234 = vector.extract_strided_slice %215 {offsets = [0, 96], sizes = [4, 32], strides = [1, 1]} : vector<4x128xf32> to vector<4x32xf32>
    %235 = math.tanh %234 : vector<4x32xf32>
    %236 = arith.mulf %221, %205 : vector<4x32xf32>
    %237 = arith.mulf %227, %235 : vector<4x32xf32>
    %238 = arith.addf %236, %237 : vector<4x32xf32>
    %239 = math.tanh %238 : vector<4x32xf32>
    %240 = arith.mulf %233, %239 : vector<4x32xf32>
    %c6 = arith.constant 6 : index
    %c0_61 = arith.constant 0 : index
    %c0_62 = arith.constant 0 : index
    %241 = vector.load %arg9[%c6, %c0_61, %c0_62] : memref<16x4x32xf32, #tpu.memory_space<vmem>>, vector<1x4x32xf32>
    %242 = vector.shape_cast %241 : vector<1x4x32xf32> to vector<4x32xf32>
    %243 = vector.shape_cast %240 : vector<4x32xf32> to vector<1x4x32xf32>
    tpu.vector_store %arg9[%c6, %c0_61, %c0_62], %243 {strides = array<i32>} : memref<16x4x32xf32, #tpu.memory_space<vmem>>, vector<1x4x32xf32>,
    %c0_63 = arith.constant 0 : index
    %c192 = arith.constant 192 : index
    %244 = vector.load %arg8[%c0_63, %c192] : memref<4x512xf32, #tpu.memory_space<vmem>>, vector<4x32xf32>
    tpu.vector_store %arg8[%c0_63, %c192], %240 {strides = array<i32>} : memref<4x512xf32, #tpu.memory_space<vmem>>, vector<4x32xf32>,
    %245 = vector.extract_strided_slice %10 {offsets = [0, 7, 0], sizes = [4, 1, 128], strides = [1, 1, 1]} : vector<4x16x128xf32> to vector<4x1x128xf32>
    %246 = vector.shape_cast %245 : vector<4x1x128xf32> to vector<4x128xf32>
    %cst_64 = arith.constant dense<0.000000e+00> : vector<4x128xf32>
    %247 = tpu.matmul %240, %11, %cst_64 {dimension_numbers = #tpu.dot_dimension_numbers<[1], [0], [0], [1], [0, 0, 1, 1], [], []>} : vector<4x32xf32>, vector<32x128xf32>, vector<4x128xf32> -> vector<4x128xf32>
    %248 = arith.addf %246, %247 : vector<4x128xf32>
    %249 = vector.extract_strided_slice %248 {offsets = [0, 0], sizes = [4, 32], strides = [1, 1]} : vector<4x128xf32> to vector<4x32xf32>
    %250 = arith.negf %249 : vector<4x32xf32>
    %251 = math.exp %250 : vector<4x32xf32>
    %cst_65 = arith.constant 1.000000e+00 : f32
    %252 = vector.broadcast %cst_65 : f32 to vector<4x32xf32>
    %253 = arith.addf %252, %251 : vector<4x32xf32>
    %254 = arith.divf %252, %253 : vector<4x32xf32>
    %255 = vector.extract_strided_slice %248 {offsets = [0, 32], sizes = [4, 32], strides = [1, 1]} : vector<4x128xf32> to vector<4x32xf32>
    %256 = arith.negf %255 : vector<4x32xf32>
    %257 = math.exp %256 : vector<4x32xf32>
    %cst_66 = arith.constant 1.000000e+00 : f32
    %258 = vector.broadcast %cst_66 : f32 to vector<4x32xf32>
    %259 = arith.addf %258, %257 : vector<4x32xf32>
    %260 = arith.divf %258, %259 : vector<4x32xf32>
    %261 = vector.extract_strided_slice %248 {offsets = [0, 64], sizes = [4, 32], strides = [1, 1]} : vector<4x128xf32> to vector<4x32xf32>
    %262 = arith.negf %261 : vector<4x32xf32>
    %263 = math.exp %262 : vector<4x32xf32>
    %cst_67 = arith.constant 1.000000e+00 : f32
    %264 = vector.broadcast %cst_67 : f32 to vector<4x32xf32>
    %265 = arith.addf %264, %263 : vector<4x32xf32>
    %266 = arith.divf %264, %265 : vector<4x32xf32>
    %267 = vector.extract_strided_slice %248 {offsets = [0, 96], sizes = [4, 32], strides = [1, 1]} : vector<4x128xf32> to vector<4x32xf32>
    %268 = math.tanh %267 : vector<4x32xf32>
    %269 = arith.mulf %254, %238 : vector<4x32xf32>
    %270 = arith.mulf %260, %268 : vector<4x32xf32>
    %271 = arith.addf %269, %270 : vector<4x32xf32>
    %272 = math.tanh %271 : vector<4x32xf32>
    %273 = arith.mulf %266, %272 : vector<4x32xf32>
    %c7 = arith.constant 7 : index
    %c0_68 = arith.constant 0 : index
    %c0_69 = arith.constant 0 : index
    %274 = vector.load %arg9[%c7, %c0_68, %c0_69] : memref<16x4x32xf32, #tpu.memory_space<vmem>>, vector<1x4x32xf32>
    %275 = vector.shape_cast %274 : vector<1x4x32xf32> to vector<4x32xf32>
    %276 = vector.shape_cast %273 : vector<4x32xf32> to vector<1x4x32xf32>
    tpu.vector_store %arg9[%c7, %c0_68, %c0_69], %276 {strides = array<i32>} : memref<16x4x32xf32, #tpu.memory_space<vmem>>, vector<1x4x32xf32>,
    %c0_70 = arith.constant 0 : index
    %c224 = arith.constant 224 : index
    %277 = vector.load %arg8[%c0_70, %c224] : memref<4x512xf32, #tpu.memory_space<vmem>>, vector<4x32xf32>
    tpu.vector_store %arg8[%c0_70, %c224], %273 {strides = array<i32>} : memref<4x512xf32, #tpu.memory_space<vmem>>, vector<4x32xf32>,
    %278 = vector.extract_strided_slice %10 {offsets = [0, 8, 0], sizes = [4, 1, 128], strides = [1, 1, 1]} : vector<4x16x128xf32> to vector<4x1x128xf32>
    %279 = vector.shape_cast %278 : vector<4x1x128xf32> to vector<4x128xf32>
    %cst_71 = arith.constant dense<0.000000e+00> : vector<4x128xf32>
    %280 = tpu.matmul %273, %11, %cst_71 {dimension_numbers = #tpu.dot_dimension_numbers<[1], [0], [0], [1], [0, 0, 1, 1], [], []>} : vector<4x32xf32>, vector<32x128xf32>, vector<4x128xf32> -> vector<4x128xf32>
    %281 = arith.addf %279, %280 : vector<4x128xf32>
    %282 = vector.extract_strided_slice %281 {offsets = [0, 0], sizes = [4, 32], strides = [1, 1]} : vector<4x128xf32> to vector<4x32xf32>
    %283 = arith.negf %282 : vector<4x32xf32>
    %284 = math.exp %283 : vector<4x32xf32>
    %cst_72 = arith.constant 1.000000e+00 : f32
    %285 = vector.broadcast %cst_72 : f32 to vector<4x32xf32>
    %286 = arith.addf %285, %284 : vector<4x32xf32>
    %287 = arith.divf %285, %286 : vector<4x32xf32>
    %288 = vector.extract_strided_slice %281 {offsets = [0, 32], sizes = [4, 32], strides = [1, 1]} : vector<4x128xf32> to vector<4x32xf32>
    %289 = arith.negf %288 : vector<4x32xf32>
    %290 = math.exp %289 : vector<4x32xf32>
    %cst_73 = arith.constant 1.000000e+00 : f32
    %291 = vector.broadcast %cst_73 : f32 to vector<4x32xf32>
    %292 = arith.addf %291, %290 : vector<4x32xf32>
    %293 = arith.divf %291, %292 : vector<4x32xf32>
    %294 = vector.extract_strided_slice %281 {offsets = [0, 64], sizes = [4, 32], strides = [1, 1]} : vector<4x128xf32> to vector<4x32xf32>
    %295 = arith.negf %294 : vector<4x32xf32>
    %296 = math.exp %295 : vector<4x32xf32>
    %cst_74 = arith.constant 1.000000e+00 : f32
    %297 = vector.broadcast %cst_74 : f32 to vector<4x32xf32>
    %298 = arith.addf %297, %296 : vector<4x32xf32>
    %299 = arith.divf %297, %298 : vector<4x32xf32>
    %300 = vector.extract_strided_slice %281 {offsets = [0, 96], sizes = [4, 32], strides = [1, 1]} : vector<4x128xf32> to vector<4x32xf32>
    %301 = math.tanh %300 : vector<4x32xf32>
    %302 = arith.mulf %287, %271 : vector<4x32xf32>
    %303 = arith.mulf %293, %301 : vector<4x32xf32>
    %304 = arith.addf %302, %303 : vector<4x32xf32>
    %305 = math.tanh %304 : vector<4x32xf32>
    %306 = arith.mulf %299, %305 : vector<4x32xf32>
    %c8 = arith.constant 8 : index
    %c0_75 = arith.constant 0 : index
    %c0_76 = arith.constant 0 : index
    %307 = vector.load %arg9[%c8, %c0_75, %c0_76] : memref<16x4x32xf32, #tpu.memory_space<vmem>>, vector<1x4x32xf32>
    %308 = vector.shape_cast %307 : vector<1x4x32xf32> to vector<4x32xf32>
    %309 = vector.shape_cast %306 : vector<4x32xf32> to vector<1x4x32xf32>
    tpu.vector_store %arg9[%c8, %c0_75, %c0_76], %309 {strides = array<i32>} : memref<16x4x32xf32, #tpu.memory_space<vmem>>, vector<1x4x32xf32>,
    %c0_77 = arith.constant 0 : index
    %c256 = arith.constant 256 : index
    %310 = vector.load %arg8[%c0_77, %c256] : memref<4x512xf32, #tpu.memory_space<vmem>>, vector<4x32xf32>
    tpu.vector_store %arg8[%c0_77, %c256], %306 {strides = array<i32>} : memref<4x512xf32, #tpu.memory_space<vmem>>, vector<4x32xf32>,
    %311 = vector.extract_strided_slice %10 {offsets = [0, 9, 0], sizes = [4, 1, 128], strides = [1, 1, 1]} : vector<4x16x128xf32> to vector<4x1x128xf32>
    %312 = vector.shape_cast %311 : vector<4x1x128xf32> to vector<4x128xf32>
    %cst_78 = arith.constant dense<0.000000e+00> : vector<4x128xf32>
    %313 = tpu.matmul %306, %11, %cst_78 {dimension_numbers = #tpu.dot_dimension_numbers<[1], [0], [0], [1], [0, 0, 1, 1], [], []>} : vector<4x32xf32>, vector<32x128xf32>, vector<4x128xf32> -> vector<4x128xf32>
    %314 = arith.addf %312, %313 : vector<4x128xf32>
    %315 = vector.extract_strided_slice %314 {offsets = [0, 0], sizes = [4, 32], strides = [1, 1]} : vector<4x128xf32> to vector<4x32xf32>
    %316 = arith.negf %315 : vector<4x32xf32>
    %317 = math.exp %316 : vector<4x32xf32>
    %cst_79 = arith.constant 1.000000e+00 : f32
    %318 = vector.broadcast %cst_79 : f32 to vector<4x32xf32>
    %319 = arith.addf %318, %317 : vector<4x32xf32>
    %320 = arith.divf %318, %319 : vector<4x32xf32>
    %321 = vector.extract_strided_slice %314 {offsets = [0, 32], sizes = [4, 32], strides = [1, 1]} : vector<4x128xf32> to vector<4x32xf32>
    %322 = arith.negf %321 : vector<4x32xf32>
    %323 = math.exp %322 : vector<4x32xf32>
    %cst_80 = arith.constant 1.000000e+00 : f32
    %324 = vector.broadcast %cst_80 : f32 to vector<4x32xf32>
    %325 = arith.addf %324, %323 : vector<4x32xf32>
    %326 = arith.divf %324, %325 : vector<4x32xf32>
    %327 = vector.extract_strided_slice %314 {offsets = [0, 64], sizes = [4, 32], strides = [1, 1]} : vector<4x128xf32> to vector<4x32xf32>
    %328 = arith.negf %327 : vector<4x32xf32>
    %329 = math.exp %328 : vector<4x32xf32>
    %cst_81 = arith.constant 1.000000e+00 : f32
    %330 = vector.broadcast %cst_81 : f32 to vector<4x32xf32>
    %331 = arith.addf %330, %329 : vector<4x32xf32>
    %332 = arith.divf %330, %331 : vector<4x32xf32>
    %333 = vector.extract_strided_slice %314 {offsets = [0, 96], sizes = [4, 32], strides = [1, 1]} : vector<4x128xf32> to vector<4x32xf32>
    %334 = math.tanh %333 : vector<4x32xf32>
    %335 = arith.mulf %320, %304 : vector<4x32xf32>
    %336 = arith.mulf %326, %334 : vector<4x32xf32>
    %337 = arith.addf %335, %336 : vector<4x32xf32>
    %338 = math.tanh %337 : vector<4x32xf32>
    %339 = arith.mulf %332, %338 : vector<4x32xf32>
    %c9 = arith.constant 9 : index
    %c0_82 = arith.constant 0 : index
    %c0_83 = arith.constant 0 : index
    %340 = vector.load %arg9[%c9, %c0_82, %c0_83] : memref<16x4x32xf32, #tpu.memory_space<vmem>>, vector<1x4x32xf32>
    %341 = vector.shape_cast %340 : vector<1x4x32xf32> to vector<4x32xf32>
    %342 = vector.shape_cast %339 : vector<4x32xf32> to vector<1x4x32xf32>
    tpu.vector_store %arg9[%c9, %c0_82, %c0_83], %342 {strides = array<i32>} : memref<16x4x32xf32, #tpu.memory_space<vmem>>, vector<1x4x32xf32>,
    %c0_84 = arith.constant 0 : index
    %c288 = arith.constant 288 : index
    %343 = vector.load %arg8[%c0_84, %c288] : memref<4x512xf32, #tpu.memory_space<vmem>>, vector<4x32xf32>
    tpu.vector_store %arg8[%c0_84, %c288], %339 {strides = array<i32>} : memref<4x512xf32, #tpu.memory_space<vmem>>, vector<4x32xf32>,
    %344 = vector.extract_strided_slice %10 {offsets = [0, 10, 0], sizes = [4, 1, 128], strides = [1, 1, 1]} : vector<4x16x128xf32> to vector<4x1x128xf32>
    %345 = vector.shape_cast %344 : vector<4x1x128xf32> to vector<4x128xf32>
    %cst_85 = arith.constant dense<0.000000e+00> : vector<4x128xf32>
    %346 = tpu.matmul %339, %11, %cst_85 {dimension_numbers = #tpu.dot_dimension_numbers<[1], [0], [0], [1], [0, 0, 1, 1], [], []>} : vector<4x32xf32>, vector<32x128xf32>, vector<4x128xf32> -> vector<4x128xf32>
    %347 = arith.addf %345, %346 : vector<4x128xf32>
    %348 = vector.extract_strided_slice %347 {offsets = [0, 0], sizes = [4, 32], strides = [1, 1]} : vector<4x128xf32> to vector<4x32xf32>
    %349 = arith.negf %348 : vector<4x32xf32>
    %350 = math.exp %349 : vector<4x32xf32>
    %cst_86 = arith.constant 1.000000e+00 : f32
    %351 = vector.broadcast %cst_86 : f32 to vector<4x32xf32>
    %352 = arith.addf %351, %350 : vector<4x32xf32>
    %353 = arith.divf %351, %352 : vector<4x32xf32>
    %354 = vector.extract_strided_slice %347 {offsets = [0, 32], sizes = [4, 32], strides = [1, 1]} : vector<4x128xf32> to vector<4x32xf32>
    %355 = arith.negf %354 : vector<4x32xf32>
    %356 = math.exp %355 : vector<4x32xf32>
    %cst_87 = arith.constant 1.000000e+00 : f32
    %357 = vector.broadcast %cst_87 : f32 to vector<4x32xf32>
    %358 = arith.addf %357, %356 : vector<4x32xf32>
    %359 = arith.divf %357, %358 : vector<4x32xf32>
    %360 = vector.extract_strided_slice %347 {offsets = [0, 64], sizes = [4, 32], strides = [1, 1]} : vector<4x128xf32> to vector<4x32xf32>
    %361 = arith.negf %360 : vector<4x32xf32>
    %362 = math.exp %361 : vector<4x32xf32>
    %cst_88 = arith.constant 1.000000e+00 : f32
    %363 = vector.broadcast %cst_88 : f32 to vector<4x32xf32>
    %364 = arith.addf %363, %362 : vector<4x32xf32>
    %365 = arith.divf %363, %364 : vector<4x32xf32>
    %366 = vector.extract_strided_slice %347 {offsets = [0, 96], sizes = [4, 32], strides = [1, 1]} : vector<4x128xf32> to vector<4x32xf32>
    %367 = math.tanh %366 : vector<4x32xf32>
    %368 = arith.mulf %353, %337 : vector<4x32xf32>
    %369 = arith.mulf %359, %367 : vector<4x32xf32>
    %370 = arith.addf %368, %369 : vector<4x32xf32>
    %371 = math.tanh %370 : vector<4x32xf32>
    %372 = arith.mulf %365, %371 : vector<4x32xf32>
    %c10 = arith.constant 10 : index
    %c0_89 = arith.constant 0 : index
    %c0_90 = arith.constant 0 : index
    %373 = vector.load %arg9[%c10, %c0_89, %c0_90] : memref<16x4x32xf32, #tpu.memory_space<vmem>>, vector<1x4x32xf32>
    %374 = vector.shape_cast %373 : vector<1x4x32xf32> to vector<4x32xf32>
    %375 = vector.shape_cast %372 : vector<4x32xf32> to vector<1x4x32xf32>
    tpu.vector_store %arg9[%c10, %c0_89, %c0_90], %375 {strides = array<i32>} : memref<16x4x32xf32, #tpu.memory_space<vmem>>, vector<1x4x32xf32>,
    %c0_91 = arith.constant 0 : index
    %c320 = arith.constant 320 : index
    %376 = vector.load %arg8[%c0_91, %c320] : memref<4x512xf32, #tpu.memory_space<vmem>>, vector<4x32xf32>
    tpu.vector_store %arg8[%c0_91, %c320], %372 {strides = array<i32>} : memref<4x512xf32, #tpu.memory_space<vmem>>, vector<4x32xf32>,
    %377 = vector.extract_strided_slice %10 {offsets = [0, 11, 0], sizes = [4, 1, 128], strides = [1, 1, 1]} : vector<4x16x128xf32> to vector<4x1x128xf32>
    %378 = vector.shape_cast %377 : vector<4x1x128xf32> to vector<4x128xf32>
    %cst_92 = arith.constant dense<0.000000e+00> : vector<4x128xf32>
    %379 = tpu.matmul %372, %11, %cst_92 {dimension_numbers = #tpu.dot_dimension_numbers<[1], [0], [0], [1], [0, 0, 1, 1], [], []>} : vector<4x32xf32>, vector<32x128xf32>, vector<4x128xf32> -> vector<4x128xf32>
    %380 = arith.addf %378, %379 : vector<4x128xf32>
    %381 = vector.extract_strided_slice %380 {offsets = [0, 0], sizes = [4, 32], strides = [1, 1]} : vector<4x128xf32> to vector<4x32xf32>
    %382 = arith.negf %381 : vector<4x32xf32>
    %383 = math.exp %382 : vector<4x32xf32>
    %cst_93 = arith.constant 1.000000e+00 : f32
    %384 = vector.broadcast %cst_93 : f32 to vector<4x32xf32>
    %385 = arith.addf %384, %383 : vector<4x32xf32>
    %386 = arith.divf %384, %385 : vector<4x32xf32>
    %387 = vector.extract_strided_slice %380 {offsets = [0, 32], sizes = [4, 32], strides = [1, 1]} : vector<4x128xf32> to vector<4x32xf32>
    %388 = arith.negf %387 : vector<4x32xf32>
    %389 = math.exp %388 : vector<4x32xf32>
    %cst_94 = arith.constant 1.000000e+00 : f32
    %390 = vector.broadcast %cst_94 : f32 to vector<4x32xf32>
    %391 = arith.addf %390, %389 : vector<4x32xf32>
    %392 = arith.divf %390, %391 : vector<4x32xf32>
    %393 = vector.extract_strided_slice %380 {offsets = [0, 64], sizes = [4, 32], strides = [1, 1]} : vector<4x128xf32> to vector<4x32xf32>
    %394 = arith.negf %393 : vector<4x32xf32>
    %395 = math.exp %394 : vector<4x32xf32>
    %cst_95 = arith.constant 1.000000e+00 : f32
    %396 = vector.broadcast %cst_95 : f32 to vector<4x32xf32>
    %397 = arith.addf %396, %395 : vector<4x32xf32>
    %398 = arith.divf %396, %397 : vector<4x32xf32>
    %399 = vector.extract_strided_slice %380 {offsets = [0, 96], sizes = [4, 32], strides = [1, 1]} : vector<4x128xf32> to vector<4x32xf32>
    %400 = math.tanh %399 : vector<4x32xf32>
    %401 = arith.mulf %386, %370 : vector<4x32xf32>
    %402 = arith.mulf %392, %400 : vector<4x32xf32>
    %403 = arith.addf %401, %402 : vector<4x32xf32>
    %404 = math.tanh %403 : vector<4x32xf32>
    %405 = arith.mulf %398, %404 : vector<4x32xf32>
    %c11 = arith.constant 11 : index
    %c0_96 = arith.constant 0 : index
    %c0_97 = arith.constant 0 : index
    %406 = vector.load %arg9[%c11, %c0_96, %c0_97] : memref<16x4x32xf32, #tpu.memory_space<vmem>>, vector<1x4x32xf32>
    %407 = vector.shape_cast %406 : vector<1x4x32xf32> to vector<4x32xf32>
    %408 = vector.shape_cast %405 : vector<4x32xf32> to vector<1x4x32xf32>
    tpu.vector_store %arg9[%c11, %c0_96, %c0_97], %408 {strides = array<i32>} : memref<16x4x32xf32, #tpu.memory_space<vmem>>, vector<1x4x32xf32>,
    %c0_98 = arith.constant 0 : index
    %c352 = arith.constant 352 : index
    %409 = vector.load %arg8[%c0_98, %c352] : memref<4x512xf32, #tpu.memory_space<vmem>>, vector<4x32xf32>
    tpu.vector_store %arg8[%c0_98, %c352], %405 {strides = array<i32>} : memref<4x512xf32, #tpu.memory_space<vmem>>, vector<4x32xf32>,
    %410 = vector.extract_strided_slice %10 {offsets = [0, 12, 0], sizes = [4, 1, 128], strides = [1, 1, 1]} : vector<4x16x128xf32> to vector<4x1x128xf32>
    %411 = vector.shape_cast %410 : vector<4x1x128xf32> to vector<4x128xf32>
    %cst_99 = arith.constant dense<0.000000e+00> : vector<4x128xf32>
    %412 = tpu.matmul %405, %11, %cst_99 {dimension_numbers = #tpu.dot_dimension_numbers<[1], [0], [0], [1], [0, 0, 1, 1], [], []>} : vector<4x32xf32>, vector<32x128xf32>, vector<4x128xf32> -> vector<4x128xf32>
    %413 = arith.addf %411, %412 : vector<4x128xf32>
    %414 = vector.extract_strided_slice %413 {offsets = [0, 0], sizes = [4, 32], strides = [1, 1]} : vector<4x128xf32> to vector<4x32xf32>
    %415 = arith.negf %414 : vector<4x32xf32>
    %416 = math.exp %415 : vector<4x32xf32>
    %cst_100 = arith.constant 1.000000e+00 : f32
    %417 = vector.broadcast %cst_100 : f32 to vector<4x32xf32>
    %418 = arith.addf %417, %416 : vector<4x32xf32>
    %419 = arith.divf %417, %418 : vector<4x32xf32>
    %420 = vector.extract_strided_slice %413 {offsets = [0, 32], sizes = [4, 32], strides = [1, 1]} : vector<4x128xf32> to vector<4x32xf32>
    %421 = arith.negf %420 : vector<4x32xf32>
    %422 = math.exp %421 : vector<4x32xf32>
    %cst_101 = arith.constant 1.000000e+00 : f32
    %423 = vector.broadcast %cst_101 : f32 to vector<4x32xf32>
    %424 = arith.addf %423, %422 : vector<4x32xf32>
    %425 = arith.divf %423, %424 : vector<4x32xf32>
    %426 = vector.extract_strided_slice %413 {offsets = [0, 64], sizes = [4, 32], strides = [1, 1]} : vector<4x128xf32> to vector<4x32xf32>
    %427 = arith.negf %426 : vector<4x32xf32>
    %428 = math.exp %427 : vector<4x32xf32>
    %cst_102 = arith.constant 1.000000e+00 : f32
    %429 = vector.broadcast %cst_102 : f32 to vector<4x32xf32>
    %430 = arith.addf %429, %428 : vector<4x32xf32>
    %431 = arith.divf %429, %430 : vector<4x32xf32>
    %432 = vector.extract_strided_slice %413 {offsets = [0, 96], sizes = [4, 32], strides = [1, 1]} : vector<4x128xf32> to vector<4x32xf32>
    %433 = math.tanh %432 : vector<4x32xf32>
    %434 = arith.mulf %419, %403 : vector<4x32xf32>
    %435 = arith.mulf %425, %433 : vector<4x32xf32>
    %436 = arith.addf %434, %435 : vector<4x32xf32>
    %437 = math.tanh %436 : vector<4x32xf32>
    %438 = arith.mulf %431, %437 : vector<4x32xf32>
    %c12 = arith.constant 12 : index
    %c0_103 = arith.constant 0 : index
    %c0_104 = arith.constant 0 : index
    %439 = vector.load %arg9[%c12, %c0_103, %c0_104] : memref<16x4x32xf32, #tpu.memory_space<vmem>>, vector<1x4x32xf32>
    %440 = vector.shape_cast %439 : vector<1x4x32xf32> to vector<4x32xf32>
    %441 = vector.shape_cast %438 : vector<4x32xf32> to vector<1x4x32xf32>
    tpu.vector_store %arg9[%c12, %c0_103, %c0_104], %441 {strides = array<i32>} : memref<16x4x32xf32, #tpu.memory_space<vmem>>, vector<1x4x32xf32>,
    %c0_105 = arith.constant 0 : index
    %c384 = arith.constant 384 : index
    %442 = vector.load %arg8[%c0_105, %c384] : memref<4x512xf32, #tpu.memory_space<vmem>>, vector<4x32xf32>
    tpu.vector_store %arg8[%c0_105, %c384], %438 {strides = array<i32>} : memref<4x512xf32, #tpu.memory_space<vmem>>, vector<4x32xf32>,
    %443 = vector.extract_strided_slice %10 {offsets = [0, 13, 0], sizes = [4, 1, 128], strides = [1, 1, 1]} : vector<4x16x128xf32> to vector<4x1x128xf32>
    %444 = vector.shape_cast %443 : vector<4x1x128xf32> to vector<4x128xf32>
    %cst_106 = arith.constant dense<0.000000e+00> : vector<4x128xf32>
    %445 = tpu.matmul %438, %11, %cst_106 {dimension_numbers = #tpu.dot_dimension_numbers<[1], [0], [0], [1], [0, 0, 1, 1], [], []>} : vector<4x32xf32>, vector<32x128xf32>, vector<4x128xf32> -> vector<4x128xf32>
    %446 = arith.addf %444, %445 : vector<4x128xf32>
    %447 = vector.extract_strided_slice %446 {offsets = [0, 0], sizes = [4, 32], strides = [1, 1]} : vector<4x128xf32> to vector<4x32xf32>
    %448 = arith.negf %447 : vector<4x32xf32>
    %449 = math.exp %448 : vector<4x32xf32>
    %cst_107 = arith.constant 1.000000e+00 : f32
    %450 = vector.broadcast %cst_107 : f32 to vector<4x32xf32>
    %451 = arith.addf %450, %449 : vector<4x32xf32>
    %452 = arith.divf %450, %451 : vector<4x32xf32>
    %453 = vector.extract_strided_slice %446 {offsets = [0, 32], sizes = [4, 32], strides = [1, 1]} : vector<4x128xf32> to vector<4x32xf32>
    %454 = arith.negf %453 : vector<4x32xf32>
    %455 = math.exp %454 : vector<4x32xf32>
    %cst_108 = arith.constant 1.000000e+00 : f32
    %456 = vector.broadcast %cst_108 : f32 to vector<4x32xf32>
    %457 = arith.addf %456, %455 : vector<4x32xf32>
    %458 = arith.divf %456, %457 : vector<4x32xf32>
    %459 = vector.extract_strided_slice %446 {offsets = [0, 64], sizes = [4, 32], strides = [1, 1]} : vector<4x128xf32> to vector<4x32xf32>
    %460 = arith.negf %459 : vector<4x32xf32>
    %461 = math.exp %460 : vector<4x32xf32>
    %cst_109 = arith.constant 1.000000e+00 : f32
    %462 = vector.broadcast %cst_109 : f32 to vector<4x32xf32>
    %463 = arith.addf %462, %461 : vector<4x32xf32>
    %464 = arith.divf %462, %463 : vector<4x32xf32>
    %465 = vector.extract_strided_slice %446 {offsets = [0, 96], sizes = [4, 32], strides = [1, 1]} : vector<4x128xf32> to vector<4x32xf32>
    %466 = math.tanh %465 : vector<4x32xf32>
    %467 = arith.mulf %452, %436 : vector<4x32xf32>
    %468 = arith.mulf %458, %466 : vector<4x32xf32>
    %469 = arith.addf %467, %468 : vector<4x32xf32>
    %470 = math.tanh %469 : vector<4x32xf32>
    %471 = arith.mulf %464, %470 : vector<4x32xf32>
    %c13 = arith.constant 13 : index
    %c0_110 = arith.constant 0 : index
    %c0_111 = arith.constant 0 : index
    %472 = vector.load %arg9[%c13, %c0_110, %c0_111] : memref<16x4x32xf32, #tpu.memory_space<vmem>>, vector<1x4x32xf32>
    %473 = vector.shape_cast %472 : vector<1x4x32xf32> to vector<4x32xf32>
    %474 = vector.shape_cast %471 : vector<4x32xf32> to vector<1x4x32xf32>
    tpu.vector_store %arg9[%c13, %c0_110, %c0_111], %474 {strides = array<i32>} : memref<16x4x32xf32, #tpu.memory_space<vmem>>, vector<1x4x32xf32>,
    %c0_112 = arith.constant 0 : index
    %c416 = arith.constant 416 : index
    %475 = vector.load %arg8[%c0_112, %c416] : memref<4x512xf32, #tpu.memory_space<vmem>>, vector<4x32xf32>
    tpu.vector_store %arg8[%c0_112, %c416], %471 {strides = array<i32>} : memref<4x512xf32, #tpu.memory_space<vmem>>, vector<4x32xf32>,
    %476 = vector.extract_strided_slice %10 {offsets = [0, 14, 0], sizes = [4, 1, 128], strides = [1, 1, 1]} : vector<4x16x128xf32> to vector<4x1x128xf32>
    %477 = vector.shape_cast %476 : vector<4x1x128xf32> to vector<4x128xf32>
    %cst_113 = arith.constant dense<0.000000e+00> : vector<4x128xf32>
    %478 = tpu.matmul %471, %11, %cst_113 {dimension_numbers = #tpu.dot_dimension_numbers<[1], [0], [0], [1], [0, 0, 1, 1], [], []>} : vector<4x32xf32>, vector<32x128xf32>, vector<4x128xf32> -> vector<4x128xf32>
    %479 = arith.addf %477, %478 : vector<4x128xf32>
    %480 = vector.extract_strided_slice %479 {offsets = [0, 0], sizes = [4, 32], strides = [1, 1]} : vector<4x128xf32> to vector<4x32xf32>
    %481 = arith.negf %480 : vector<4x32xf32>
    %482 = math.exp %481 : vector<4x32xf32>
    %cst_114 = arith.constant 1.000000e+00 : f32
    %483 = vector.broadcast %cst_114 : f32 to vector<4x32xf32>
    %484 = arith.addf %483, %482 : vector<4x32xf32>
    %485 = arith.divf %483, %484 : vector<4x32xf32>
    %486 = vector.extract_strided_slice %479 {offsets = [0, 32], sizes = [4, 32], strides = [1, 1]} : vector<4x128xf32> to vector<4x32xf32>
    %487 = arith.negf %486 : vector<4x32xf32>
    %488 = math.exp %487 : vector<4x32xf32>
    %cst_115 = arith.constant 1.000000e+00 : f32
    %489 = vector.broadcast %cst_115 : f32 to vector<4x32xf32>
    %490 = arith.addf %489, %488 : vector<4x32xf32>
    %491 = arith.divf %489, %490 : vector<4x32xf32>
    %492 = vector.extract_strided_slice %479 {offsets = [0, 64], sizes = [4, 32], strides = [1, 1]} : vector<4x128xf32> to vector<4x32xf32>
    %493 = arith.negf %492 : vector<4x32xf32>
    %494 = math.exp %493 : vector<4x32xf32>
    %cst_116 = arith.constant 1.000000e+00 : f32
    %495 = vector.broadcast %cst_116 : f32 to vector<4x32xf32>
    %496 = arith.addf %495, %494 : vector<4x32xf32>
    %497 = arith.divf %495, %496 : vector<4x32xf32>
    %498 = vector.extract_strided_slice %479 {offsets = [0, 96], sizes = [4, 32], strides = [1, 1]} : vector<4x128xf32> to vector<4x32xf32>
    %499 = math.tanh %498 : vector<4x32xf32>
    %500 = arith.mulf %485, %469 : vector<4x32xf32>
    %501 = arith.mulf %491, %499 : vector<4x32xf32>
    %502 = arith.addf %500, %501 : vector<4x32xf32>
    %503 = math.tanh %502 : vector<4x32xf32>
    %504 = arith.mulf %497, %503 : vector<4x32xf32>
    %c14 = arith.constant 14 : index
    %c0_117 = arith.constant 0 : index
    %c0_118 = arith.constant 0 : index
    %505 = vector.load %arg9[%c14, %c0_117, %c0_118] : memref<16x4x32xf32, #tpu.memory_space<vmem>>, vector<1x4x32xf32>
    %506 = vector.shape_cast %505 : vector<1x4x32xf32> to vector<4x32xf32>
    %507 = vector.shape_cast %504 : vector<4x32xf32> to vector<1x4x32xf32>
    tpu.vector_store %arg9[%c14, %c0_117, %c0_118], %507 {strides = array<i32>} : memref<16x4x32xf32, #tpu.memory_space<vmem>>, vector<1x4x32xf32>,
    %c0_119 = arith.constant 0 : index
    %c448 = arith.constant 448 : index
    %508 = vector.load %arg8[%c0_119, %c448] : memref<4x512xf32, #tpu.memory_space<vmem>>, vector<4x32xf32>
    tpu.vector_store %arg8[%c0_119, %c448], %504 {strides = array<i32>} : memref<4x512xf32, #tpu.memory_space<vmem>>, vector<4x32xf32>,
    %509 = vector.extract_strided_slice %10 {offsets = [0, 15, 0], sizes = [4, 1, 128], strides = [1, 1, 1]} : vector<4x16x128xf32> to vector<4x1x128xf32>
    %510 = vector.shape_cast %509 : vector<4x1x128xf32> to vector<4x128xf32>
    %cst_120 = arith.constant dense<0.000000e+00> : vector<4x128xf32>
    %511 = tpu.matmul %504, %11, %cst_120 {dimension_numbers = #tpu.dot_dimension_numbers<[1], [0], [0], [1], [0, 0, 1, 1], [], []>} : vector<4x32xf32>, vector<32x128xf32>, vector<4x128xf32> -> vector<4x128xf32>
    %512 = arith.addf %510, %511 : vector<4x128xf32>
    %513 = vector.extract_strided_slice %512 {offsets = [0, 0], sizes = [4, 32], strides = [1, 1]} : vector<4x128xf32> to vector<4x32xf32>
    %514 = arith.negf %513 : vector<4x32xf32>
    %515 = math.exp %514 : vector<4x32xf32>
    %cst_121 = arith.constant 1.000000e+00 : f32
    %516 = vector.broadcast %cst_121 : f32 to vector<4x32xf32>
    %517 = arith.addf %516, %515 : vector<4x32xf32>
    %518 = arith.divf %516, %517 : vector<4x32xf32>
    %519 = vector.extract_strided_slice %512 {offsets = [0, 32], sizes = [4, 32], strides = [1, 1]} : vector<4x128xf32> to vector<4x32xf32>
    %520 = arith.negf %519 : vector<4x32xf32>
    %521 = math.exp %520 : vector<4x32xf32>
    %cst_122 = arith.constant 1.000000e+00 : f32
    %522 = vector.broadcast %cst_122 : f32 to vector<4x32xf32>
    %523 = arith.addf %522, %521 : vector<4x32xf32>
    %524 = arith.divf %522, %523 : vector<4x32xf32>
    %525 = vector.extract_strided_slice %512 {offsets = [0, 64], sizes = [4, 32], strides = [1, 1]} : vector<4x128xf32> to vector<4x32xf32>
    %526 = arith.negf %525 : vector<4x32xf32>
    %527 = math.exp %526 : vector<4x32xf32>
    %cst_123 = arith.constant 1.000000e+00 : f32
    %528 = vector.broadcast %cst_123 : f32 to vector<4x32xf32>
    %529 = arith.addf %528, %527 : vector<4x32xf32>
    %530 = arith.divf %528, %529 : vector<4x32xf32>
    %531 = vector.extract_strided_slice %512 {offsets = [0, 96], sizes = [4, 32], strides = [1, 1]} : vector<4x128xf32> to vector<4x32xf32>
    %532 = math.tanh %531 : vector<4x32xf32>
    %533 = arith.mulf %518, %502 : vector<4x32xf32>
    %534 = arith.mulf %524, %532 : vector<4x32xf32>
    %535 = arith.addf %533, %534 : vector<4x32xf32>
    %536 = math.tanh %535 : vector<4x32xf32>
    %537 = arith.mulf %530, %536 : vector<4x32xf32>
    %c15 = arith.constant 15 : index
    %c0_124 = arith.constant 0 : index
    %c0_125 = arith.constant 0 : index
    %538 = vector.load %arg9[%c15, %c0_124, %c0_125] : memref<16x4x32xf32, #tpu.memory_space<vmem>>, vector<1x4x32xf32>
    %539 = vector.shape_cast %538 : vector<1x4x32xf32> to vector<4x32xf32>
    %540 = vector.shape_cast %537 : vector<4x32xf32> to vector<1x4x32xf32>
    tpu.vector_store %arg9[%c15, %c0_124, %c0_125], %540 {strides = array<i32>} : memref<16x4x32xf32, #tpu.memory_space<vmem>>, vector<1x4x32xf32>,
    %c0_126 = arith.constant 0 : index
    %c480 = arith.constant 480 : index
    %541 = vector.load %arg8[%c0_126, %c480] : memref<4x512xf32, #tpu.memory_space<vmem>>, vector<4x32xf32>
    tpu.vector_store %arg8[%c0_126, %c480], %537 {strides = array<i32>} : memref<4x512xf32, #tpu.memory_space<vmem>>, vector<4x32xf32>,
    %c0_127 = arith.constant 0 : index
    %c0_128 = arith.constant 0 : index
    %542 = vector.load %arg12[%c0_127, %c0_128] : memref<4x32xf32, #tpu.memory_space<vmem>>, vector<4x32xf32>
    tpu.vector_store %arg12[%c0_127, %c0_128], %537 {strides = array<i32>} : memref<4x32xf32, #tpu.memory_space<vmem>>, vector<4x32xf32>,
    %c0_129 = arith.constant 0 : index
    %c0_130 = arith.constant 0 : index
    %543 = vector.load %arg13[%c0_129, %c0_130] : memref<4x32xf32, #tpu.memory_space<vmem>>, vector<4x32xf32>
    tpu.vector_store %arg13[%c0_129, %c0_130], %535 {strides = array<i32>} : memref<4x32xf32, #tpu.memory_space<vmem>>, vector<4x32xf32>,
    %c1_i32 = arith.constant 1 : i32
    %544 = arith.cmpi eq, %arg1, %c1_i32 : i32
    %545 = arith.extui %544 : i1 to i32
    %c0_i32_131 = arith.constant 0 : i32
    %546 = arith.cmpi ne, %545, %c0_i32_131 : i32
    scf.if %546 {
      %c0_132 = arith.constant 0 : index
      %c0_133 = arith.constant 0 : index
      %547 = vector.load %arg10[%c0_132, %c0_133] : memref<4x32xf32, #tpu.memory_space<vmem>>, vector<4x32xf32>
      tpu.vector_store %arg10[%c0_132, %c0_133], %537 {strides = array<i32>} : memref<4x32xf32, #tpu.memory_space<vmem>>, vector<4x32xf32>,
      %c0_134 = arith.constant 0 : index
      %c0_135 = arith.constant 0 : index
      %548 = vector.load %arg11[%c0_134, %c0_135] : memref<4x32xf32, #tpu.memory_space<vmem>>, vector<4x32xf32>
      tpu.vector_store %arg11[%c0_134, %c0_135], %535 {strides = array<i32>} : memref<4x32xf32, #tpu.memory_space<vmem>>, vector<4x32xf32>,
    } else {
    }
    return
  }
  func.func @transform_0(%arg0: i32, %arg1: i32) -> (i32, i32, i32) {
    %c0_i32 = arith.constant 0 : i32
    %c0_i32_0 = arith.constant 0 : i32
    return %arg0, %arg1, %c0_i32 : i32, i32, i32
  }
  func.func @transform_1(%arg0: i32, %arg1: i32) -> (i32, i32) {
    %c0_i32 = arith.constant 0 : i32
    %c0_i32_0 = arith.constant 0 : i32
    %c0_i32_1 = arith.constant 0 : i32
    return %c0_i32, %c0_i32_0 : i32, i32
  }
  func.func @transform_2(%arg0: i32, %arg1: i32) -> (i32, i32) {
    %c0_i32 = arith.constant 0 : i32
    %c0_i32_0 = arith.constant 0 : i32
    %c0_i32_1 = arith.constant 0 : i32
    return %c0_i32, %c0_i32_0 : i32, i32
  }
  func.func @transform_3(%arg0: i32, %arg1: i32) -> (i32, i32) {
    %c0_i32 = arith.constant 0 : i32
    %c0_i32_0 = arith.constant 0 : i32
    %c0_i32_1 = arith.constant 0 : i32
    return %c0_i32, %c0_i32_0 : i32, i32
  }
  func.func @transform_4(%arg0: i32, %arg1: i32) -> (i32, i32) {
    %c0_i32 = arith.constant 0 : i32
    %c0_i32_0 = arith.constant 0 : i32
    return %arg0, %c0_i32 : i32, i32
  }
  func.func @transform_5(%arg0: i32, %arg1: i32) -> (i32, i32) {
    %c0_i32 = arith.constant 0 : i32
    %c0_i32_0 = arith.constant 0 : i32
    return %arg0, %c0_i32 : i32, i32
  }
  func.func @transform_6(%arg0: i32, %arg1: i32) -> (i32, i32) {
    %c0_i32 = arith.constant 0 : i32
    return %arg0, %arg1 : i32, i32
  }
  func.func @transform_7(%arg0: i32, %arg1: i32) -> (i32, i32, i32) {
    %c0_i32 = arith.constant 0 : i32
    %c0_i32_0 = arith.constant 0 : i32
    return %arg1, %arg0, %c0_i32 : i32, i32, i32
  }
  func.func @transform_8(%arg0: i32, %arg1: i32) -> (i32, i32) {
    %c0_i32 = arith.constant 0 : i32
    %c0_i32_0 = arith.constant 0 : i32
    return %arg0, %c0_i32 : i32, i32
  }
  func.func @transform_9(%arg0: i32, %arg1: i32) -> (i32, i32) {
    %c0_i32 = arith.constant 0 : i32
    %c0_i32_0 = arith.constant 0 : i32
    return %arg0, %c0_i32 : i32, i32
  }
}

</mosaic_0001>

<llo_original>
// kernel: tpu_custom_call.1
$region0: #{tpu_custom_call.1}
  #allocation0 [shape = 'u32[]', space=smem, size = 0x4, offset = 0x4, fixed_abs, tag = 'smem constant byte address 0x4 - core index']
  #allocation1 [shape = 'u32[72,128]{1,0:T(1,128)}', space=vmem, size = 0x9000, scoped, tag = 'internal scratch']
  #allocation2 [shape = 'f32[4,32]{1,0:T(4,128)}', space=vmem, size = 0x800, scoped, tag = 'scratch operand']
  #allocation3 [shape = 'f32[4,32]{1,0:T(4,128)}', space=vmem, size = 0x800, scoped, tag = 'scratch operand']
  %s0 = inlined_call_operand.vmem [shape: f32[4,32,16], index: 0, kind: input, shape index: {}]
  %s1 = inlined_call_operand.vmem [shape: f32[16,128], index: 1, kind: input, shape index: {}]
  %s2 = inlined_call_operand.vmem [shape: f32[32,128], index: 2, kind: input, shape index: {}]
  %s3 = inlined_call_operand.vmem [shape: f32[1,128], index: 3, kind: input, shape index: {}]
  %s4 = inlined_call_operand.vmem [shape: f32[4,32], index: 4, kind: input, shape index: {}]
  %s5 = inlined_call_operand.vmem [shape: f32[4,32], index: 5, kind: input, shape index: {}]
  %s6 = inlined_call_operand.hbm [shape: f32[4,1024], index: 6, kind: output, shape index: {0}]
  %s7 = inlined_call_operand.hbm [shape: f32[32,4,32], index: 7, kind: output, shape index: {1}]
  %s8 = inlined_call_operand.hbm [shape: f32[4,32], index: 8, kind: output, shape index: {2}]
  %s9 = inlined_call_operand.hbm [shape: f32[4,32], index: 9, kind: output, shape index: {3}]
  %10 = xla_tuple %s6, %s7, %s8, %s9
  %s11 = sld [smem:[#allocation0]]
  $region127: #{tpu_custom_call.1} parent=0
    _
  %s13 = ssub.s32 1, %s11
  %s14 = scalar_select 0, %s13, %s11
  $region1: #{tpu_custom_call.1} parent=0
    #allocation4 [shape = 'u8[65536]{0}', space=vmem, size = 0x10000, scoped, tag = 'input window, operand 0']
    #allocation5 [shape = 'u8[16384]{0}', space=vmem, size = 0x4000, scoped, tag = 'output window, operand 0']
    #allocation6 [shape = 's32[2]{0}', space=sflag, size = 0x8, scoped, tag = 'scoped memory for tpu_custom_call.1']
    #allocation7 [shape = 'u8[65536]{0}', space=vmem, size = 0x10000, scoped, tag = 'output window, operand 1']
    #allocation8 [shape = 's32[2]{0}', space=sflag, size = 0x8, scoped, tag = 'scoped memory for tpu_custom_call.1']
    #allocation9 [shape = 'u8[2048]{0}', space=vmem, size = 0x800, scoped, tag = 'output window, operand 2, single buffered']
    #allocation10 [shape = 'u8[2048]{0}', space=vmem, size = 0x800, scoped, tag = 'output window, operand 3, single buffered']
    #allocation11 [shape = 's32[1]{0}', space=sflag, size = 0x4, scoped, tag = 'scoped memory for tpu_custom_call.1']
    %15 = vsyncpa [#allocation6], 0
    %s16 = scalar_lea.sflag [#allocation6], 1
    %17 = vsyncpa %s16, 0
    %18 = vsyncpa [#allocation8], 0
    %s19 = scalar_lea.sflag [#allocation8], 1
    %20 = vsyncpa %s19, 0
    %21 = vsyncpa [#allocation11], 0
    loop: start=0, step=1, limit=4
    $region2: #{tpu_custom_call.1} parent=1 // loop_pre_header
      _
    $region3: #{tpu_custom_call.1} parent=1 // loop_header
      %s23 = sphi 0, %s27
      %p24 = scmp.ge.s32.totalorder %s23, 4
      %s30 = sphi 0, %s42
      %s31 = sphi 0, %s38
      %s32 = sphi 0, %s30
      %s33 = sphi 0, %s31
      %s34 = sphi 0, %s32
      %s35 = sphi 0, %s33
      %s47 = sphi 0, %s49
      %s50 = sphi 0, %s47
      %s51 = sphi 0, %s50
      %s67 = sphi 0, %s51
      %s71 = sphi 0, %s71
      %s73 = sphi 0, %s71
      %s74 = sphi 0, %s73
      %s88 = sphi 0, %s74
      %s92 = sphi 0, %s92
      %s94 = sphi 0, %s92
      %s95 = sphi 0, %s94
      %s109 = sphi 0, %s95
      %s113 = sphi 0, %s113
      %s115 = sphi 0, %s113
      %s116 = sphi 0, %s115
      %s130 = sphi 0, %s116
      %s136 = sphi 0, %s138
      %s139 = sphi 0, %s136
      %s140 = sphi 0, %s139
      %s156 = sphi 0, %s140
      %s162 = sphi 0, %s164
      %s165 = sphi 0, %s162
      %s166 = sphi 0, %s165
      %s182 = sphi 0, %s166
      %s190 = sphi 0, %s192
      %s193 = sphi 0, %s190
      %s194 = sphi 0, %s193
      %s210 = sphi 0, %s194
      %s218 = sphi 0, %s220
      %s221 = sphi 0, %s218
      %s222 = sphi 0, %s221
      %s238 = sphi 0, %s222
      %s244 = sphi 0, %s246
      %s247 = sphi 0, %s244
      %s248 = sphi 0, %s247
      %s264 = sphi 0, %s248
      %s270 = sphi 0, %s272
      %s273 = sphi 0, %s270
      %s274 = sphi 0, %s273
      %s290 = sphi 0, %s274
    $region4: #{tpu_custom_call.1} parent=1 // loop_header_branch
      %26 = sbr.rel (%p24) target = $region8
    $region5: #{tpu_custom_call.1} parent=1 // loop_body
      %s28 = ssub.s32 %s23, 1
      %s29 = ssub.s32 %s23, 2
      %s36 = sadd.s32 1, %s31
      %p37 = scmp.ge.s32.totalorder %s36, 2
      %s38 = scalar_select %p37, 0, %s36
      %s39 = sadd.s32 1, %s30
      %s40 = scalar_select %p37, %s39, %s30
      %p41 = scmp.ge.s32.totalorder %s40, 1
      %s42 = scalar_select %p41, 0, %s40
      %s43 = ssub.s32 %s30, %s42
      %s44 = ssub.s32 %s31, %s38
      %s45 = sor.u32 %s43, %s44
      %p46 = scmp.eq.s32.totalorder %s45, 0
      %s48 = sadd.s32 %s47, 1
      %s49 = scalar_select %p46, %s47, %s48
      %p52 = pneg %p46
      %p53 = scmp.eq.s32.totalorder %s23, 1
      %p54 = por %p52, %p53
      %p55 = scmp.ne.s32.totalorder %s47, %s50
      %p56 = scmp.eq.s32.totalorder %s23, 0
      %p57 = por %p55, %p56
      %p58 = scmp.ne.s32.totalorder %s47, %s50
      %p59 = scmp.eq.s32.totalorder %s28, 1
      %p60 = por %p58, %p59
      %p61 = scmp.ne.s32.totalorder %s50, %s51
      %p62 = scmp.eq.s32.totalorder %s28, 0
      %p63 = por %p61, %p62
      %p64 = scmp.ne.s32.totalorder %s50, %s51
      %p65 = scmp.eq.s32.totalorder %s29, 1
      %p66 = por %p64, %p65
      %p68 = scmp.ne.s32.totalorder %s51, %s67
      %p69 = scmp.eq.s32.totalorder %s29, 0
      %p70 = por %p68, %p69
      %s72 = sadd.s32 %s71, 1
      %p75 = scmp.eq.s32.totalorder %s23, 1
      %p76 = scmp.ne.s32.totalorder %s71, %s73
      %p77 = scmp.eq.s32.totalorder %s23, 0
      %p78 = por %p76, %p77
      %p79 = scmp.ne.s32.totalorder %s71, %s73
      %p80 = scmp.eq.s32.totalorder %s28, 1
      %p81 = por %p79, %p80
      %p82 = scmp.ne.s32.totalorder %s73, %s74
      %p83 = scmp.eq.s32.totalorder %s28, 0
      %p84 = por %p82, %p83
      %p85 = scmp.ne.s32.totalorder %s73, %s74
      %p86 = scmp.eq.s32.totalorder %s29, 1
      %p87 = por %p85, %p86
      %p89 = scmp.ne.s32.totalorder %s74, %s88
      %p90 = scmp.eq.s32.totalorder %s29, 0
      %p91 = por %p89, %p90
      %s93 = sadd.s32 %s92, 1
      %p96 = scmp.eq.s32.totalorder %s23, 1
      %p97 = scmp.ne.s32.totalorder %s92, %s94
      %p98 = scmp.eq.s32.totalorder %s23, 0
      %p99 = por %p97, %p98
      %p100 = scmp.ne.s32.totalorder %s92, %s94
      %p101 = scmp.eq.s32.totalorder %s28, 1
      %p102 = por %p100, %p101
      %p103 = scmp.ne.s32.totalorder %s94, %s95
      %p104 = scmp.eq.s32.totalorder %s28, 0
      %p105 = por %p103, %p104
      %p106 = scmp.ne.s32.totalorder %s94, %s95
      %p107 = scmp.eq.s32.totalorder %s29, 1
      %p108 = por %p106, %p107
      %p110 = scmp.ne.s32.totalorder %s95, %s109
      %p111 = scmp.eq.s32.totalorder %s29, 0
      %p112 = por %p110, %p111
      %s114 = sadd.s32 %s113, 1
      %p117 = scmp.eq.s32.totalorder %s23, 1
      %p118 = scmp.ne.s32.totalorder %s113, %s115
      %p119 = scmp.eq.s32.totalorder %s23, 0
      %p120 = por %p118, %p119
      %p121 = scmp.ne.s32.totalorder %s113, %s115
      %p122 = scmp.eq.s32.totalorder %s28, 1
      %p123 = por %p121, %p122
      %p124 = scmp.ne.s32.totalorder %s115, %s116
      %p125 = scmp.eq.s32.totalorder %s28, 0
      %p126 = por %p124, %p125
      %p127 = scmp.ne.s32.totalorder %s115, %s116
      %p128 = scmp.eq.s32.totalorder %s29, 1
      %p129 = por %p127, %p128
      %p131 = scmp.ne.s32.totalorder %s116, %s130
      %p132 = scmp.eq.s32.totalorder %s29, 0
      %p133 = por %p131, %p132
      %s134 = ssub.s32 %s30, %s42
      %p135 = scmp.eq.s32.totalorder %s134, 0
      %s137 = sadd.s32 %s136, 1
      %s138 = scalar_select %p135, %s136, %s137
      %p141 = pneg %p135
      %p142 = scmp.eq.s32.totalorder %s23, 1
      %p143 = por %p141, %p142
      %p144 = scmp.ne.s32.totalorder %s136, %s139
      %p145 = scmp.eq.s32.totalorder %s23, 0
      %p146 = por %p144, %p145
      %p147 = scmp.ne.s32.totalorder %s136, %s139
      %p148 = scmp.eq.s32.totalorder %s28, 1
      %p149 = por %p147, %p148
      %p150 = scmp.ne.s32.totalorder %s139, %s140
      %p151 = scmp.eq.s32.totalorder %s28, 0
      %p152 = por %p150, %p151
      %p153 = scmp.ne.s32.totalorder %s139, %s140
      %p154 = scmp.eq.s32.totalorder %s29, 1
      %p155 = por %p153, %p154
      %p157 = scmp.ne.s32.totalorder %s140, %s156
      %p158 = scmp.eq.s32.totalorder %s29, 0
      %p159 = por %p157, %p158
      %s160 = ssub.s32 %s30, %s42
      %p161 = scmp.eq.s32.totalorder %s160, 0
      %s163 = sadd.s32 %s162, 1
      %s164 = scalar_select %p161, %s162, %s163
      %p167 = pneg %p161
      %p168 = scmp.eq.s32.totalorder %s23, 1
      %p169 = por %p167, %p168
      %p170 = scmp.ne.s32.totalorder %s162, %s165
      %p171 = scmp.eq.s32.totalorder %s23, 0
      %p172 = por %p170, %p171
      %p173 = scmp.ne.s32.totalorder %s162, %s165
      %p174 = scmp.eq.s32.totalorder %s28, 1
      %p175 = por %p173, %p174
      %p176 = scmp.ne.s32.totalorder %s165, %s166
      %p177 = scmp.eq.s32.totalorder %s28, 0
      %p178 = por %p176, %p177
      %p179 = scmp.ne.s32.totalorder %s165, %s166
      %p180 = scmp.eq.s32.totalorder %s29, 1
      %p181 = por %p179, %p180
      %p183 = scmp.ne.s32.totalorder %s166, %s182
      %p184 = scmp.eq.s32.totalorder %s29, 0
      %p185 = por %p183, %p184
      %s186 = ssub.s32 %s30, %s42
      %s187 = ssub.s32 %s31, %s38
      %s188 = sor.u32 %s186, %s187
      %p189 = scmp.eq.s32.totalorder %s188, 0
      %s191 = sadd.s32 %s190, 1
      %s192 = scalar_select %p189, %s190, %s191
      %p195 = pneg %p189
      %p196 = scmp.eq.s32.totalorder %s23, 1
      %p197 = por %p195, %p196
      %p198 = scmp.ne.s32.totalorder %s190, %s193
      %p199 = scmp.eq.s32.totalorder %s23, 0
      %p200 = por %p198, %p199
      %p201 = scmp.ne.s32.totalorder %s190, %s193
      %p202 = scmp.eq.s32.totalorder %s28, 1
      %p203 = por %p201, %p202
      %p204 = scmp.ne.s32.totalorder %s193, %s194
      %p205 = scmp.eq.s32.totalorder %s28, 0
      %p206 = por %p204, %p205
      %p207 = scmp.ne.s32.totalorder %s193, %s194
      %p208 = scmp.eq.s32.totalorder %s29, 1
      %p209 = por %p207, %p208
      %p211 = scmp.ne.s32.totalorder %s194, %s210
      %p212 = scmp.eq.s32.totalorder %s29, 0
      %p213 = por %p211, %p212
      %s214 = ssub.s32 %s31, %s38
      %s215 = ssub.s32 %s30, %s42
      %s216 = sor.u32 %s214, %s215
      %p217 = scmp.eq.s32.totalorder %s216, 0
      %s219 = sadd.s32 %s218, 1
      %s220 = scalar_select %p217, %s218, %s219
      %p223 = pneg %p217
      %p224 = scmp.eq.s32.totalorder %s23, 1
      %p225 = por %p223, %p224
      %p226 = scmp.ne.s32.totalorder %s218, %s221
      %p227 = scmp.eq.s32.totalorder %s23, 0
      %p228 = por %p226, %p227
      %p229 = scmp.ne.s32.totalorder %s218, %s221
      %p230 = scmp.eq.s32.totalorder %s28, 1
      %p231 = por %p229, %p230
      %p232 = scmp.ne.s32.totalorder %s221, %s222
      %p233 = scmp.eq.s32.totalorder %s28, 0
      %p234 = por %p232, %p233
      %p235 = scmp.ne.s32.totalorder %s221, %s222
      %p236 = scmp.eq.s32.totalorder %s29, 1
      %p237 = por %p235, %p236
      %p239 = scmp.ne.s32.totalorder %s222, %s238
      %p240 = scmp.eq.s32.totalorder %s29, 0
      %p241 = por %p239, %p240
      %s242 = ssub.s32 %s30, %s42
      %p243 = scmp.eq.s32.totalorder %s242, 0
      %s245 = sadd.s32 %s244, 1
      %s246 = scalar_select %p243, %s244, %s245
      %p249 = pneg %p243
      %p250 = scmp.eq.s32.totalorder %s23, 1
      %p251 = por %p249, %p250
      %p252 = scmp.ne.s32.totalorder %s244, %s247
      %p253 = scmp.eq.s32.totalorder %s23, 0
      %p254 = por %p252, %p253
      %p255 = scmp.ne.s32.totalorder %s244, %s247
      %p256 = scmp.eq.s32.totalorder %s28, 1
      %p257 = por %p255, %p256
      %p258 = scmp.ne.s32.totalorder %s247, %s248
      %p259 = scmp.eq.s32.totalorder %s28, 0
      %p260 = por %p258, %p259
      %p261 = scmp.ne.s32.totalorder %s247, %s248
      %p262 = scmp.eq.s32.totalorder %s29, 1
      %p263 = por %p261, %p262
      %p265 = scmp.ne.s32.totalorder %s248, %s264
      %p266 = scmp.eq.s32.totalorder %s29, 0
      %p267 = por %p265, %p266
      %s268 = ssub.s32 %s30, %s42
      %p269 = scmp.eq.s32.totalorder %s268, 0
      %s271 = sadd.s32 %s270, 1
      %s272 = scalar_select %p269, %s270, %s271
      %p275 = pneg %p269
      %p276 = scmp.eq.s32.totalorder %s23, 1
      %p277 = por %p275, %p276
      %p278 = scmp.ne.s32.totalorder %s270, %s273
      %p279 = scmp.eq.s32.totalorder %s23, 0
      %p280 = por %p278, %p279
      %p281 = scmp.ne.s32.totalorder %s270, %s273
      %p282 = scmp.eq.s32.totalorder %s28, 1
      %p283 = por %p281, %p282
      %p284 = scmp.ne.s32.totalorder %s273, %s274
      %p285 = scmp.eq.s32.totalorder %s28, 0
      %p286 = por %p284, %p285
      %p287 = scmp.ne.s32.totalorder %s273, %s274
      %p288 = scmp.eq.s32.totalorder %s29, 1
      %p289 = por %p287, %p288
      %p291 = scmp.ne.s32.totalorder %s274, %s290
      %p292 = scmp.eq.s32.totalorder %s29, 0
      %p293 = por %p291, %p292
      %p294 = scmp.le.s32.totalorder 1, %s23
      %p295 = scmp.lt.s32.totalorder %s23, 3
      %p296 = pnand %p294, %p295
      %p297 = pneg %p296
      // Predicated region
      $region9: #{tpu_custom_call.1} parent=5 // pred_check
        _
      $region10: #{tpu_custom_call.1} parent=5 // pred_check_branch
        %299 = sbr.rel (%p296) target = $region12
      $region11: #{tpu_custom_call.1} parent=5 // pred_region
        %s300 = ssub.s32 %s23, 1
        // Predicated region
        $region13: #{tpu_custom_call.1} parent=11 // pred_check
          %p301 = pneg %p84
        $region14: #{tpu_custom_call.1} parent=11 // pred_check_branch
          %303 = sbr.rel (%p301) target = $region16
        $region15: #{tpu_custom_call.1} parent=11 // pred_region
          _
        $region16: #{tpu_custom_call.1} parent=11 // pred_fallthru
          _
        // Predicated region
        $region17: #{tpu_custom_call.1} parent=11 // pred_check
          %p304 = pneg %p105
        $region18: #{tpu_custom_call.1} parent=11 // pred_check_branch
          %306 = sbr.rel (%p304) target = $region20
        $region19: #{tpu_custom_call.1} parent=11 // pred_region
          _
        $region20: #{tpu_custom_call.1} parent=11 // pred_fallthru
          _
        // Predicated region
        $region21: #{tpu_custom_call.1} parent=11 // pred_check
          %p307 = pneg %p126
        $region22: #{tpu_custom_call.1} parent=11 // pred_check_branch
          %309 = sbr.rel (%p307) target = $region24
        $region23: #{tpu_custom_call.1} parent=11 // pred_region
          _
        $region24: #{tpu_custom_call.1} parent=11 // pred_fallthru
          _
        // Predicated region
        $region25: #{tpu_custom_call.1} parent=11 // pred_check
          %p310 = pneg %p152
        $region26: #{tpu_custom_call.1} parent=11 // pred_check_branch
          %312 = sbr.rel (%p310) target = $region28
        $region27: #{tpu_custom_call.1} parent=11 // pred_region
          %p313 = scmp.lt.s32.totalorder %s32, 0
          %s314 = scalar_select %p313, %s32, 0
          %s315 = smul.addr %s314, 4
          %s316 = scalar_lea.vmem %s4, %s315
        $region28: #{tpu_custom_call.1} parent=11 // pred_fallthru
          _
        // Predicated region
        $region29: #{tpu_custom_call.1} parent=11 // pred_check
          %p317 = pneg %p178
        $region30: #{tpu_custom_call.1} parent=11 // pred_check_branch
          %319 = sbr.rel (%p317) target = $region32
        $region31: #{tpu_custom_call.1} parent=11 // pred_region
          %p320 = scmp.lt.s32.totalorder %s32, 0
          %s321 = scalar_select %p320, %s32, 0
          %s322 = smul.addr %s321, 4
          %s323 = scalar_lea.vmem %s5, %s322
        $region32: #{tpu_custom_call.1} parent=11 // pred_fallthru
          _
      $region12: #{tpu_custom_call.1} parent=5 // pred_fallthru
        _
      %p324 = scmp.lt.s32.totalorder %s23, 2
      // Predicated region
      $region33: #{tpu_custom_call.1} parent=5 // pred_check
        %p325 = pneg %p324
      $region34: #{tpu_custom_call.1} parent=5 // pred_check_branch
        %327 = sbr.rel (%p325) target = $region36
      $region35: #{tpu_custom_call.1} parent=5 // pred_region
        // Predicated region
        $region37: #{tpu_custom_call.1} parent=35 // pred_check
          %p328 = pneg %p57
        $region38: #{tpu_custom_call.1} parent=35 // pred_check_branch
          %330 = sbr.rel (%p328) target = $region40
        $region39: #{tpu_custom_call.1} parent=35 // pred_region
          %s331 = sand.u32 %s47, 1
          %s332 = sand.u32 %s47, 1
          %s333 = smul.addr %s332, 64
          %s334 = scalar_lea.vmem [#allocation4], %s333
          %s335 = smul.u32 4, %s30
          %s336 = smul.u32 2, %s31
          %s337 = smul.addr %s335, 4
          %s338 = sadd.s32 %s336, %s337
          %s339 = smul.addr %s338, 8
          %s340 = scalar_lea.vmem %s0, %s339
          // Predicated region
          $region41: #{tpu_custom_call.1} parent=39 // pred_check
            _
          $region42: #{tpu_custom_call.1} parent=39 // pred_check_branch
            %342 = sbr.rel (0) target = $region44
          $region43: #{tpu_custom_call.1} parent=39 // pred_region
            // Predicated region
            $region45: #{tpu_custom_call.1} parent=43 // pred_check
              _
            $region46: #{tpu_custom_call.1} parent=43 // pred_check_branch
              %344 = sbr.rel (0) target = $region48
            $region47: #{tpu_custom_call.1} parent=43 // pred_region
              // Predicated region
              $region60: #{tpu_custom_call.1} parent=47 // pred_check
                _
              $region61: #{tpu_custom_call.1} parent=47 // pred_check_branch
                %374 = sbr.rel (0) target = $region63
              $region62: #{tpu_custom_call.1} parent=47 // pred_region
                loop: start=0, step=1, limit=1
                $region64: #{tpu_custom_call.1} parent=62 // loop_pre_header
                  _
                $region65: #{tpu_custom_call.1} parent=62 // loop_header
                  %s376 = sphi 0, %s380
                  %p377 = scmp.ge.s32.totalorder %s376, 1
                  %s381 = sphi %s340, %s340
                  %s382 = sphi %s334, %s334
                $region66: #{tpu_custom_call.1} parent=62 // loop_header_branch
                  %379 = sbr.rel (%p377) target = $region70
                $region67: #{tpu_custom_call.1} parent=62 // loop_body
                  %v383 = vld [vmem:[%s381] sm:$0xff]
                  %384 = vst [vmem:[%s382] sm:$0xff] %v383
                  %v385 = vld [vmem:[%s381 + $0x8] sm:$0xff]
                  %386 = vst [vmem:[%s382 + $0x8] sm:$0xff] %v385
                  %v387 = vld [vmem:[%s381 + $0x20] sm:$0xff]
                  %388 = vst [vmem:[%s382 + $0x10] sm:$0xff] %v387
                  %v389 = vld [vmem:[%s381 + $0x28] sm:$0xff]
                  %390 = vst [vmem:[%s382 + $0x18] sm:$0xff] %v389
                  %v391 = vld [vmem:[%s381 + $0x40] sm:$0xff]
                  %392 = vst [vmem:[%s382 + $0x20] sm:$0xff] %v391
                  %v393 = vld [vmem:[%s381 + $0x48] sm:$0xff]
                  %394 = vst [vmem:[%s382 + $0x28] sm:$0xff] %v393
                  %v395 = vld [vmem:[%s381 + $0x60] sm:$0xff]
                  %396 = vst [vmem:[%s382 + $0x30] sm:$0xff] %v395
                  %v397 = vld [vmem:[%s381 + $0x68] sm:$0xff]
                  %398 = vst [vmem:[%s382 + $0x38] sm:$0xff] %v397
                $region68: #{tpu_custom_call.1} parent=62 // loop_footer
                  %s380 = sadd.s32 1, %s376
                $region69: #{tpu_custom_call.1} parent=62 // loop_footer_branch
                  %375 = sbr.rel target = $region65
                $region70: #{tpu_custom_call.1} parent=62 // loop_exit
                  _
              $region63: #{tpu_custom_call.1} parent=47 // pred_fallthru
                _
              // Predicated region
              $region71: #{tpu_custom_call.1} parent=47 // pred_check
                _
              $region72: #{tpu_custom_call.1} parent=47 // pred_check_branch
                %400 = sbr.rel target = $region74
              $region73: #{tpu_custom_call.1} parent=47 // pred_region
                _
              $region74: #{tpu_custom_call.1} parent=47 // pred_fallthru
                _
            $region48: #{tpu_custom_call.1} parent=43 // pred_fallthru
              _
            // Predicated region
            $region49: #{tpu_custom_call.1} parent=43 // pred_check
              _
            $region50: #{tpu_custom_call.1} parent=43 // pred_check_branch
              %346 = sbr.rel target = $region52
            $region51: #{tpu_custom_call.1} parent=43 // pred_region
              %s348 = ssub.s32 256, 1
              loop: start=0, step=1, limit=1
              $region53: #{tpu_custom_call.1} parent=51 // loop_pre_header
                _
              $region54: #{tpu_custom_call.1} parent=51 // loop_header
                %s350 = sphi 0, %s354
                %p351 = scmp.ge.s32.totalorder %s350, 1
                %s355 = sphi %s340, %s340
                %s356 = sphi %s334, %s334
              $region55: #{tpu_custom_call.1} parent=51 // loop_header_branch
                %353 = sbr.rel (%p351) target = $region59
              $region56: #{tpu_custom_call.1} parent=51 // loop_body
                %v357 = vld [vmem:[%s355] sm:%s348]
                %358 = vst [vmem:[%s356] sm:%s348] %v357
                %v359 = vld [vmem:[%s355 + $0x8] sm:%s348]
                %360 = vst [vmem:[%s356 + $0x8] sm:%s348] %v359
                %v361 = vld [vmem:[%s355 + $0x20] sm:%s348]
                %362 = vst [vmem:[%s356 + $0x10] sm:%s348] %v361
                %v363 = vld [vmem:[%s355 + $0x28] sm:%s348]
                %364 = vst [vmem:[%s356 + $0x18] sm:%s348] %v363
                %v365 = vld [vmem:[%s355 + $0x40] sm:%s348]
                %366 = vst [vmem:[%s356 + $0x20] sm:%s348] %v365
                %v367 = vld [vmem:[%s355 + $0x48] sm:%s348]
                %368 = vst [vmem:[%s356 + $0x28] sm:%s348] %v367
                %v369 = vld [vmem:[%s355 + $0x60] sm:%s348]
                %370 = vst [vmem:[%s356 + $0x30] sm:%s348] %v369
                %v371 = vld [vmem:[%s355 + $0x68] sm:%s348]
                %372 = vst [vmem:[%s356 + $0x38] sm:%s348] %v371
              $region57: #{tpu_custom_call.1} parent=51 // loop_footer
                %s354 = sadd.s32 1, %s350
              $region58: #{tpu_custom_call.1} parent=51 // loop_footer_branch
                %349 = sbr.rel target = $region54
              $region59: #{tpu_custom_call.1} parent=51 // loop_exit
                _
            $region52: #{tpu_custom_call.1} parent=43 // pred_fallthru
              _
          $region44: #{tpu_custom_call.1} parent=39 // pred_fallthru
            _
          %401 = vnop
        $region40: #{tpu_custom_call.1} parent=35 // pred_fallthru
          _
      $region36: #{tpu_custom_call.1} parent=5 // pred_fallthru
        _
      %p402 = scmp.le.s32.totalorder 1, %s23
      %p403 = scmp.lt.s32.totalorder %s23, 3
      %p404 = pnand %p402, %p403
      %p405 = pneg %p404
      // Predicated region
      $region75: #{tpu_custom_call.1} parent=5 // pred_check
        _
      $region76: #{tpu_custom_call.1} parent=5 // pred_check_branch
        %407 = sbr.rel (%p404) target = $region78
      $region77: #{tpu_custom_call.1} parent=5 // pred_region
        %s408 = ssub.s32 %s23, 1
        %s409 = sand.u32 %s50, 1
        %s410 = sand.u32 %s50, 1
        %s411 = smul.addr %s410, 64
        %s412 = scalar_lea.vmem [#allocation4], %s411
        // Predicated region
        $region79: #{tpu_custom_call.1} parent=77 // pred_check
          %p413 = pneg %p63
        $region80: #{tpu_custom_call.1} parent=77 // pred_check_branch
          %415 = sbr.rel (%p413) target = $region82
        $region81: #{tpu_custom_call.1} parent=77 // pred_region
          _
        $region82: #{tpu_custom_call.1} parent=77 // pred_fallthru
          _
        %s416 = sand.u32 %s50, 1
        %s417 = sand.u32 %s50, 1
        %s418 = smul.addr %s417, 64
        %s419 = scalar_lea.vmem [#allocation4], %s418
        %p420 = pneg %p63
        %p421 = pneg %p60
        %p422 = pneg %p84
        %p423 = pneg %p81
        %p424 = pneg %p105
        %p425 = pneg %p102
        %p426 = pneg %p126
        %p427 = pneg %p123
        %p428 = scmp.lt.s32.totalorder %s32, 0
        %s429 = scalar_select %p428, %s32, 0
        %s430 = smul.addr %s429, 4
        %s431 = scalar_lea.vmem %s4, %s430
        %p432 = pneg %p152
        %p433 = pneg %p149
        %p434 = scmp.lt.s32.totalorder %s32, 0
        %s435 = scalar_select %p434, %s32, 0
        %s436 = smul.addr %s435, 4
        %s437 = scalar_lea.vmem %s5, %s436
        %p438 = pneg %p178
        %p439 = pneg %p175
        %p440 = pneg %p206
        %p441 = pneg %p203
        %s442 = sand.u32 %s193, 1
        %s443 = scalar_lea.sflag [#allocation6], %s442
        %s444 = sand.u32 %s193, 1
        %s445 = smul.addr %s444, 16
        %s446 = scalar_lea.vmem [#allocation5], %s445
        %p447 = pneg %p234
        %p448 = pneg %p231
        %s449 = sand.u32 %s28, 1
        %s450 = scalar_lea.sflag [#allocation8], %s449
        %s451 = sand.u32 %s221, 1
        %s452 = smul.addr %s451, 64
        %s453 = scalar_lea.vmem [#allocation7], %s452
        %p454 = pneg %p260
        %p455 = pneg %p257
        %p456 = pneg %p286
        %p457 = pneg %p283
        %s458 = smul.u32 4, %s32
        %s459 = smul.u32 2, %s33
        %p460 = scmp.lt.s32.totalorder %s32, 0
        %s461 = scalar_select %p460, %s32, 0
        %s462 = smul.addr %s461, 4
        %s463 = scalar_lea.vmem %s4, %s462
        %p464 = scmp.lt.s32.totalorder %s32, 0
        %s465 = scalar_select %p464, %s32, 0
        %s466 = smul.addr %s465, 4
        %s467 = scalar_lea.vmem %s5, %s466
        %s468 = smul.u32 4, %s33
        %s469 = smul.u32 16, %s33
        %p470 = scmp.eq.s32.totalorder %s33, 0
        // Predicated region
        $region83: #{tpu_custom_call.1} parent=77 // pred_check
          %p471 = pneg %p470
        $region84: #{tpu_custom_call.1} parent=77 // pred_check_branch
          %473 = sbr.rel (%p471) target = $region86
        $region85: #{tpu_custom_call.1} parent=77 // pred_region
          %v474 = vld [vmem:[%s463] sm:$0xf]
          %vm475 = vcmask 257024
          %476 = vst.msk [vmem:[#allocation2] sm:$0xf] %vm475, %v474
          %v477 = vld [vmem:[%s467] sm:$0xf]
          %478 = vst.msk [vmem:[#allocation3] sm:$0xf] %vm475, %v477
        $region86: #{tpu_custom_call.1} parent=77 // pred_fallthru
          _
        %v479 = vld [vmem:[%s412] sm:$0xff]
        %v480 = vld [vmem:[%s412 + $0x8] sm:$0xff]
        %v481 = vld [vmem:[%s412 + $0x10] sm:$0xff]
        %v482 = vld [vmem:[%s412 + $0x18] sm:$0xff]
        %v483 = vld [vmem:[%s412 + $0x20] sm:$0xff]
        %v484 = vld [vmem:[%s412 + $0x28] sm:$0xff]
        %v485 = vld [vmem:[%s412 + $0x30] sm:$0xff]
        %v486 = vld [vmem:[%s412 + $0x38] sm:$0xff]
        %v487 = vld [vmem:[%s1] sm:$0xff]
        %v488 = vld [vmem:[%s1 + $0x8] sm:$0xff]
        %v489 = vld [vmem:[%s3] sm:$0x1]
        %v491 = vperm.slane %v489, 0
        %vm493 = vcmask 130048
        %v495 = vsel %vm493, %v479, 0
        %v498 = vsel %vm493, %v480, 0
        %v501 = vsel %vm493, %v481, 0
        %v504 = vsel %vm493, %v482, 0
        %v507 = vsel %vm493, %v483, 0
        %v510 = vsel %vm493, %v484, 0
        %v513 = vsel %vm493, %v485, 0
        %v516 = vsel %vm493, %v486, 0
        %518 = vmatpush.msra.mxu0 0.0
        %519 = vmatpush.msra.mxu0 0.0
        %520 = vmatpush.msra.mxu0 0.0
        %521 = vmatpush.msra.mxu0 0.0
        %522 = vmatpush.msra.mxu0 0.0
        %523 = vmatpush.msra.mxu0 0.0
        %524 = vmatpush.msra.mxu0 0.0
        %525 = vmatpush.msra.mxu0 0.0
        %526 = vmatpush.msra.mxu0 0.0
        %527 = vmatpush.msra.mxu0 0.0
        %528 = vmatpush.msra.mxu0 0.0
        %529 = vmatpush.msra.mxu0 0.0
        %530 = vmatpush.msra.mxu0 0.0
        %531 = vmatpush.msra.mxu0 0.0
        %532 = vmatpush.msra.mxu0 %v488
        %533 = vmatpush.msra.mxu0 %v487
        %534 = vmatmul.f32.gmra.mxu0 %v495
        %v535 = vpop.f32.mrf.mxu0
        %v536 = vadd.f32 %v491, %v535
        %537 = vmatmul.f32.gmra.mxu0 %v498
        %v538 = vpop.f32.mrf.mxu0
        %v539 = vadd.f32 %v491, %v538
        %540 = vmatmul.f32.gmra.mxu0 %v501
        %v541 = vpop.f32.mrf.mxu0
        %v542 = vadd.f32 %v491, %v541
        %543 = vmatmul.f32.gmra.mxu0 %v504
        %v544 = vpop.f32.mrf.mxu0
        %v545 = vadd.f32 %v491, %v544
        %546 = vmatmul.f32.gmra.mxu0 %v507
        %v547 = vpop.f32.mrf.mxu0
        %v548 = vadd.f32 %v491, %v547
        %549 = vmatmul.f32.gmra.mxu0 %v510
        %v550 = vpop.f32.mrf.mxu0
        %v551 = vadd.f32 %v491, %v550
        %552 = vmatmul.f32.gmra.mxu0 %v513
        %v553 = vpop.f32.mrf.mxu0
        %v554 = vadd.f32 %v491, %v553
        %555 = vmatmul.f32.gmra.mxu0 %v516
        %v556 = vpop.f32.mrf.mxu0
        %v557 = vadd.f32 %v491, %v556
        %558 = vdwg.mxu0
        %v559 = vld [vmem:[%s2] sm:$0xff]
        %v560 = vld [vmem:[%s2 + $0x8] sm:$0xff]
        %v561 = vld [vmem:[%s2 + $0x10] sm:$0xff]
        %v562 = vld [vmem:[%s2 + $0x18] sm:$0xff]
        %v563 = vld [vmem:[#allocation2] sm:$0xf]
        %v564 = vld [vmem:[#allocation3] sm:$0xf]
        %vm565 = vcmask 261120
        %v567 = vsel %vm565, %v563, 0
        %569 = vmatpush.msra.mxu0 0.0
        %570 = vmatpush.msra.mxu0 0.0
        %571 = vmatpush.msra.mxu0 0.0
        %572 = vmatpush.msra.mxu0 0.0
        %573 = vmatpush.msra.mxu0 0.0
        %574 = vmatpush.msra.mxu0 0.0
        %575 = vmatpush.msra.mxu0 0.0
        %576 = vmatpush.msra.mxu0 0.0
        %577 = vmatpush.msra.mxu0 0.0
        %578 = vmatpush.msra.mxu0 0.0
        %579 = vmatpush.msra.mxu0 0.0
        %580 = vmatpush.msra.mxu0 0.0
        %581 = vmatpush.msra.mxu0 %v562
        %582 = vmatpush.msra.mxu0 %v561
        %583 = vmatpush.msra.mxu0 %v560
        %584 = vmatpush.msra.mxu0 %v559
        %585 = vmatmul.f32.gmra.mxu0 %v567
        %v586 = vpop.f32.mrf.mxu0
        %v587 = vadd.f32 0.0, %v586
        %588 = vdwg.mxu0
        %v590 = vrot.slane %v587, 1
        %v591 = vrot.slane %v587, 2
        %v592 = vrot.slane %v587, 3
        %v597 = vadd.f32 %v536, %v587
        %v598 = vadd.f32 %v542, %v590
        %v599 = vadd.f32 %v548, %v591
        %v600 = vadd.f32 %v554, %v592
        %v601 = vxor.u32 %v597, 2147483648
        %v602 = vxor.u32 %v598, 2147483648
        %v603 = vxor.u32 %v599, 2147483648
        %v604 = vxor.u32 %v600, 2147483648
        %v605 = vmul.f32 %v601, 1.442695
        %v606 = vpow.pop %v605
        %v607 = vmul.f32 %v602, 1.442695
        %v608 = vpow.pop %v607
        %v609 = vmul.f32 %v603, 1.442695
        %v610 = vpow.pop %v609
        %v611 = vmul.f32 %v604, 1.442695
        %v612 = vpow.pop %v611
        %v613 = vadd.f32 %v606, 1.0
        %v614 = vadd.f32 %v608, 1.0
        %v615 = vadd.f32 %v610, 1.0
        %v616 = vadd.f32 %v612, 1.0
        %v617 = vrcp.pop %v613
        %v618 = vmul.f32 %v613, %v617
        %v619 = vsub.f32 1.0, %v618
        %v620 = vmul.f32 %v617, %v619
        %v621 = vadd.f32 %v617, %v620
        %vm622 = vweird.f32 %v613
        %vm623 = vweird.f32 %v617
        %vm624 = vmor %vm622, %vm623
        %v625 = vsel %vm624, %v617, %v621
        %v626 = vand.u32 2147483647, %v613
        %vm627 = vcmp.eq.f32.partialorder %v626, 8.507059e+37
        %v628 = vand.u32 %v613, 2147483648
        %v629 = vor.u32 1.1754944e-38, %v628
        %v630 = vsel %vm627, %v629, %v625
        %v631 = vmul.f32 1.0, %v630
        %v632 = vrcp.pop %v614
        %v633 = vmul.f32 %v614, %v632
        %v634 = vsub.f32 1.0, %v633
        %v635 = vmul.f32 %v632, %v634
        %v636 = vadd.f32 %v632, %v635
        %vm637 = vweird.f32 %v614
        %vm638 = vweird.f32 %v632
        %vm639 = vmor %vm637, %vm638
        %v640 = vsel %vm639, %v632, %v636
        %v641 = vand.u32 2147483647, %v614
        %vm642 = vcmp.eq.f32.partialorder %v641, 8.507059e+37
        %v643 = vand.u32 %v614, 2147483648
        %v644 = vor.u32 1.1754944e-38, %v643
        %v645 = vsel %vm642, %v644, %v640
        %v646 = vmul.f32 1.0, %v645
        %v647 = vrcp.pop %v615
        %v648 = vmul.f32 %v615, %v647
        %v649 = vsub.f32 1.0, %v648
        %v650 = vmul.f32 %v647, %v649
        %v651 = vadd.f32 %v647, %v650
        %vm652 = vweird.f32 %v615
        %vm653 = vweird.f32 %v647
        %vm654 = vmor %vm652, %vm653
        %v655 = vsel %vm654, %v647, %v651
        %v656 = vand.u32 2147483647, %v615
        %vm657 = vcmp.eq.f32.partialorder %v656, 8.507059e+37
        %v658 = vand.u32 %v615, 2147483648
        %v659 = vor.u32 1.1754944e-38, %v658
        %v660 = vsel %vm657, %v659, %v655
        %v661 = vmul.f32 1.0, %v660
        %v662 = vrcp.pop %v616
        %v663 = vmul.f32 %v616, %v662
        %v664 = vsub.f32 1.0, %v663
        %v665 = vmul.f32 %v662, %v664
        %v666 = vadd.f32 %v662, %v665
        %vm667 = vweird.f32 %v616
        %vm668 = vweird.f32 %v662
        %vm669 = vmor %vm667, %vm668
        %v670 = vsel %vm669, %v662, %v666
        %v671 = vand.u32 2147483647, %v616
        %vm672 = vcmp.eq.f32.partialorder %v671, 8.507059e+37
        %v673 = vand.u32 %v616, 2147483648
        %v674 = vor.u32 1.1754944e-38, %v673
        %v675 = vsel %vm672, %v674, %v670
        %v676 = vmul.f32 1.0, %v675
        %v677 = vtanh.pop %v597
        %v678 = vtanh.pop %v598
        %v679 = vtanh.pop %v599
        %v680 = vtanh.pop %v600
        %v682 = vrot.slane %v564, 1
        %v683 = vrot.slane %v564, 2
        %v684 = vrot.slane %v564, 3
        %v689 = vmul.f32 %v631, %v564
        %v690 = vmul.f32 %v646, %v682
        %v691 = vmul.f32 %v661, %v683
        %v692 = vmul.f32 %v676, %v684
        %697 = vrot.lane.b32.xlu0 %v677, 64
        %v698 = vpop.permute.xlu0 %697
        %699 = vrot.lane.b32.xlu0 %v678, 64
        %v700 = vpop.permute.xlu0 %699
        %701 = vrot.lane.b32.xlu0 %v679, 64
        %v702 = vpop.permute.xlu0 %701
        %703 = vrot.lane.b32.xlu0 %v680, 64
        %v704 = vpop.permute.xlu0 %703
        %v709 = vmul.f32 %v631, %v698
        %v710 = vmul.f32 %v646, %v700
        %v711 = vmul.f32 %v661, %v702
        %v712 = vmul.f32 %v676, %v704
        %717 = vrot.lane.b32.xlu0 %v709, 96
        %v718 = vpop.permute.xlu0 %717
        %719 = vrot.lane.b32.xlu0 %v710, 96
        %v720 = vpop.permute.xlu0 %719
        %721 = vrot.lane.b32.xlu0 %v711, 96
        %v722 = vpop.permute.xlu0 %721
        %723 = vrot.lane.b32.xlu0 %v712, 96
        %v724 = vpop.permute.xlu0 %723
        %v729 = vadd.f32 %v689, %v718
        %v730 = vadd.f32 %v690, %v720
        %v731 = vadd.f32 %v691, %v722
        %v732 = vadd.f32 %v692, %v724
        %v733 = vtanh.pop %v729
        %v734 = vtanh.pop %v730
        %v735 = vtanh.pop %v731
        %v736 = vtanh.pop %v732
        %741 = vrot.lane.b32.xlu0 %v733, 64
        %v742 = vpop.permute.xlu0 %741
        %743 = vrot.lane.b32.xlu0 %v734, 64
        %v744 = vpop.permute.xlu0 %743
        %745 = vrot.lane.b32.xlu0 %v735, 64
        %v746 = vpop.permute.xlu0 %745
        %747 = vrot.lane.b32.xlu0 %v736, 64
        %v748 = vpop.permute.xlu0 %747
        %v753 = vmul.f32 %v631, %v742
        %v754 = vmul.f32 %v646, %v744
        %v755 = vmul.f32 %v661, %v746
        %v756 = vmul.f32 %v676, %v748
        %v761 = vrot.slane %v754, 7
        %vm762 = vcmask 1041409
        %v763 = vsel %vm762, %v761, %v753
        %v764 = vrot.slane %v755, 6
        %vm765 = vcmask 1042434
        %v766 = vsel %vm765, %v764, %v763
        %v767 = vrot.slane %v756, 5
        %vm768 = vcmask 1043459
        %v769 = vsel %vm768, %v767, %v766
        %770 = vrot.lane.b32.xlu0 %v769, 64
        %v771 = vpop.permute.xlu0 %770
        %vm773 = vcmask 257024
        %774 = vst.msk [vmem:[%s453] sm:$0xf] %vm773, %v771
        %vm775 = vcmask 1044484
        %vm776 = vcmask 1045509
        %v777 = vsel %vm776, %v761, %v763
        %v778 = vsel %vm765, %v764, %v777
        %vm779 = vcmask 1046534
        %v780 = vsel %vm779, %v764, %v778
        %v781 = vsel %vm768, %v767, %v780
        %vm782 = vcmask 1047559
        %v783 = vsel %vm782, %v767, %v781
        %784 = vrot.lane.b32.xlu0 %v783, 64
        %v785 = vpop.permute.xlu0 %784
        %787 = vst.msk [vmem:[%s446] sm:$0xf] %vm773, %v785
        %v788 = vsel %vm565, %v771, 0
        %790 = vmatpush.msra.mxu0 0.0
        %791 = vmatpush.msra.mxu0 0.0
        %792 = vmatpush.msra.mxu0 0.0
        %793 = vmatpush.msra.mxu0 0.0
        %794 = vmatpush.msra.mxu0 0.0
        %795 = vmatpush.msra.mxu0 0.0
        %796 = vmatpush.msra.mxu0 0.0
        %797 = vmatpush.msra.mxu0 0.0
        %798 = vmatpush.msra.mxu0 0.0
        %799 = vmatpush.msra.mxu0 0.0
        %800 = vmatpush.msra.mxu0 0.0
        %801 = vmatpush.msra.mxu0 0.0
        %802 = vmatpush.msra.mxu0 %v562
        %803 = vmatpush.msra.mxu0 %v561
        %804 = vmatpush.msra.mxu0 %v560
        %805 = vmatpush.msra.mxu0 %v559
        %806 = vmatmul.f32.gmra.mxu0 %v788
        %v807 = vpop.f32.mrf.mxu0
        %v808 = vadd.f32 0.0, %v807
        %809 = vdwg.mxu0
        %v811 = vrot.slane %v808, 7
        %v812 = vrot.slane %v808, 1
        %v813 = vrot.slane %v808, 2
        %v818 = vadd.f32 %v536, %v811
        %v819 = vadd.f32 %v542, %v808
        %v820 = vadd.f32 %v548, %v812
        %v821 = vadd.f32 %v554, %v813
        %v822 = vxor.u32 %v818, 2147483648
        %v823 = vxor.u32 %v819, 2147483648
        %v824 = vxor.u32 %v820, 2147483648
        %v825 = vxor.u32 %v821, 2147483648
        %v826 = vmul.f32 %v822, 1.442695
        %v827 = vpow.pop %v826
        %v828 = vmul.f32 %v823, 1.442695
        %v829 = vpow.pop %v828
        %v830 = vmul.f32 %v824, 1.442695
        %v831 = vpow.pop %v830
        %v832 = vmul.f32 %v825, 1.442695
        %v833 = vpow.pop %v832
        %v834 = vadd.f32 %v827, 1.0
        %v835 = vadd.f32 %v829, 1.0
        %v836 = vadd.f32 %v831, 1.0
        %v837 = vadd.f32 %v833, 1.0
        %v838 = vrcp.pop %v834
        %v839 = vmul.f32 %v834, %v838
        %v840 = vsub.f32 1.0, %v839
        %v841 = vmul.f32 %v838, %v840
        %v842 = vadd.f32 %v838, %v841
        %vm843 = vweird.f32 %v834
        %vm844 = vweird.f32 %v838
        %vm845 = vmor %vm843, %vm844
        %v846 = vsel %vm845, %v838, %v842
        %v847 = vand.u32 2147483647, %v834
        %vm848 = vcmp.eq.f32.partialorder %v847, 8.507059e+37
        %v849 = vand.u32 %v834, 2147483648
        %v850 = vor.u32 1.1754944e-38, %v849
        %v851 = vsel %vm848, %v850, %v846
        %v852 = vmul.f32 1.0, %v851
        %v853 = vrcp.pop %v835
        %v854 = vmul.f32 %v835, %v853
        %v855 = vsub.f32 1.0, %v854
        %v856 = vmul.f32 %v853, %v855
        %v857 = vadd.f32 %v853, %v856
        %vm858 = vweird.f32 %v835
        %vm859 = vweird.f32 %v853
        %vm860 = vmor %vm858, %vm859
        %v861 = vsel %vm860, %v853, %v857
        %v862 = vand.u32 2147483647, %v835
        %vm863 = vcmp.eq.f32.partialorder %v862, 8.507059e+37
        %v864 = vand.u32 %v835, 2147483648
        %v865 = vor.u32 1.1754944e-38, %v864
        %v866 = vsel %vm863, %v865, %v861
        %v867 = vmul.f32 1.0, %v866
        %v868 = vrcp.pop %v836
        %v869 = vmul.f32 %v836, %v868
        %v870 = vsub.f32 1.0, %v869
        %v871 = vmul.f32 %v868, %v870
        %v872 = vadd.f32 %v868, %v871
        %vm873 = vweird.f32 %v836
        %vm874 = vweird.f32 %v868
        %vm875 = vmor %vm873, %vm874
        %v876 = vsel %vm875, %v868, %v872
        %v877 = vand.u32 2147483647, %v836
        %vm878 = vcmp.eq.f32.partialorder %v877, 8.507059e+37
        %v879 = vand.u32 %v836, 2147483648
        %v880 = vor.u32 1.1754944e-38, %v879
        %v881 = vsel %vm878, %v880, %v876
        %v882 = vmul.f32 1.0, %v881
        %v883 = vrcp.pop %v837
        %v884 = vmul.f32 %v837, %v883
        %v885 = vsub.f32 1.0, %v884
        %v886 = vmul.f32 %v883, %v885
        %v887 = vadd.f32 %v883, %v886
        %vm888 = vweird.f32 %v837
        %vm889 = vweird.f32 %v883
        %vm890 = vmor %vm888, %vm889
        %v891 = vsel %vm890, %v883, %v887
        %v892 = vand.u32 2147483647, %v837
        %vm893 = vcmp.eq.f32.partialorder %v892, 8.507059e+37
        %v894 = vand.u32 %v837, 2147483648
        %v895 = vor.u32 1.1754944e-38, %v894
        %v896 = vsel %vm893, %v895, %v891
        %v897 = vmul.f32 1.0, %v896
        %v898 = vtanh.pop %v818
        %v899 = vtanh.pop %v819
        %v900 = vtanh.pop %v820
        %v901 = vtanh.pop %v821
        %v906 = vrot.slane %v729, 7
        %v907 = vrot.slane %v730, 7
        %v908 = vrot.slane %v731, 7
        %v909 = vrot.slane %v732, 7
        %v914 = vmul.f32 %v852, %v906
        %v915 = vmul.f32 %v867, %v907
        %v916 = vmul.f32 %v882, %v908
        %v917 = vmul.f32 %v897, %v909
        %922 = vrot.lane.b32.xlu0 %v898, 64
        %v923 = vpop.permute.xlu0 %922
        %924 = vrot.lane.b32.xlu0 %v899, 64
        %v925 = vpop.permute.xlu0 %924
        %926 = vrot.lane.b32.xlu0 %v900, 64
        %v927 = vpop.permute.xlu0 %926
        %928 = vrot.lane.b32.xlu0 %v901, 64
        %v929 = vpop.permute.xlu0 %928
        %v934 = vmul.f32 %v852, %v923
        %v935 = vmul.f32 %v867, %v925
        %v936 = vmul.f32 %v882, %v927
        %v937 = vmul.f32 %v897, %v929
        %942 = vrot.lane.b32.xlu0 %v934, 96
        %v943 = vpop.permute.xlu0 %942
        %944 = vrot.lane.b32.xlu0 %v935, 96
        %v945 = vpop.permute.xlu0 %944
        %946 = vrot.lane.b32.xlu0 %v936, 96
        %v947 = vpop.permute.xlu0 %946
        %948 = vrot.lane.b32.xlu0 %v937, 96
        %v949 = vpop.permute.xlu0 %948
        %v954 = vadd.f32 %v914, %v943
        %v955 = vadd.f32 %v915, %v945
        %v956 = vadd.f32 %v916, %v947
        %v957 = vadd.f32 %v917, %v949
        %v958 = vtanh.pop %v954
        %v959 = vtanh.pop %v955
        %v960 = vtanh.pop %v956
        %v961 = vtanh.pop %v957
        %966 = vrot.lane.b32.xlu0 %v958, 64
        %v967 = vpop.permute.xlu0 %966
        %968 = vrot.lane.b32.xlu0 %v959, 64
        %v969 = vpop.permute.xlu0 %968
        %970 = vrot.lane.b32.xlu0 %v960, 64
        %v971 = vpop.permute.xlu0 %970
        %972 = vrot.lane.b32.xlu0 %v961, 64
        %v973 = vpop.permute.xlu0 %972
        %v978 = vmul.f32 %v852, %v967
        %v979 = vmul.f32 %v867, %v969
        %v980 = vmul.f32 %v882, %v971
        %v981 = vmul.f32 %v897, %v973
        %v986 = vrot.slane %v979, 7
        %v987 = vsel %vm765, %v986, %v978
        %v988 = vrot.slane %v980, 6
        %v989 = vsel %vm768, %v988, %v987
        %v990 = vrot.slane %v981, 5
        %v991 = vsel %vm775, %v990, %v989
        %992 = vrot.lane.b32.xlu0 %v991, 64
        %v993 = vpop.permute.xlu0 %992
        %s995 = scalar_lea.vmem %s453, 4 [#allocation7]
        %vm996 = vcmask 258049
        %997 = vst.msk [vmem:[%s995 - $0x1] sm:$0x1e] %vm996, %v993
        %v998 = vrot.slane %v978, 1
        %v999 = vsel %vm762, %v979, %v998
        %v1000 = vsel %vm776, %v979, %v999
        %v1001 = vrot.slane %v980, 7
        %v1002 = vsel %vm765, %v1001, %v1000
        %v1003 = vsel %vm779, %v1001, %v1002
        %v1004 = vrot.slane %v981, 6
        %v1005 = vsel %vm768, %v1004, %v1003
        %v1006 = vsel %vm782, %v1004, %v1005
        %1007 = vrot.lane.b32.xlu0 %v1006, 96
        %v1008 = vpop.permute.xlu0 %1007
        %vm1010 = vcmask 519424
        %1011 = vst.msk [vmem:[%s446] sm:$0xf] %vm1010, %v1008
        %v1012 = vsel %vm765, %v1001, %v999
        %v1013 = vsel %vm768, %v1004, %v1012
        %1014 = vrot.lane.b32.xlu0 %v1013, 64
        %v1015 = vpop.permute.xlu0 %1014
        %v1016 = vsel %vm565, %v1015, 0
        %1018 = vmatpush.msra.mxu0 0.0
        %1019 = vmatpush.msra.mxu0 0.0
        %1020 = vmatpush.msra.mxu0 0.0
        %1021 = vmatpush.msra.mxu0 0.0
        %1022 = vmatpush.msra.mxu0 0.0
        %1023 = vmatpush.msra.mxu0 0.0
        %1024 = vmatpush.msra.mxu0 0.0
        %1025 = vmatpush.msra.mxu0 0.0
        %1026 = vmatpush.msra.mxu0 0.0
        %1027 = vmatpush.msra.mxu0 0.0
        %1028 = vmatpush.msra.mxu0 0.0
        %1029 = vmatpush.msra.mxu0 0.0
        %1030 = vmatpush.msra.mxu0 %v562
        %1031 = vmatpush.msra.mxu0 %v561
        %1032 = vmatpush.msra.mxu0 %v560
        %1033 = vmatpush.msra.mxu0 %v559
        %1034 = vmatmul.f32.gmra.mxu0 %v1016
        %v1035 = vpop.f32.mrf.mxu0
        %v1036 = vadd.f32 0.0, %v1035
        %1037 = vdwg.mxu0
        %v1039 = vrot.slane %v1036, 6
        %v1040 = vrot.slane %v1036, 7
        %v1041 = vrot.slane %v1036, 1
        %v1046 = vadd.f32 %v536, %v1039
        %v1047 = vadd.f32 %v542, %v1040
        %v1048 = vadd.f32 %v548, %v1036
        %v1049 = vadd.f32 %v554, %v1041
        %v1050 = vxor.u32 %v1046, 2147483648
        %v1051 = vxor.u32 %v1047, 2147483648
        %v1052 = vxor.u32 %v1048, 2147483648
        %v1053 = vxor.u32 %v1049, 2147483648
        %v1054 = vmul.f32 %v1050, 1.442695
        %v1055 = vpow.pop %v1054
        %v1056 = vmul.f32 %v1051, 1.442695
        %v1057 = vpow.pop %v1056
        %v1058 = vmul.f32 %v1052, 1.442695
        %v1059 = vpow.pop %v1058
        %v1060 = vmul.f32 %v1053, 1.442695
        %v1061 = vpow.pop %v1060
        %v1062 = vadd.f32 %v1055, 1.0
        %v1063 = vadd.f32 %v1057, 1.0
        %v1064 = vadd.f32 %v1059, 1.0
        %v1065 = vadd.f32 %v1061, 1.0
        %v1066 = vrcp.pop %v1062
        %v1067 = vmul.f32 %v1062, %v1066
        %v1068 = vsub.f32 1.0, %v1067
        %v1069 = vmul.f32 %v1066, %v1068
        %v1070 = vadd.f32 %v1066, %v1069
        %vm1071 = vweird.f32 %v1062
        %vm1072 = vweird.f32 %v1066
        %vm1073 = vmor %vm1071, %vm1072
        %v1074 = vsel %vm1073, %v1066, %v1070
        %v1075 = vand.u32 2147483647, %v1062
        %vm1076 = vcmp.eq.f32.partialorder %v1075, 8.507059e+37
        %v1077 = vand.u32 %v1062, 2147483648
        %v1078 = vor.u32 1.1754944e-38, %v1077
        %v1079 = vsel %vm1076, %v1078, %v1074
        %v1080 = vmul.f32 1.0, %v1079
        %v1081 = vrcp.pop %v1063
        %v1082 = vmul.f32 %v1063, %v1081
        %v1083 = vsub.f32 1.0, %v1082
        %v1084 = vmul.f32 %v1081, %v1083
        %v1085 = vadd.f32 %v1081, %v1084
        %vm1086 = vweird.f32 %v1063
        %vm1087 = vweird.f32 %v1081
        %vm1088 = vmor %vm1086, %vm1087
        %v1089 = vsel %vm1088, %v1081, %v1085
        %v1090 = vand.u32 2147483647, %v1063
        %vm1091 = vcmp.eq.f32.partialorder %v1090, 8.507059e+37
        %v1092 = vand.u32 %v1063, 2147483648
        %v1093 = vor.u32 1.1754944e-38, %v1092
        %v1094 = vsel %vm1091, %v1093, %v1089
        %v1095 = vmul.f32 1.0, %v1094
        %v1096 = vrcp.pop %v1064
        %v1097 = vmul.f32 %v1064, %v1096
        %v1098 = vsub.f32 1.0, %v1097
        %v1099 = vmul.f32 %v1096, %v1098
        %v1100 = vadd.f32 %v1096, %v1099
        %vm1101 = vweird.f32 %v1064
        %vm1102 = vweird.f32 %v1096
        %vm1103 = vmor %vm1101, %vm1102
        %v1104 = vsel %vm1103, %v1096, %v1100
        %v1105 = vand.u32 2147483647, %v1064
        %vm1106 = vcmp.eq.f32.partialorder %v1105, 8.507059e+37
        %v1107 = vand.u32 %v1064, 2147483648
        %v1108 = vor.u32 1.1754944e-38, %v1107
        %v1109 = vsel %vm1106, %v1108, %v1104
        %v1110 = vmul.f32 1.0, %v1109
        %v1111 = vrcp.pop %v1065
        %v1112 = vmul.f32 %v1065, %v1111
        %v1113 = vsub.f32 1.0, %v1112
        %v1114 = vmul.f32 %v1111, %v1113
        %v1115 = vadd.f32 %v1111, %v1114
        %vm1116 = vweird.f32 %v1065
        %vm1117 = vweird.f32 %v1111
        %vm1118 = vmor %vm1116, %vm1117
        %v1119 = vsel %vm1118, %v1111, %v1115
        %v1120 = vand.u32 2147483647, %v1065
        %vm1121 = vcmp.eq.f32.partialorder %v1120, 8.507059e+37
        %v1122 = vand.u32 %v1065, 2147483648
        %v1123 = vor.u32 1.1754944e-38, %v1122
        %v1124 = vsel %vm1121, %v1123, %v1119
        %v1125 = vmul.f32 1.0, %v1124
        %v1126 = vtanh.pop %v1046
        %v1127 = vtanh.pop %v1047
        %v1128 = vtanh.pop %v1048
        %v1129 = vtanh.pop %v1049
        %v1134 = vrot.slane %v954, 7
        %v1135 = vrot.slane %v955, 7
        %v1136 = vrot.slane %v956, 7
        %v1137 = vrot.slane %v957, 7
        %v1142 = vmul.f32 %v1080, %v1134
        %v1143 = vmul.f32 %v1095, %v1135
        %v1144 = vmul.f32 %v1110, %v1136
        %v1145 = vmul.f32 %v1125, %v1137
        %1150 = vrot.lane.b32.xlu0 %v1126, 64
        %v1151 = vpop.permute.xlu0 %1150
        %1152 = vrot.lane.b32.xlu0 %v1127, 64
        %v1153 = vpop.permute.xlu0 %1152
        %1154 = vrot.lane.b32.xlu0 %v1128, 64
        %v1155 = vpop.permute.xlu0 %1154
        %1156 = vrot.lane.b32.xlu0 %v1129, 64
        %v1157 = vpop.permute.xlu0 %1156
        %v1162 = vmul.f32 %v1080, %v1151
        %v1163 = vmul.f32 %v1095, %v1153
        %v1164 = vmul.f32 %v1110, %v1155
        %v1165 = vmul.f32 %v1125, %v1157
        %1170 = vrot.lane.b32.xlu0 %v1162, 96
        %v1171 = vpop.permute.xlu0 %1170
        %1172 = vrot.lane.b32.xlu0 %v1163, 96
        %v1173 = vpop.permute.xlu0 %1172
        %1174 = vrot.lane.b32.xlu0 %v1164, 96
        %v1175 = vpop.permute.xlu0 %1174
        %1176 = vrot.lane.b32.xlu0 %v1165, 96
        %v1177 = vpop.permute.xlu0 %1176
        %v1182 = vadd.f32 %v1142, %v1171
        %v1183 = vadd.f32 %v1143, %v1173
        %v1184 = vadd.f32 %v1144, %v1175
        %v1185 = vadd.f32 %v1145, %v1177
        %v1186 = vtanh.pop %v1182
        %v1187 = vtanh.pop %v1183
        %v1188 = vtanh.pop %v1184
        %v1189 = vtanh.pop %v1185
        %1194 = vrot.lane.b32.xlu0 %v1186, 64
        %v1195 = vpop.permute.xlu0 %1194
        %1196 = vrot.lane.b32.xlu0 %v1187, 64
        %v1197 = vpop.permute.xlu0 %1196
        %1198 = vrot.lane.b32.xlu0 %v1188, 64
        %v1199 = vpop.permute.xlu0 %1198
        %1200 = vrot.lane.b32.xlu0 %v1189, 64
        %v1201 = vpop.permute.xlu0 %1200
        %v1206 = vmul.f32 %v1080, %v1195
        %v1207 = vmul.f32 %v1095, %v1197
        %v1208 = vmul.f32 %v1110, %v1199
        %v1209 = vmul.f32 %v1125, %v1201
        %v1214 = vrot.slane %v1207, 7
        %v1215 = vsel %vm768, %v1214, %v1206
        %v1216 = vrot.slane %v1208, 6
        %v1217 = vsel %vm775, %v1216, %v1215
        %v1218 = vrot.slane %v1209, 5
        %v1219 = vsel %vm776, %v1218, %v1217
        %1220 = vrot.lane.b32.xlu0 %v1219, 64
        %v1221 = vpop.permute.xlu0 %1220
        %s1223 = scalar_lea.vmem %s453, 8 [#allocation7]
        %vm1224 = vcmask 259074
        %1225 = vst.msk [vmem:[%s1223 - $0x2] sm:$0x3c] %vm1224, %v1221
        %v1226 = vrot.slane %v1206, 2
        %v1227 = vrot.slane %v1207, 1
        %v1228 = vsel %vm762, %v1227, %v1226
        %v1229 = vsel %vm776, %v1227, %v1228
        %v1230 = vsel %vm765, %v1208, %v1229
        %v1231 = vsel %vm779, %v1208, %v1230
        %v1232 = vrot.slane %v1209, 7
        %v1233 = vsel %vm768, %v1232, %v1231
        %v1234 = vsel %vm782, %v1232, %v1233
        %vm1236 = vcmask 781824
        %1237 = vst.msk [vmem:[%s446] sm:$0xf] %vm1236, %v1234
        %v1238 = vsel %vm765, %v1208, %v1228
        %v1239 = vsel %vm768, %v1232, %v1238
        %1240 = vrot.lane.b32.xlu0 %v1239, 64
        %v1241 = vpop.permute.xlu0 %1240
        %v1242 = vsel %vm565, %v1241, 0
        %1244 = vmatpush.msra.mxu0 0.0
        %1245 = vmatpush.msra.mxu0 0.0
        %1246 = vmatpush.msra.mxu0 0.0
        %1247 = vmatpush.msra.mxu0 0.0
        %1248 = vmatpush.msra.mxu0 0.0
        %1249 = vmatpush.msra.mxu0 0.0
        %1250 = vmatpush.msra.mxu0 0.0
        %1251 = vmatpush.msra.mxu0 0.0
        %1252 = vmatpush.msra.mxu0 0.0
        %1253 = vmatpush.msra.mxu0 0.0
        %1254 = vmatpush.msra.mxu0 0.0
        %1255 = vmatpush.msra.mxu0 0.0
        %1256 = vmatpush.msra.mxu0 %v562
        %1257 = vmatpush.msra.mxu0 %v561
        %1258 = vmatpush.msra.mxu0 %v560
        %1259 = vmatpush.msra.mxu0 %v559
        %1260 = vmatmul.f32.gmra.mxu0 %v1242
        %v1261 = vpop.f32.mrf.mxu0
        %v1262 = vadd.f32 0.0, %v1261
        %1263 = vdwg.mxu0
        %v1265 = vrot.slane %v1262, 5
        %v1266 = vrot.slane %v1262, 6
        %v1267 = vrot.slane %v1262, 7
        %v1272 = vadd.f32 %v536, %v1265
        %v1273 = vadd.f32 %v542, %v1266
        %v1274 = vadd.f32 %v548, %v1267
        %v1275 = vadd.f32 %v554, %v1262
        %v1276 = vxor.u32 %v1272, 2147483648
        %v1277 = vxor.u32 %v1273, 2147483648
        %v1278 = vxor.u32 %v1274, 2147483648
        %v1279 = vxor.u32 %v1275, 2147483648
        %v1280 = vmul.f32 %v1276, 1.442695
        %v1281 = vpow.pop %v1280
        %v1282 = vmul.f32 %v1277, 1.442695
        %v1283 = vpow.pop %v1282
        %v1284 = vmul.f32 %v1278, 1.442695
        %v1285 = vpow.pop %v1284
        %v1286 = vmul.f32 %v1279, 1.442695
        %v1287 = vpow.pop %v1286
        %v1288 = vadd.f32 %v1281, 1.0
        %v1289 = vadd.f32 %v1283, 1.0
        %v1290 = vadd.f32 %v1285, 1.0
        %v1291 = vadd.f32 %v1287, 1.0
        %v1292 = vrcp.pop %v1288
        %v1293 = vmul.f32 %v1288, %v1292
        %v1294 = vsub.f32 1.0, %v1293
        %v1295 = vmul.f32 %v1292, %v1294
        %v1296 = vadd.f32 %v1292, %v1295
        %vm1297 = vweird.f32 %v1288
        %vm1298 = vweird.f32 %v1292
        %vm1299 = vmor %vm1297, %vm1298
        %v1300 = vsel %vm1299, %v1292, %v1296
        %v1301 = vand.u32 2147483647, %v1288
        %vm1302 = vcmp.eq.f32.partialorder %v1301, 8.507059e+37
        %v1303 = vand.u32 %v1288, 2147483648
        %v1304 = vor.u32 1.1754944e-38, %v1303
        %v1305 = vsel %vm1302, %v1304, %v1300
        %v1306 = vmul.f32 1.0, %v1305
        %v1307 = vrcp.pop %v1289
        %v1308 = vmul.f32 %v1289, %v1307
        %v1309 = vsub.f32 1.0, %v1308
        %v1310 = vmul.f32 %v1307, %v1309
        %v1311 = vadd.f32 %v1307, %v1310
        %vm1312 = vweird.f32 %v1289
        %vm1313 = vweird.f32 %v1307
        %vm1314 = vmor %vm1312, %vm1313
        %v1315 = vsel %vm1314, %v1307, %v1311
        %v1316 = vand.u32 2147483647, %v1289
        %vm1317 = vcmp.eq.f32.partialorder %v1316, 8.507059e+37
        %v1318 = vand.u32 %v1289, 2147483648
        %v1319 = vor.u32 1.1754944e-38, %v1318
        %v1320 = vsel %vm1317, %v1319, %v1315
        %v1321 = vmul.f32 1.0, %v1320
        %v1322 = vrcp.pop %v1290
        %v1323 = vmul.f32 %v1290, %v1322
        %v1324 = vsub.f32 1.0, %v1323
        %v1325 = vmul.f32 %v1322, %v1324
        %v1326 = vadd.f32 %v1322, %v1325
        %vm1327 = vweird.f32 %v1290
        %vm1328 = vweird.f32 %v1322
        %vm1329 = vmor %vm1327, %vm1328
        %v1330 = vsel %vm1329, %v1322, %v1326
        %v1331 = vand.u32 2147483647, %v1290
        %vm1332 = vcmp.eq.f32.partialorder %v1331, 8.507059e+37
        %v1333 = vand.u32 %v1290, 2147483648
        %v1334 = vor.u32 1.1754944e-38, %v1333
        %v1335 = vsel %vm1332, %v1334, %v1330
        %v1336 = vmul.f32 1.0, %v1335
        %v1337 = vrcp.pop %v1291
        %v1338 = vmul.f32 %v1291, %v1337
        %v1339 = vsub.f32 1.0, %v1338
        %v1340 = vmul.f32 %v1337, %v1339
        %v1341 = vadd.f32 %v1337, %v1340
        %vm1342 = vweird.f32 %v1291
        %vm1343 = vweird.f32 %v1337
        %vm1344 = vmor %vm1342, %vm1343
        %v1345 = vsel %vm1344, %v1337, %v1341
        %v1346 = vand.u32 2147483647, %v1291
        %vm1347 = vcmp.eq.f32.partialorder %v1346, 8.507059e+37
        %v1348 = vand.u32 %v1291, 2147483648
        %v1349 = vor.u32 1.1754944e-38, %v1348
        %v1350 = vsel %vm1347, %v1349, %v1345
        %v1351 = vmul.f32 1.0, %v1350
        %v1352 = vtanh.pop %v1272
        %v1353 = vtanh.pop %v1273
        %v1354 = vtanh.pop %v1274
        %v1355 = vtanh.pop %v1275
        %v1360 = vrot.slane %v1182, 7
        %v1361 = vrot.slane %v1183, 7
        %v1362 = vrot.slane %v1184, 7
        %v1363 = vrot.slane %v1185, 7
        %v1368 = vmul.f32 %v1306, %v1360
        %v1369 = vmul.f32 %v1321, %v1361
        %v1370 = vmul.f32 %v1336, %v1362
        %v1371 = vmul.f32 %v1351, %v1363
        %1376 = vrot.lane.b32.xlu0 %v1352, 64
        %v1377 = vpop.permute.xlu0 %1376
        %1378 = vrot.lane.b32.xlu0 %v1353, 64
        %v1379 = vpop.permute.xlu0 %1378
        %1380 = vrot.lane.b32.xlu0 %v1354, 64
        %v1381 = vpop.permute.xlu0 %1380
        %1382 = vrot.lane.b32.xlu0 %v1355, 64
        %v1383 = vpop.permute.xlu0 %1382
        %v1388 = vmul.f32 %v1306, %v1377
        %v1389 = vmul.f32 %v1321, %v1379
        %v1390 = vmul.f32 %v1336, %v1381
        %v1391 = vmul.f32 %v1351, %v1383
        %1396 = vrot.lane.b32.xlu0 %v1388, 96
        %v1397 = vpop.permute.xlu0 %1396
        %1398 = vrot.lane.b32.xlu0 %v1389, 96
        %v1399 = vpop.permute.xlu0 %1398
        %1400 = vrot.lane.b32.xlu0 %v1390, 96
        %v1401 = vpop.permute.xlu0 %1400
        %1402 = vrot.lane.b32.xlu0 %v1391, 96
        %v1403 = vpop.permute.xlu0 %1402
        %v1408 = vadd.f32 %v1368, %v1397
        %v1409 = vadd.f32 %v1369, %v1399
        %v1410 = vadd.f32 %v1370, %v1401
        %v1411 = vadd.f32 %v1371, %v1403
        %v1412 = vtanh.pop %v1408
        %v1413 = vtanh.pop %v1409
        %v1414 = vtanh.pop %v1410
        %v1415 = vtanh.pop %v1411
        %1420 = vrot.lane.b32.xlu0 %v1412, 64
        %v1421 = vpop.permute.xlu0 %1420
        %1422 = vrot.lane.b32.xlu0 %v1413, 64
        %v1423 = vpop.permute.xlu0 %1422
        %1424 = vrot.lane.b32.xlu0 %v1414, 64
        %v1425 = vpop.permute.xlu0 %1424
        %1426 = vrot.lane.b32.xlu0 %v1415, 64
        %v1427 = vpop.permute.xlu0 %1426
        %v1432 = vmul.f32 %v1306, %v1421
        %v1433 = vmul.f32 %v1321, %v1423
        %v1434 = vmul.f32 %v1336, %v1425
        %v1435 = vmul.f32 %v1351, %v1427
        %v1440 = vrot.slane %v1433, 7
        %v1441 = vsel %vm775, %v1440, %v1432
        %v1442 = vrot.slane %v1434, 6
        %v1443 = vsel %vm776, %v1442, %v1441
        %v1444 = vrot.slane %v1435, 5
        %v1445 = vsel %vm779, %v1444, %v1443
        %1446 = vrot.lane.b32.xlu0 %v1445, 64
        %v1447 = vpop.permute.xlu0 %1446
        %s1449 = scalar_lea.vmem %s453, 12 [#allocation7]
        %vm1450 = vcmask 260099
        %1451 = vst.msk [vmem:[%s1449 - $0x3] sm:$0x78] %vm1450, %v1447
        %v1452 = vrot.slane %v1432, 3
        %v1453 = vrot.slane %v1433, 2
        %v1454 = vsel %vm762, %v1453, %v1452
        %v1455 = vsel %vm776, %v1453, %v1454
        %v1456 = vrot.slane %v1434, 1
        %v1457 = vsel %vm765, %v1456, %v1455
        %v1458 = vsel %vm779, %v1456, %v1457
        %v1459 = vsel %vm768, %v1435, %v1458
        %v1460 = vsel %vm782, %v1435, %v1459
        %1461 = vrot.lane.b32.xlu0 %v1460, 32
        %v1462 = vpop.permute.xlu0 %1461
        %vm1464 = vcmask 1044224
        %1465 = vst.msk [vmem:[%s446] sm:$0xf] %vm1464, %v1462
        %v1466 = vsel %vm765, %v1456, %v1454
        %v1467 = vsel %vm768, %v1435, %v1466
        %1468 = vrot.lane.b32.xlu0 %v1467, 64
        %v1469 = vpop.permute.xlu0 %1468
        %v1470 = vsel %vm565, %v1469, 0
        %1472 = vmatpush.msra.mxu0 0.0
        %1473 = vmatpush.msra.mxu0 0.0
        %1474 = vmatpush.msra.mxu0 0.0
        %1475 = vmatpush.msra.mxu0 0.0
        %1476 = vmatpush.msra.mxu0 0.0
        %1477 = vmatpush.msra.mxu0 0.0
        %1478 = vmatpush.msra.mxu0 0.0
        %1479 = vmatpush.msra.mxu0 0.0
        %1480 = vmatpush.msra.mxu0 0.0
        %1481 = vmatpush.msra.mxu0 0.0
        %1482 = vmatpush.msra.mxu0 0.0
        %1483 = vmatpush.msra.mxu0 0.0
        %1484 = vmatpush.msra.mxu0 %v562
        %1485 = vmatpush.msra.mxu0 %v561
        %1486 = vmatpush.msra.mxu0 %v560
        %1487 = vmatpush.msra.mxu0 %v559
        %1488 = vmatmul.f32.gmra.mxu0 %v1470
        %v1489 = vpop.f32.mrf.mxu0
        %v1490 = vadd.f32 0.0, %v1489
        %1491 = vdwg.mxu0
        %v1493 = vrot.slane %v1490, 4
        %v1494 = vrot.slane %v1490, 5
        %v1495 = vrot.slane %v1490, 6
        %v1496 = vrot.slane %v1490, 7
        %v1501 = vadd.f32 %v536, %v1493
        %v1502 = vadd.f32 %v542, %v1494
        %v1503 = vadd.f32 %v548, %v1495
        %v1504 = vadd.f32 %v554, %v1496
        %v1505 = vxor.u32 %v1501, 2147483648
        %v1506 = vxor.u32 %v1502, 2147483648
        %v1507 = vxor.u32 %v1503, 2147483648
        %v1508 = vxor.u32 %v1504, 2147483648
        %v1509 = vmul.f32 %v1505, 1.442695
        %v1510 = vpow.pop %v1509
        %v1511 = vmul.f32 %v1506, 1.442695
        %v1512 = vpow.pop %v1511
        %v1513 = vmul.f32 %v1507, 1.442695
        %v1514 = vpow.pop %v1513
        %v1515 = vmul.f32 %v1508, 1.442695
        %v1516 = vpow.pop %v1515
        %v1517 = vadd.f32 %v1510, 1.0
        %v1518 = vadd.f32 %v1512, 1.0
        %v1519 = vadd.f32 %v1514, 1.0
        %v1520 = vadd.f32 %v1516, 1.0
        %v1521 = vrcp.pop %v1517
        %v1522 = vmul.f32 %v1517, %v1521
        %v1523 = vsub.f32 1.0, %v1522
        %v1524 = vmul.f32 %v1521, %v1523
        %v1525 = vadd.f32 %v1521, %v1524
        %vm1526 = vweird.f32 %v1517
        %vm1527 = vweird.f32 %v1521
        %vm1528 = vmor %vm1526, %vm1527
        %v1529 = vsel %vm1528, %v1521, %v1525
        %v1530 = vand.u32 2147483647, %v1517
        %vm1531 = vcmp.eq.f32.partialorder %v1530, 8.507059e+37
        %v1532 = vand.u32 %v1517, 2147483648
        %v1533 = vor.u32 1.1754944e-38, %v1532
        %v1534 = vsel %vm1531, %v1533, %v1529
        %v1535 = vmul.f32 1.0, %v1534
        %v1536 = vrcp.pop %v1518
        %v1537 = vmul.f32 %v1518, %v1536
        %v1538 = vsub.f32 1.0, %v1537
        %v1539 = vmul.f32 %v1536, %v1538
        %v1540 = vadd.f32 %v1536, %v1539
        %vm1541 = vweird.f32 %v1518
        %vm1542 = vweird.f32 %v1536
        %vm1543 = vmor %vm1541, %vm1542
        %v1544 = vsel %vm1543, %v1536, %v1540
        %v1545 = vand.u32 2147483647, %v1518
        %vm1546 = vcmp.eq.f32.partialorder %v1545, 8.507059e+37
        %v1547 = vand.u32 %v1518, 2147483648
        %v1548 = vor.u32 1.1754944e-38, %v1547
        %v1549 = vsel %vm1546, %v1548, %v1544
        %v1550 = vmul.f32 1.0, %v1549
        %v1551 = vrcp.pop %v1519
        %v1552 = vmul.f32 %v1519, %v1551
        %v1553 = vsub.f32 1.0, %v1552
        %v1554 = vmul.f32 %v1551, %v1553
        %v1555 = vadd.f32 %v1551, %v1554
        %vm1556 = vweird.f32 %v1519
        %vm1557 = vweird.f32 %v1551
        %vm1558 = vmor %vm1556, %vm1557
        %v1559 = vsel %vm1558, %v1551, %v1555
        %v1560 = vand.u32 2147483647, %v1519
        %vm1561 = vcmp.eq.f32.partialorder %v1560, 8.507059e+37
        %v1562 = vand.u32 %v1519, 2147483648
        %v1563 = vor.u32 1.1754944e-38, %v1562
        %v1564 = vsel %vm1561, %v1563, %v1559
        %v1565 = vmul.f32 1.0, %v1564
        %v1566 = vrcp.pop %v1520
        %v1567 = vmul.f32 %v1520, %v1566
        %v1568 = vsub.f32 1.0, %v1567
        %v1569 = vmul.f32 %v1566, %v1568
        %v1570 = vadd.f32 %v1566, %v1569
        %vm1571 = vweird.f32 %v1520
        %vm1572 = vweird.f32 %v1566
        %vm1573 = vmor %vm1571, %vm1572
        %v1574 = vsel %vm1573, %v1566, %v1570
        %v1575 = vand.u32 2147483647, %v1520
        %vm1576 = vcmp.eq.f32.partialorder %v1575, 8.507059e+37
        %v1577 = vand.u32 %v1520, 2147483648
        %v1578 = vor.u32 1.1754944e-38, %v1577
        %v1579 = vsel %vm1576, %v1578, %v1574
        %v1580 = vmul.f32 1.0, %v1579
        %v1581 = vtanh.pop %v1501
        %v1582 = vtanh.pop %v1502
        %v1583 = vtanh.pop %v1503
        %v1584 = vtanh.pop %v1504
        %v1589 = vrot.slane %v1408, 7
        %v1590 = vrot.slane %v1409, 7
        %v1591 = vrot.slane %v1410, 7
        %v1592 = vrot.slane %v1411, 7
        %v1597 = vmul.f32 %v1535, %v1589
        %v1598 = vmul.f32 %v1550, %v1590
        %v1599 = vmul.f32 %v1565, %v1591
        %v1600 = vmul.f32 %v1580, %v1592
        %1605 = vrot.lane.b32.xlu0 %v1581, 64
        %v1606 = vpop.permute.xlu0 %1605
        %1607 = vrot.lane.b32.xlu0 %v1582, 64
        %v1608 = vpop.permute.xlu0 %1607
        %1609 = vrot.lane.b32.xlu0 %v1583, 64
        %v1610 = vpop.permute.xlu0 %1609
        %1611 = vrot.lane.b32.xlu0 %v1584, 64
        %v1612 = vpop.permute.xlu0 %1611
        %v1617 = vmul.f32 %v1535, %v1606
        %v1618 = vmul.f32 %v1550, %v1608
        %v1619 = vmul.f32 %v1565, %v1610
        %v1620 = vmul.f32 %v1580, %v1612
        %1625 = vrot.lane.b32.xlu0 %v1617, 96
        %v1626 = vpop.permute.xlu0 %1625
        %1627 = vrot.lane.b32.xlu0 %v1618, 96
        %v1628 = vpop.permute.xlu0 %1627
        %1629 = vrot.lane.b32.xlu0 %v1619, 96
        %v1630 = vpop.permute.xlu0 %1629
        %1631 = vrot.lane.b32.xlu0 %v1620, 96
        %v1632 = vpop.permute.xlu0 %1631
        %v1637 = vadd.f32 %v1597, %v1626
        %v1638 = vadd.f32 %v1598, %v1628
        %v1639 = vadd.f32 %v1599, %v1630
        %v1640 = vadd.f32 %v1600, %v1632
        %v1641 = vtanh.pop %v1637
        %v1642 = vtanh.pop %v1638
        %v1643 = vtanh.pop %v1639
        %v1644 = vtanh.pop %v1640
        %1649 = vrot.lane.b32.xlu0 %v1641, 64
        %v1650 = vpop.permute.xlu0 %1649
        %1651 = vrot.lane.b32.xlu0 %v1642, 64
        %v1652 = vpop.permute.xlu0 %1651
        %1653 = vrot.lane.b32.xlu0 %v1643, 64
        %v1654 = vpop.permute.xlu0 %1653
        %1655 = vrot.lane.b32.xlu0 %v1644, 64
        %v1656 = vpop.permute.xlu0 %1655
        %v1661 = vmul.f32 %v1535, %v1650
        %v1662 = vmul.f32 %v1550, %v1652
        %v1663 = vmul.f32 %v1565, %v1654
        %v1664 = vmul.f32 %v1580, %v1656
        %v1669 = vrot.slane %v1662, 7
        %v1670 = vsel %vm776, %v1669, %v1661
        %v1671 = vrot.slane %v1663, 6
        %v1672 = vsel %vm779, %v1671, %v1670
        %v1673 = vrot.slane %v1664, 5
        %v1674 = vsel %vm782, %v1673, %v1672
        %1675 = vrot.lane.b32.xlu0 %v1674, 64
        %v1676 = vpop.permute.xlu0 %1675
        %s1678 = scalar_lea.vmem %s453, 16 [#allocation7]
        %vm1679 = vcmask 261124
        %1680 = vst.msk [vmem:[%s1678 - $0x4] sm:$0xf0] %vm1679, %v1676
        %1681 = vst.sshfl [vmem:[#allocation1] sm:$0xff pattern:$0x75316420] %v1661
        %s1682 = scalar_lea.vmem [#allocation1], 1
        %v1683 = vld [vmem:[%s1682] ss:$2 sm:$0xff]
        %1684 = vst.sshfl [vmem:[#allocation1 + $0x10] sm:$0xff pattern:$0x75316420] %v1662
        %s1685 = scalar_lea.vmem [#allocation1], 17
        %v1686 = vld [vmem:[%s1685] ss:$2 sm:$0xff]
        %1687 = vst.sshfl [vmem:[#allocation1 + $0x20] sm:$0xff pattern:$0x75316420] %v1663
        %s1688 = scalar_lea.vmem [#allocation1], 33
        %v1689 = vld [vmem:[%s1688] ss:$2 sm:$0xff]
        %1690 = vst.sshfl [vmem:[#allocation1 + $0x30] sm:$0xff pattern:$0x75316420] %v1664
        %s1691 = scalar_lea.vmem [#allocation1], 49
        %v1692 = vld [vmem:[%s1691] ss:$2 sm:$0xff]
        %v1693 = vrot.slane %v1686, 7
        %v1694 = vsel %vm762, %v1693, %v1683
        %v1695 = vsel %vm776, %v1693, %v1694
        %v1696 = vrot.slane %v1689, 6
        %v1697 = vsel %vm765, %v1696, %v1695
        %v1698 = vsel %vm779, %v1696, %v1697
        %v1699 = vrot.slane %v1692, 5
        %v1700 = vsel %vm768, %v1699, %v1698
        %v1701 = vsel %vm782, %v1699, %v1700
        %1702 = vrot.lane.b32.xlu0 %v1701, 64
        %v1703 = vpop.permute.xlu0 %1702
        %1705 = vst.msk [vmem:[%s446 + $0x4] sm:$0xf] %vm773, %v1703
        %v1706 = vrot.slane %v1661, 4
        %v1707 = vrot.slane %v1662, 3
        %v1708 = vsel %vm762, %v1707, %v1706
        %v1709 = vrot.slane %v1663, 2
        %v1710 = vsel %vm765, %v1709, %v1708
        %v1711 = vrot.slane %v1664, 1
        %v1712 = vsel %vm768, %v1711, %v1710
        %1713 = vrot.lane.b32.xlu0 %v1712, 64
        %v1714 = vpop.permute.xlu0 %1713
        %v1715 = vsel %vm565, %v1714, 0
        %1717 = vmatpush.msra.mxu0 0.0
        %1718 = vmatpush.msra.mxu0 0.0
        %1719 = vmatpush.msra.mxu0 0.0
        %1720 = vmatpush.msra.mxu0 0.0
        %1721 = vmatpush.msra.mxu0 0.0
        %1722 = vmatpush.msra.mxu0 0.0
        %1723 = vmatpush.msra.mxu0 0.0
        %1724 = vmatpush.msra.mxu0 0.0
        %1725 = vmatpush.msra.mxu0 0.0
        %1726 = vmatpush.msra.mxu0 0.0
        %1727 = vmatpush.msra.mxu0 0.0
        %1728 = vmatpush.msra.mxu0 0.0
        %1729 = vmatpush.msra.mxu0 %v562
        %1730 = vmatpush.msra.mxu0 %v561
        %1731 = vmatpush.msra.mxu0 %v560
        %1732 = vmatpush.msra.mxu0 %v559
        %1733 = vmatmul.f32.gmra.mxu0 %v1715
        %v1734 = vpop.f32.mrf.mxu0
        %v1735 = vadd.f32 0.0, %v1734
        %1736 = vdwg.mxu0
        %v1738 = vrot.slane %v1735, 3
        %v1739 = vrot.slane %v1735, 4
        %v1740 = vrot.slane %v1735, 5
        %v1741 = vrot.slane %v1735, 6
        %v1746 = vadd.f32 %v536, %v1738
        %v1747 = vadd.f32 %v542, %v1739
        %v1748 = vadd.f32 %v548, %v1740
        %v1749 = vadd.f32 %v554, %v1741
        %v1750 = vxor.u32 %v1746, 2147483648
        %v1751 = vxor.u32 %v1747, 2147483648
        %v1752 = vxor.u32 %v1748, 2147483648
        %v1753 = vxor.u32 %v1749, 2147483648
        %v1754 = vmul.f32 %v1750, 1.442695
        %v1755 = vpow.pop %v1754
        %v1756 = vmul.f32 %v1751, 1.442695
        %v1757 = vpow.pop %v1756
        %v1758 = vmul.f32 %v1752, 1.442695
        %v1759 = vpow.pop %v1758
        %v1760 = vmul.f32 %v1753, 1.442695
        %v1761 = vpow.pop %v1760
        %v1762 = vadd.f32 %v1755, 1.0
        %v1763 = vadd.f32 %v1757, 1.0
        %v1764 = vadd.f32 %v1759, 1.0
        %v1765 = vadd.f32 %v1761, 1.0
        %v1766 = vrcp.pop %v1762
        %v1767 = vmul.f32 %v1762, %v1766
        %v1768 = vsub.f32 1.0, %v1767
        %v1769 = vmul.f32 %v1766, %v1768
        %v1770 = vadd.f32 %v1766, %v1769
        %vm1771 = vweird.f32 %v1762
        %vm1772 = vweird.f32 %v1766
        %vm1773 = vmor %vm1771, %vm1772
        %v1774 = vsel %vm1773, %v1766, %v1770
        %v1775 = vand.u32 2147483647, %v1762
        %vm1776 = vcmp.eq.f32.partialorder %v1775, 8.507059e+37
        %v1777 = vand.u32 %v1762, 2147483648
        %v1778 = vor.u32 1.1754944e-38, %v1777
        %v1779 = vsel %vm1776, %v1778, %v1774
        %v1780 = vmul.f32 1.0, %v1779
        %v1781 = vrcp.pop %v1763
        %v1782 = vmul.f32 %v1763, %v1781
        %v1783 = vsub.f32 1.0, %v1782
        %v1784 = vmul.f32 %v1781, %v1783
        %v1785 = vadd.f32 %v1781, %v1784
        %vm1786 = vweird.f32 %v1763
        %vm1787 = vweird.f32 %v1781
        %vm1788 = vmor %vm1786, %vm1787
        %v1789 = vsel %vm1788, %v1781, %v1785
        %v1790 = vand.u32 2147483647, %v1763
        %vm1791 = vcmp.eq.f32.partialorder %v1790, 8.507059e+37
        %v1792 = vand.u32 %v1763, 2147483648
        %v1793 = vor.u32 1.1754944e-38, %v1792
        %v1794 = vsel %vm1791, %v1793, %v1789
        %v1795 = vmul.f32 1.0, %v1794
        %v1796 = vrcp.pop %v1764
        %v1797 = vmul.f32 %v1764, %v1796
        %v1798 = vsub.f32 1.0, %v1797
        %v1799 = vmul.f32 %v1796, %v1798
        %v1800 = vadd.f32 %v1796, %v1799
        %vm1801 = vweird.f32 %v1764
        %vm1802 = vweird.f32 %v1796
        %vm1803 = vmor %vm1801, %vm1802
        %v1804 = vsel %vm1803, %v1796, %v1800
        %v1805 = vand.u32 2147483647, %v1764
        %vm1806 = vcmp.eq.f32.partialorder %v1805, 8.507059e+37
        %v1807 = vand.u32 %v1764, 2147483648
        %v1808 = vor.u32 1.1754944e-38, %v1807
        %v1809 = vsel %vm1806, %v1808, %v1804
        %v1810 = vmul.f32 1.0, %v1809
        %v1811 = vrcp.pop %v1765
        %v1812 = vmul.f32 %v1765, %v1811
        %v1813 = vsub.f32 1.0, %v1812
        %v1814 = vmul.f32 %v1811, %v1813
        %v1815 = vadd.f32 %v1811, %v1814
        %vm1816 = vweird.f32 %v1765
        %vm1817 = vweird.f32 %v1811
        %vm1818 = vmor %vm1816, %vm1817
        %v1819 = vsel %vm1818, %v1811, %v1815
        %v1820 = vand.u32 2147483647, %v1765
        %vm1821 = vcmp.eq.f32.partialorder %v1820, 8.507059e+37
        %v1822 = vand.u32 %v1765, 2147483648
        %v1823 = vor.u32 1.1754944e-38, %v1822
        %v1824 = vsel %vm1821, %v1823, %v1819
        %v1825 = vmul.f32 1.0, %v1824
        %v1826 = vtanh.pop %v1746
        %v1827 = vtanh.pop %v1747
        %v1828 = vtanh.pop %v1748
        %v1829 = vtanh.pop %v1749
        %v1834 = vrot.slane %v1637, 7
        %v1835 = vrot.slane %v1638, 7
        %v1836 = vrot.slane %v1639, 7
        %v1837 = vrot.slane %v1640, 7
        %v1842 = vmul.f32 %v1780, %v1834
        %v1843 = vmul.f32 %v1795, %v1835
        %v1844 = vmul.f32 %v1810, %v1836
        %v1845 = vmul.f32 %v1825, %v1837
        %1850 = vrot.lane.b32.xlu0 %v1826, 64
        %v1851 = vpop.permute.xlu0 %1850
        %1852 = vrot.lane.b32.xlu0 %v1827, 64
        %v1853 = vpop.permute.xlu0 %1852
        %1854 = vrot.lane.b32.xlu0 %v1828, 64
        %v1855 = vpop.permute.xlu0 %1854
        %1856 = vrot.lane.b32.xlu0 %v1829, 64
        %v1857 = vpop.permute.xlu0 %1856
        %v1862 = vmul.f32 %v1780, %v1851
        %v1863 = vmul.f32 %v1795, %v1853
        %v1864 = vmul.f32 %v1810, %v1855
        %v1865 = vmul.f32 %v1825, %v1857
        %1870 = vrot.lane.b32.xlu0 %v1862, 96
        %v1871 = vpop.permute.xlu0 %1870
        %1872 = vrot.lane.b32.xlu0 %v1863, 96
        %v1873 = vpop.permute.xlu0 %1872
        %1874 = vrot.lane.b32.xlu0 %v1864, 96
        %v1875 = vpop.permute.xlu0 %1874
        %1876 = vrot.lane.b32.xlu0 %v1865, 96
        %v1877 = vpop.permute.xlu0 %1876
        %v1882 = vadd.f32 %v1842, %v1871
        %v1883 = vadd.f32 %v1843, %v1873
        %v1884 = vadd.f32 %v1844, %v1875
        %v1885 = vadd.f32 %v1845, %v1877
        %v1886 = vtanh.pop %v1882
        %v1887 = vtanh.pop %v1883
        %v1888 = vtanh.pop %v1884
        %v1889 = vtanh.pop %v1885
        %1894 = vrot.lane.b32.xlu0 %v1886, 64
        %v1895 = vpop.permute.xlu0 %1894
        %1896 = vrot.lane.b32.xlu0 %v1887, 64
        %v1897 = vpop.permute.xlu0 %1896
        %1898 = vrot.lane.b32.xlu0 %v1888, 64
        %v1899 = vpop.permute.xlu0 %1898
        %1900 = vrot.lane.b32.xlu0 %v1889, 64
        %v1901 = vpop.permute.xlu0 %1900
        %v1906 = vmul.f32 %v1780, %v1895
        %v1907 = vmul.f32 %v1795, %v1897
        %v1908 = vmul.f32 %v1810, %v1899
        %v1909 = vmul.f32 %v1825, %v1901
        %v1914 = vrot.slane %v1907, 7
        %v1915 = vsel %vm779, %v1914, %v1906
        %v1916 = vrot.slane %v1908, 6
        %v1917 = vsel %vm782, %v1916, %v1915
        %v1918 = vrot.slane %v1909, 5
        %1919 = vrot.lane.b32.xlu0 %v1917, 64
        %v1920 = vpop.permute.xlu0 %1919
        %1921 = vrot.lane.b32.xlu0 %v1918, 64
        %v1922 = vpop.permute.xlu0 %1921
        %s1925 = scalar_lea.vmem %s453, 20 [#allocation7]
        %vm1926 = vcmask 261125
        %1927 = vst.msk [vmem:[%s1925 - $0x5] sm:$0xe0] %vm1926, %v1920
        %vm1928 = vcmask 253952
        %1929 = vst.msk [vmem:[%s1925 + $0x3] sm:$0x1] %vm1928, %v1922
        %1930 = vst.sshfl [vmem:[#allocation1] sm:$0xff pattern:$0x75316420] %v1906
        %s1931 = scalar_lea.vmem [#allocation1], 1
        %v1932 = vld [vmem:[%s1931] ss:$2 sm:$0xff]
        %1933 = vst.sshfl [vmem:[#allocation1 + $0x10] sm:$0xff pattern:$0x75316420] %v1907
        %s1934 = scalar_lea.vmem [#allocation1], 17
        %v1935 = vld [vmem:[%s1934] ss:$2 sm:$0xff]
        %1936 = vst.sshfl [vmem:[#allocation1 + $0x20] sm:$0xff pattern:$0x75316420] %v1908
        %s1937 = scalar_lea.vmem [#allocation1], 33
        %v1938 = vld [vmem:[%s1937] ss:$2 sm:$0xff]
        %1939 = vst.sshfl [vmem:[#allocation1 + $0x30] sm:$0xff pattern:$0x75316420] %v1909
        %s1940 = scalar_lea.vmem [#allocation1], 49
        %v1941 = vld [vmem:[%s1940] ss:$2 sm:$0xff]
        %v1942 = vrot.slane %v1932, 1
        %v1943 = vsel %vm762, %v1935, %v1942
        %v1944 = vsel %vm776, %v1935, %v1943
        %v1945 = vrot.slane %v1938, 7
        %v1946 = vsel %vm765, %v1945, %v1944
        %v1947 = vsel %vm779, %v1945, %v1946
        %v1948 = vrot.slane %v1941, 6
        %v1949 = vsel %vm768, %v1948, %v1947
        %v1950 = vsel %vm782, %v1948, %v1949
        %1951 = vrot.lane.b32.xlu0 %v1950, 96
        %v1952 = vpop.permute.xlu0 %1951
        %1954 = vst.msk [vmem:[%s446 + $0x4] sm:$0xf] %vm1010, %v1952
        %v1955 = vrot.slane %v1906, 5
        %v1956 = vrot.slane %v1907, 4
        %v1957 = vsel %vm762, %v1956, %v1955
        %v1958 = vrot.slane %v1908, 3
        %v1959 = vsel %vm765, %v1958, %v1957
        %v1960 = vrot.slane %v1909, 2
        %v1961 = vsel %vm768, %v1960, %v1959
        %1962 = vrot.lane.b32.xlu0 %v1961, 64
        %v1963 = vpop.permute.xlu0 %1962
        %v1964 = vsel %vm565, %v1963, 0
        %1966 = vmatpush.msra.mxu0 0.0
        %1967 = vmatpush.msra.mxu0 0.0
        %1968 = vmatpush.msra.mxu0 0.0
        %1969 = vmatpush.msra.mxu0 0.0
        %1970 = vmatpush.msra.mxu0 0.0
        %1971 = vmatpush.msra.mxu0 0.0
        %1972 = vmatpush.msra.mxu0 0.0
        %1973 = vmatpush.msra.mxu0 0.0
        %1974 = vmatpush.msra.mxu0 0.0
        %1975 = vmatpush.msra.mxu0 0.0
        %1976 = vmatpush.msra.mxu0 0.0
        %1977 = vmatpush.msra.mxu0 0.0
        %1978 = vmatpush.msra.mxu0 %v562
        %1979 = vmatpush.msra.mxu0 %v561
        %1980 = vmatpush.msra.mxu0 %v560
        %1981 = vmatpush.msra.mxu0 %v559
        %1982 = vmatmul.f32.gmra.mxu0 %v1964
        %v1983 = vpop.f32.mrf.mxu0
        %v1984 = vadd.f32 0.0, %v1983
        %1985 = vdwg.mxu0
        %v1987 = vrot.slane %v1984, 2
        %v1988 = vrot.slane %v1984, 3
        %v1989 = vrot.slane %v1984, 4
        %v1990 = vrot.slane %v1984, 5
        %v1995 = vadd.f32 %v536, %v1987
        %v1996 = vadd.f32 %v542, %v1988
        %v1997 = vadd.f32 %v548, %v1989
        %v1998 = vadd.f32 %v554, %v1990
        %v1999 = vxor.u32 %v1995, 2147483648
        %v2000 = vxor.u32 %v1996, 2147483648
        %v2001 = vxor.u32 %v1997, 2147483648
        %v2002 = vxor.u32 %v1998, 2147483648
        %v2003 = vmul.f32 %v1999, 1.442695
        %v2004 = vpow.pop %v2003
        %v2005 = vmul.f32 %v2000, 1.442695
        %v2006 = vpow.pop %v2005
        %v2007 = vmul.f32 %v2001, 1.442695
        %v2008 = vpow.pop %v2007
        %v2009 = vmul.f32 %v2002, 1.442695
        %v2010 = vpow.pop %v2009
        %v2011 = vadd.f32 %v2004, 1.0
        %v2012 = vadd.f32 %v2006, 1.0
        %v2013 = vadd.f32 %v2008, 1.0
        %v2014 = vadd.f32 %v2010, 1.0
        %v2015 = vrcp.pop %v2011
        %v2016 = vmul.f32 %v2011, %v2015
        %v2017 = vsub.f32 1.0, %v2016
        %v2018 = vmul.f32 %v2015, %v2017
        %v2019 = vadd.f32 %v2015, %v2018
        %vm2020 = vweird.f32 %v2011
        %vm2021 = vweird.f32 %v2015
        %vm2022 = vmor %vm2020, %vm2021
        %v2023 = vsel %vm2022, %v2015, %v2019
        %v2024 = vand.u32 2147483647, %v2011
        %vm2025 = vcmp.eq.f32.partialorder %v2024, 8.507059e+37
        %v2026 = vand.u32 %v2011, 2147483648
        %v2027 = vor.u32 1.1754944e-38, %v2026
        %v2028 = vsel %vm2025, %v2027, %v2023
        %v2029 = vmul.f32 1.0, %v2028
        %v2030 = vrcp.pop %v2012
        %v2031 = vmul.f32 %v2012, %v2030
        %v2032 = vsub.f32 1.0, %v2031
        %v2033 = vmul.f32 %v2030, %v2032
        %v2034 = vadd.f32 %v2030, %v2033
        %vm2035 = vweird.f32 %v2012
        %vm2036 = vweird.f32 %v2030
        %vm2037 = vmor %vm2035, %vm2036
        %v2038 = vsel %vm2037, %v2030, %v2034
        %v2039 = vand.u32 2147483647, %v2012
        %vm2040 = vcmp.eq.f32.partialorder %v2039, 8.507059e+37
        %v2041 = vand.u32 %v2012, 2147483648
        %v2042 = vor.u32 1.1754944e-38, %v2041
        %v2043 = vsel %vm2040, %v2042, %v2038
        %v2044 = vmul.f32 1.0, %v2043
        %v2045 = vrcp.pop %v2013
        %v2046 = vmul.f32 %v2013, %v2045
        %v2047 = vsub.f32 1.0, %v2046
        %v2048 = vmul.f32 %v2045, %v2047
        %v2049 = vadd.f32 %v2045, %v2048
        %vm2050 = vweird.f32 %v2013
        %vm2051 = vweird.f32 %v2045
        %vm2052 = vmor %vm2050, %vm2051
        %v2053 = vsel %vm2052, %v2045, %v2049
        %v2054 = vand.u32 2147483647, %v2013
        %vm2055 = vcmp.eq.f32.partialorder %v2054, 8.507059e+37
        %v2056 = vand.u32 %v2013, 2147483648
        %v2057 = vor.u32 1.1754944e-38, %v2056
        %v2058 = vsel %vm2055, %v2057, %v2053
        %v2059 = vmul.f32 1.0, %v2058
        %v2060 = vrcp.pop %v2014
        %v2061 = vmul.f32 %v2014, %v2060
        %v2062 = vsub.f32 1.0, %v2061
        %v2063 = vmul.f32 %v2060, %v2062
        %v2064 = vadd.f32 %v2060, %v2063
        %vm2065 = vweird.f32 %v2014
        %vm2066 = vweird.f32 %v2060
        %vm2067 = vmor %vm2065, %vm2066
        %v2068 = vsel %vm2067, %v2060, %v2064
        %v2069 = vand.u32 2147483647, %v2014
        %vm2070 = vcmp.eq.f32.partialorder %v2069, 8.507059e+37
        %v2071 = vand.u32 %v2014, 2147483648
        %v2072 = vor.u32 1.1754944e-38, %v2071
        %v2073 = vsel %vm2070, %v2072, %v2068
        %v2074 = vmul.f32 1.0, %v2073
        %v2075 = vtanh.pop %v1995
        %v2076 = vtanh.pop %v1996
        %v2077 = vtanh.pop %v1997
        %v2078 = vtanh.pop %v1998
        %v2083 = vrot.slane %v1882, 7
        %v2084 = vrot.slane %v1883, 7
        %v2085 = vrot.slane %v1884, 7
        %v2086 = vrot.slane %v1885, 7
        %v2091 = vmul.f32 %v2029, %v2083
        %v2092 = vmul.f32 %v2044, %v2084
        %v2093 = vmul.f32 %v2059, %v2085
        %v2094 = vmul.f32 %v2074, %v2086
        %2099 = vrot.lane.b32.xlu0 %v2075, 64
        %v2100 = vpop.permute.xlu0 %2099
        %2101 = vrot.lane.b32.xlu0 %v2076, 64
        %v2102 = vpop.permute.xlu0 %2101
        %2103 = vrot.lane.b32.xlu0 %v2077, 64
        %v2104 = vpop.permute.xlu0 %2103
        %2105 = vrot.lane.b32.xlu0 %v2078, 64
        %v2106 = vpop.permute.xlu0 %2105
        %v2111 = vmul.f32 %v2029, %v2100
        %v2112 = vmul.f32 %v2044, %v2102
        %v2113 = vmul.f32 %v2059, %v2104
        %v2114 = vmul.f32 %v2074, %v2106
        %2119 = vrot.lane.b32.xlu0 %v2111, 96
        %v2120 = vpop.permute.xlu0 %2119
        %2121 = vrot.lane.b32.xlu0 %v2112, 96
        %v2122 = vpop.permute.xlu0 %2121
        %2123 = vrot.lane.b32.xlu0 %v2113, 96
        %v2124 = vpop.permute.xlu0 %2123
        %2125 = vrot.lane.b32.xlu0 %v2114, 96
        %v2126 = vpop.permute.xlu0 %2125
        %v2131 = vadd.f32 %v2091, %v2120
        %v2132 = vadd.f32 %v2092, %v2122
        %v2133 = vadd.f32 %v2093, %v2124
        %v2134 = vadd.f32 %v2094, %v2126
        %v2135 = vtanh.pop %v2131
        %v2136 = vtanh.pop %v2132
        %v2137 = vtanh.pop %v2133
        %v2138 = vtanh.pop %v2134
        %2143 = vrot.lane.b32.xlu0 %v2135, 64
        %v2144 = vpop.permute.xlu0 %2143
        %2145 = vrot.lane.b32.xlu0 %v2136, 64
        %v2146 = vpop.permute.xlu0 %2145
        %2147 = vrot.lane.b32.xlu0 %v2137, 64
        %v2148 = vpop.permute.xlu0 %2147
        %2149 = vrot.lane.b32.xlu0 %v2138, 64
        %v2150 = vpop.permute.xlu0 %2149
        %v2155 = vmul.f32 %v2029, %v2144
        %v2156 = vmul.f32 %v2044, %v2146
        %v2157 = vmul.f32 %v2059, %v2148
        %v2158 = vmul.f32 %v2074, %v2150
        %v2163 = vrot.slane %v2156, 7
        %v2164 = vsel %vm782, %v2163, %v2155
        %v2165 = vrot.slane %v2157, 6
        %v2166 = vrot.slane %v2158, 5
        %v2167 = vsel %vm762, %v2166, %v2165
        %2168 = vrot.lane.b32.xlu0 %v2164, 64
        %v2169 = vpop.permute.xlu0 %2168
        %2170 = vrot.lane.b32.xlu0 %v2167, 64
        %v2171 = vpop.permute.xlu0 %2170
        %s2174 = scalar_lea.vmem %s453, 24 [#allocation7]
        %vm2175 = vcmask 261126
        %2176 = vst.msk [vmem:[%s2174 - $0x6] sm:$0xc0] %vm2175, %v2169
        %vm2177 = vcmask 254976
        %2178 = vst.msk [vmem:[%s2174 + $0x2] sm:$0x3] %vm2177, %v2171
        %2179 = vst.sshfl [vmem:[#allocation1] sm:$0xff pattern:$0x75316420] %v2155
        %s2180 = scalar_lea.vmem [#allocation1], 1
        %v2181 = vld [vmem:[%s2180] ss:$2 sm:$0xff]
        %2182 = vst.sshfl [vmem:[#allocation1 + $0x10] sm:$0xff pattern:$0x75316420] %v2156
        %s2183 = scalar_lea.vmem [#allocation1], 17
        %v2184 = vld [vmem:[%s2183] ss:$2 sm:$0xff]
        %2185 = vst.sshfl [vmem:[#allocation1 + $0x20] sm:$0xff pattern:$0x75316420] %v2157
        %s2186 = scalar_lea.vmem [#allocation1], 33
        %v2187 = vld [vmem:[%s2186] ss:$2 sm:$0xff]
        %2188 = vst.sshfl [vmem:[#allocation1 + $0x30] sm:$0xff pattern:$0x75316420] %v2158
        %s2189 = scalar_lea.vmem [#allocation1], 49
        %v2190 = vld [vmem:[%s2189] ss:$2 sm:$0xff]
        %v2191 = vrot.slane %v2181, 2
        %v2192 = vrot.slane %v2184, 1
        %v2193 = vsel %vm762, %v2192, %v2191
        %v2194 = vsel %vm776, %v2192, %v2193
        %v2195 = vsel %vm765, %v2187, %v2194
        %v2196 = vsel %vm779, %v2187, %v2195
        %v2197 = vrot.slane %v2190, 7
        %v2198 = vsel %vm768, %v2197, %v2196
        %v2199 = vsel %vm782, %v2197, %v2198
        %2201 = vst.msk [vmem:[%s446 + $0x4] sm:$0xf] %vm1236, %v2199
        %v2202 = vrot.slane %v2155, 6
        %v2203 = vrot.slane %v2156, 5
        %v2204 = vsel %vm762, %v2203, %v2202
        %v2205 = vrot.slane %v2157, 4
        %v2206 = vsel %vm765, %v2205, %v2204
        %v2207 = vrot.slane %v2158, 3
        %v2208 = vsel %vm768, %v2207, %v2206
        %2209 = vrot.lane.b32.xlu0 %v2208, 64
        %v2210 = vpop.permute.xlu0 %2209
        %v2211 = vsel %vm565, %v2210, 0
        %2213 = vmatpush.msra.mxu0 0.0
        %2214 = vmatpush.msra.mxu0 0.0
        %2215 = vmatpush.msra.mxu0 0.0
        %2216 = vmatpush.msra.mxu0 0.0
        %2217 = vmatpush.msra.mxu0 0.0
        %2218 = vmatpush.msra.mxu0 0.0
        %2219 = vmatpush.msra.mxu0 0.0
        %2220 = vmatpush.msra.mxu0 0.0
        %2221 = vmatpush.msra.mxu0 0.0
        %2222 = vmatpush.msra.mxu0 0.0
        %2223 = vmatpush.msra.mxu0 0.0
        %2224 = vmatpush.msra.mxu0 0.0
        %2225 = vmatpush.msra.mxu0 %v562
        %2226 = vmatpush.msra.mxu0 %v561
        %2227 = vmatpush.msra.mxu0 %v560
        %2228 = vmatpush.msra.mxu0 %v559
        %2229 = vmatmul.f32.gmra.mxu0 %v2211
        %v2230 = vpop.f32.mrf.mxu0
        %v2231 = vadd.f32 0.0, %v2230
        %2232 = vdwg.mxu0
        %v2234 = vrot.slane %v2231, 1
        %v2235 = vrot.slane %v2231, 2
        %v2236 = vrot.slane %v2231, 3
        %v2237 = vrot.slane %v2231, 4
        %v2242 = vadd.f32 %v536, %v2234
        %v2243 = vadd.f32 %v542, %v2235
        %v2244 = vadd.f32 %v548, %v2236
        %v2245 = vadd.f32 %v554, %v2237
        %v2246 = vxor.u32 %v2242, 2147483648
        %v2247 = vxor.u32 %v2243, 2147483648
        %v2248 = vxor.u32 %v2244, 2147483648
        %v2249 = vxor.u32 %v2245, 2147483648
        %v2250 = vmul.f32 %v2246, 1.442695
        %v2251 = vpow.pop %v2250
        %v2252 = vmul.f32 %v2247, 1.442695
        %v2253 = vpow.pop %v2252
        %v2254 = vmul.f32 %v2248, 1.442695
        %v2255 = vpow.pop %v2254
        %v2256 = vmul.f32 %v2249, 1.442695
        %v2257 = vpow.pop %v2256
        %v2258 = vadd.f32 %v2251, 1.0
        %v2259 = vadd.f32 %v2253, 1.0
        %v2260 = vadd.f32 %v2255, 1.0
        %v2261 = vadd.f32 %v2257, 1.0
        %v2262 = vrcp.pop %v2258
        %v2263 = vmul.f32 %v2258, %v2262
        %v2264 = vsub.f32 1.0, %v2263
        %v2265 = vmul.f32 %v2262, %v2264
        %v2266 = vadd.f32 %v2262, %v2265
        %vm2267 = vweird.f32 %v2258
        %vm2268 = vweird.f32 %v2262
        %vm2269 = vmor %vm2267, %vm2268
        %v2270 = vsel %vm2269, %v2262, %v2266
        %v2271 = vand.u32 2147483647, %v2258
        %vm2272 = vcmp.eq.f32.partialorder %v2271, 8.507059e+37
        %v2273 = vand.u32 %v2258, 2147483648
        %v2274 = vor.u32 1.1754944e-38, %v2273
        %v2275 = vsel %vm2272, %v2274, %v2270
        %v2276 = vmul.f32 1.0, %v2275
        %v2277 = vrcp.pop %v2259
        %v2278 = vmul.f32 %v2259, %v2277
        %v2279 = vsub.f32 1.0, %v2278
        %v2280 = vmul.f32 %v2277, %v2279
        %v2281 = vadd.f32 %v2277, %v2280
        %vm2282 = vweird.f32 %v2259
        %vm2283 = vweird.f32 %v2277
        %vm2284 = vmor %vm2282, %vm2283
        %v2285 = vsel %vm2284, %v2277, %v2281
        %v2286 = vand.u32 2147483647, %v2259
        %vm2287 = vcmp.eq.f32.partialorder %v2286, 8.507059e+37
        %v2288 = vand.u32 %v2259, 2147483648
        %v2289 = vor.u32 1.1754944e-38, %v2288
        %v2290 = vsel %vm2287, %v2289, %v2285
        %v2291 = vmul.f32 1.0, %v2290
        %v2292 = vrcp.pop %v2260
        %v2293 = vmul.f32 %v2260, %v2292
        %v2294 = vsub.f32 1.0, %v2293
        %v2295 = vmul.f32 %v2292, %v2294
        %v2296 = vadd.f32 %v2292, %v2295
        %vm2297 = vweird.f32 %v2260
        %vm2298 = vweird.f32 %v2292
        %vm2299 = vmor %vm2297, %vm2298
        %v2300 = vsel %vm2299, %v2292, %v2296
        %v2301 = vand.u32 2147483647, %v2260
        %vm2302 = vcmp.eq.f32.partialorder %v2301, 8.507059e+37
        %v2303 = vand.u32 %v2260, 2147483648
        %v2304 = vor.u32 1.1754944e-38, %v2303
        %v2305 = vsel %vm2302, %v2304, %v2300
        %v2306 = vmul.f32 1.0, %v2305
        %v2307 = vrcp.pop %v2261
        %v2308 = vmul.f32 %v2261, %v2307
        %v2309 = vsub.f32 1.0, %v2308
        %v2310 = vmul.f32 %v2307, %v2309
        %v2311 = vadd.f32 %v2307, %v2310
        %vm2312 = vweird.f32 %v2261
        %vm2313 = vweird.f32 %v2307
        %vm2314 = vmor %vm2312, %vm2313
        %v2315 = vsel %vm2314, %v2307, %v2311
        %v2316 = vand.u32 2147483647, %v2261
        %vm2317 = vcmp.eq.f32.partialorder %v2316, 8.507059e+37
        %v2318 = vand.u32 %v2261, 2147483648
        %v2319 = vor.u32 1.1754944e-38, %v2318
        %v2320 = vsel %vm2317, %v2319, %v2315
        %v2321 = vmul.f32 1.0, %v2320
        %v2322 = vtanh.pop %v2242
        %v2323 = vtanh.pop %v2243
        %v2324 = vtanh.pop %v2244
        %v2325 = vtanh.pop %v2245
        %v2330 = vrot.slane %v2131, 7
        %v2331 = vrot.slane %v2132, 7
        %v2332 = vrot.slane %v2133, 7
        %v2333 = vrot.slane %v2134, 7
        %v2338 = vmul.f32 %v2276, %v2330
        %v2339 = vmul.f32 %v2291, %v2331
        %v2340 = vmul.f32 %v2306, %v2332
        %v2341 = vmul.f32 %v2321, %v2333
        %2346 = vrot.lane.b32.xlu0 %v2322, 64
        %v2347 = vpop.permute.xlu0 %2346
        %2348 = vrot.lane.b32.xlu0 %v2323, 64
        %v2349 = vpop.permute.xlu0 %2348
        %2350 = vrot.lane.b32.xlu0 %v2324, 64
        %v2351 = vpop.permute.xlu0 %2350
        %2352 = vrot.lane.b32.xlu0 %v2325, 64
        %v2353 = vpop.permute.xlu0 %2352
        %v2358 = vmul.f32 %v2276, %v2347
        %v2359 = vmul.f32 %v2291, %v2349
        %v2360 = vmul.f32 %v2306, %v2351
        %v2361 = vmul.f32 %v2321, %v2353
        %2366 = vrot.lane.b32.xlu0 %v2358, 96
        %v2367 = vpop.permute.xlu0 %2366
        %2368 = vrot.lane.b32.xlu0 %v2359, 96
        %v2369 = vpop.permute.xlu0 %2368
        %2370 = vrot.lane.b32.xlu0 %v2360, 96
        %v2371 = vpop.permute.xlu0 %2370
        %2372 = vrot.lane.b32.xlu0 %v2361, 96
        %v2373 = vpop.permute.xlu0 %2372
        %v2378 = vadd.f32 %v2338, %v2367
        %v2379 = vadd.f32 %v2339, %v2369
        %v2380 = vadd.f32 %v2340, %v2371
        %v2381 = vadd.f32 %v2341, %v2373
        %v2382 = vtanh.pop %v2378
        %v2383 = vtanh.pop %v2379
        %v2384 = vtanh.pop %v2380
        %v2385 = vtanh.pop %v2381
        %2390 = vrot.lane.b32.xlu0 %v2382, 64
        %v2391 = vpop.permute.xlu0 %2390
        %2392 = vrot.lane.b32.xlu0 %v2383, 64
        %v2393 = vpop.permute.xlu0 %2392
        %2394 = vrot.lane.b32.xlu0 %v2384, 64
        %v2395 = vpop.permute.xlu0 %2394
        %2396 = vrot.lane.b32.xlu0 %v2385, 64
        %v2397 = vpop.permute.xlu0 %2396
        %v2402 = vmul.f32 %v2276, %v2391
        %v2403 = vmul.f32 %v2291, %v2393
        %v2404 = vmul.f32 %v2306, %v2395
        %v2405 = vmul.f32 %v2321, %v2397
        %v2410 = vrot.slane %v2403, 7
        %v2411 = vrot.slane %v2404, 6
        %v2412 = vsel %vm762, %v2411, %v2410
        %v2413 = vrot.slane %v2405, 5
        %v2414 = vsel %vm765, %v2413, %v2412
        %2415 = vrot.lane.b32.xlu0 %v2402, 64
        %v2416 = vpop.permute.xlu0 %2415
        %2417 = vrot.lane.b32.xlu0 %v2414, 64
        %v2418 = vpop.permute.xlu0 %2417
        %s2421 = scalar_lea.vmem %s453, 28 [#allocation7]
        %vm2422 = vcmask 261127
        %2423 = vst.msk [vmem:[%s2421 - $0x7] sm:$0x80] %vm2422, %v2416
        %vm2424 = vcmask 256000
        %2425 = vst.msk [vmem:[%s2421 + $0x1] sm:$0x7] %vm2424, %v2418
        %2426 = vst.sshfl [vmem:[#allocation1] sm:$0xff pattern:$0x75316420] %v2402
        %s2427 = scalar_lea.vmem [#allocation1], 1
        %v2428 = vld [vmem:[%s2427] ss:$2 sm:$0xff]
        %2429 = vst.sshfl [vmem:[#allocation1 + $0x10] sm:$0xff pattern:$0x75316420] %v2403
        %s2430 = scalar_lea.vmem [#allocation1], 17
        %v2431 = vld [vmem:[%s2430] ss:$2 sm:$0xff]
        %2432 = vst.sshfl [vmem:[#allocation1 + $0x20] sm:$0xff pattern:$0x75316420] %v2404
        %s2433 = scalar_lea.vmem [#allocation1], 33
        %v2434 = vld [vmem:[%s2433] ss:$2 sm:$0xff]
        %2435 = vst.sshfl [vmem:[#allocation1 + $0x30] sm:$0xff pattern:$0x75316420] %v2405
        %s2436 = scalar_lea.vmem [#allocation1], 49
        %v2437 = vld [vmem:[%s2436] ss:$2 sm:$0xff]
        %v2438 = vrot.slane %v2428, 3
        %v2439 = vrot.slane %v2431, 2
        %v2440 = vsel %vm762, %v2439, %v2438
        %v2441 = vsel %vm776, %v2439, %v2440
        %v2442 = vrot.slane %v2434, 1
        %v2443 = vsel %vm765, %v2442, %v2441
        %v2444 = vsel %vm779, %v2442, %v2443
        %v2445 = vsel %vm768, %v2437, %v2444
        %v2446 = vsel %vm782, %v2437, %v2445
        %2447 = vrot.lane.b32.xlu0 %v2446, 32
        %v2448 = vpop.permute.xlu0 %2447
        %2450 = vst.msk [vmem:[%s446 + $0x4] sm:$0xf] %vm1464, %v2448
        %v2451 = vrot.slane %v2402, 7
        %v2452 = vrot.slane %v2403, 6
        %v2453 = vsel %vm762, %v2452, %v2451
        %v2454 = vrot.slane %v2404, 5
        %v2455 = vsel %vm765, %v2454, %v2453
        %v2456 = vrot.slane %v2405, 4
        %v2457 = vsel %vm768, %v2456, %v2455
        %2458 = vrot.lane.b32.xlu0 %v2457, 64
        %v2459 = vpop.permute.xlu0 %2458
        %v2460 = vsel %vm565, %v2459, 0
        %2462 = vmatpush.msra.mxu0 0.0
        %2463 = vmatpush.msra.mxu0 0.0
        %2464 = vmatpush.msra.mxu0 0.0
        %2465 = vmatpush.msra.mxu0 0.0
        %2466 = vmatpush.msra.mxu0 0.0
        %2467 = vmatpush.msra.mxu0 0.0
        %2468 = vmatpush.msra.mxu0 0.0
        %2469 = vmatpush.msra.mxu0 0.0
        %2470 = vmatpush.msra.mxu0 0.0
        %2471 = vmatpush.msra.mxu0 0.0
        %2472 = vmatpush.msra.mxu0 0.0
        %2473 = vmatpush.msra.mxu0 0.0
        %2474 = vmatpush.msra.mxu0 %v562
        %2475 = vmatpush.msra.mxu0 %v561
        %2476 = vmatpush.msra.mxu0 %v560
        %2477 = vmatpush.msra.mxu0 %v559
        %2478 = vmatmul.f32.gmra.mxu0 %v2460
        %v2479 = vpop.f32.mrf.mxu0
        %v2480 = vadd.f32 0.0, %v2479
        %2481 = vdwg.mxu0
        %v2483 = vrot.slane %v2480, 1
        %v2484 = vrot.slane %v2480, 2
        %v2485 = vrot.slane %v2480, 3
        %v2490 = vadd.f32 %v539, %v2480
        %v2491 = vadd.f32 %v545, %v2483
        %v2492 = vadd.f32 %v551, %v2484
        %v2493 = vadd.f32 %v557, %v2485
        %v2494 = vxor.u32 %v2490, 2147483648
        %v2495 = vxor.u32 %v2491, 2147483648
        %v2496 = vxor.u32 %v2492, 2147483648
        %v2497 = vxor.u32 %v2493, 2147483648
        %v2498 = vmul.f32 %v2494, 1.442695
        %v2499 = vpow.pop %v2498
        %v2500 = vmul.f32 %v2495, 1.442695
        %v2501 = vpow.pop %v2500
        %v2502 = vmul.f32 %v2496, 1.442695
        %v2503 = vpow.pop %v2502
        %v2504 = vmul.f32 %v2497, 1.442695
        %v2505 = vpow.pop %v2504
        %v2506 = vadd.f32 %v2499, 1.0
        %v2507 = vadd.f32 %v2501, 1.0
        %v2508 = vadd.f32 %v2503, 1.0
        %v2509 = vadd.f32 %v2505, 1.0
        %v2510 = vrcp.pop %v2506
        %v2511 = vmul.f32 %v2506, %v2510
        %v2512 = vsub.f32 1.0, %v2511
        %v2513 = vmul.f32 %v2510, %v2512
        %v2514 = vadd.f32 %v2510, %v2513
        %vm2515 = vweird.f32 %v2506
        %vm2516 = vweird.f32 %v2510
        %vm2517 = vmor %vm2515, %vm2516
        %v2518 = vsel %vm2517, %v2510, %v2514
        %v2519 = vand.u32 2147483647, %v2506
        %vm2520 = vcmp.eq.f32.partialorder %v2519, 8.507059e+37
        %v2521 = vand.u32 %v2506, 2147483648
        %v2522 = vor.u32 1.1754944e-38, %v2521
        %v2523 = vsel %vm2520, %v2522, %v2518
        %v2524 = vmul.f32 1.0, %v2523
        %v2525 = vrcp.pop %v2507
        %v2526 = vmul.f32 %v2507, %v2525
        %v2527 = vsub.f32 1.0, %v2526
        %v2528 = vmul.f32 %v2525, %v2527
        %v2529 = vadd.f32 %v2525, %v2528
        %vm2530 = vweird.f32 %v2507
        %vm2531 = vweird.f32 %v2525
        %vm2532 = vmor %vm2530, %vm2531
        %v2533 = vsel %vm2532, %v2525, %v2529
        %v2534 = vand.u32 2147483647, %v2507
        %vm2535 = vcmp.eq.f32.partialorder %v2534, 8.507059e+37
        %v2536 = vand.u32 %v2507, 2147483648
        %v2537 = vor.u32 1.1754944e-38, %v2536
        %v2538 = vsel %vm2535, %v2537, %v2533
        %v2539 = vmul.f32 1.0, %v2538
        %v2540 = vrcp.pop %v2508
        %v2541 = vmul.f32 %v2508, %v2540
        %v2542 = vsub.f32 1.0, %v2541
        %v2543 = vmul.f32 %v2540, %v2542
        %v2544 = vadd.f32 %v2540, %v2543
        %vm2545 = vweird.f32 %v2508
        %vm2546 = vweird.f32 %v2540
        %vm2547 = vmor %vm2545, %vm2546
        %v2548 = vsel %vm2547, %v2540, %v2544
        %v2549 = vand.u32 2147483647, %v2508
        %vm2550 = vcmp.eq.f32.partialorder %v2549, 8.507059e+37
        %v2551 = vand.u32 %v2508, 2147483648
        %v2552 = vor.u32 1.1754944e-38, %v2551
        %v2553 = vsel %vm2550, %v2552, %v2548
        %v2554 = vmul.f32 1.0, %v2553
        %v2555 = vrcp.pop %v2509
        %v2556 = vmul.f32 %v2509, %v2555
        %v2557 = vsub.f32 1.0, %v2556
        %v2558 = vmul.f32 %v2555, %v2557
        %v2559 = vadd.f32 %v2555, %v2558
        %vm2560 = vweird.f32 %v2509
        %vm2561 = vweird.f32 %v2555
        %vm2562 = vmor %vm2560, %vm2561
        %v2563 = vsel %vm2562, %v2555, %v2559
        %v2564 = vand.u32 2147483647, %v2509
        %vm2565 = vcmp.eq.f32.partialorder %v2564, 8.507059e+37
        %v2566 = vand.u32 %v2509, 2147483648
        %v2567 = vor.u32 1.1754944e-38, %v2566
        %v2568 = vsel %vm2565, %v2567, %v2563
        %v2569 = vmul.f32 1.0, %v2568
        %v2570 = vtanh.pop %v2490
        %v2571 = vtanh.pop %v2491
        %v2572 = vtanh.pop %v2492
        %v2573 = vtanh.pop %v2493
        %v2578 = vrot.slane %v2378, 7
        %v2579 = vrot.slane %v2379, 7
        %v2580 = vrot.slane %v2380, 7
        %v2581 = vrot.slane %v2381, 7
        %v2586 = vmul.f32 %v2524, %v2578
        %v2587 = vmul.f32 %v2539, %v2579
        %v2588 = vmul.f32 %v2554, %v2580
        %v2589 = vmul.f32 %v2569, %v2581
        %2594 = vrot.lane.b32.xlu0 %v2570, 64
        %v2595 = vpop.permute.xlu0 %2594
        %2596 = vrot.lane.b32.xlu0 %v2571, 64
        %v2597 = vpop.permute.xlu0 %2596
        %2598 = vrot.lane.b32.xlu0 %v2572, 64
        %v2599 = vpop.permute.xlu0 %2598
        %2600 = vrot.lane.b32.xlu0 %v2573, 64
        %v2601 = vpop.permute.xlu0 %2600
        %v2606 = vmul.f32 %v2524, %v2595
        %v2607 = vmul.f32 %v2539, %v2597
        %v2608 = vmul.f32 %v2554, %v2599
        %v2609 = vmul.f32 %v2569, %v2601
        %2614 = vrot.lane.b32.xlu0 %v2606, 96
        %v2615 = vpop.permute.xlu0 %2614
        %2616 = vrot.lane.b32.xlu0 %v2607, 96
        %v2617 = vpop.permute.xlu0 %2616
        %2618 = vrot.lane.b32.xlu0 %v2608, 96
        %v2619 = vpop.permute.xlu0 %2618
        %2620 = vrot.lane.b32.xlu0 %v2609, 96
        %v2621 = vpop.permute.xlu0 %2620
        %v2626 = vadd.f32 %v2586, %v2615
        %v2627 = vadd.f32 %v2587, %v2617
        %v2628 = vadd.f32 %v2588, %v2619
        %v2629 = vadd.f32 %v2589, %v2621
        %v2630 = vtanh.pop %v2626
        %v2631 = vtanh.pop %v2627
        %v2632 = vtanh.pop %v2628
        %v2633 = vtanh.pop %v2629
        %2638 = vrot.lane.b32.xlu0 %v2630, 64
        %v2639 = vpop.permute.xlu0 %2638
        %2640 = vrot.lane.b32.xlu0 %v2631, 64
        %v2641 = vpop.permute.xlu0 %2640
        %2642 = vrot.lane.b32.xlu0 %v2632, 64
        %v2643 = vpop.permute.xlu0 %2642
        %2644 = vrot.lane.b32.xlu0 %v2633, 64
        %v2645 = vpop.permute.xlu0 %2644
        %v2650 = vmul.f32 %v2524, %v2639
        %v2651 = vmul.f32 %v2539, %v2641
        %v2652 = vmul.f32 %v2554, %v2643
        %v2653 = vmul.f32 %v2569, %v2645
        %v2658 = vrot.slane %v2651, 7
        %v2659 = vsel %vm762, %v2658, %v2650
        %v2660 = vrot.slane %v2652, 6
        %v2661 = vsel %vm765, %v2660, %v2659
        %v2662 = vrot.slane %v2653, 5
        %v2663 = vsel %vm768, %v2662, %v2661
        %2664 = vrot.lane.b32.xlu0 %v2663, 64
        %v2665 = vpop.permute.xlu0 %2664
        %s2667 = scalar_lea.vmem %s453, 32 [#allocation7]
        %2668 = vst.msk [vmem:[%s2667] sm:$0xf] %vm773, %v2665
        %v2669 = vsel %vm776, %v2658, %v2659
        %v2670 = vsel %vm765, %v2660, %v2669
        %v2671 = vsel %vm779, %v2660, %v2670
        %v2672 = vsel %vm768, %v2662, %v2671
        %v2673 = vsel %vm782, %v2662, %v2672
        %2674 = vrot.lane.b32.xlu0 %v2673, 64
        %v2675 = vpop.permute.xlu0 %2674
        %2677 = vst.msk [vmem:[%s446 + $0x8] sm:$0xf] %vm773, %v2675
        %v2678 = vsel %vm565, %v2665, 0
        %2680 = vmatpush.msra.mxu0 0.0
        %2681 = vmatpush.msra.mxu0 0.0
        %2682 = vmatpush.msra.mxu0 0.0
        %2683 = vmatpush.msra.mxu0 0.0
        %2684 = vmatpush.msra.mxu0 0.0
        %2685 = vmatpush.msra.mxu0 0.0
        %2686 = vmatpush.msra.mxu0 0.0
        %2687 = vmatpush.msra.mxu0 0.0
        %2688 = vmatpush.msra.mxu0 0.0
        %2689 = vmatpush.msra.mxu0 0.0
        %2690 = vmatpush.msra.mxu0 0.0
        %2691 = vmatpush.msra.mxu0 0.0
        %2692 = vmatpush.msra.mxu0 %v562
        %2693 = vmatpush.msra.mxu0 %v561
        %2694 = vmatpush.msra.mxu0 %v560
        %2695 = vmatpush.msra.mxu0 %v559
        %2696 = vmatmul.f32.gmra.mxu0 %v2678
        %v2697 = vpop.f32.mrf.mxu0
        %v2698 = vadd.f32 0.0, %v2697
        %2699 = vdwg.mxu0
        %v2701 = vrot.slane %v2698, 7
        %v2702 = vrot.slane %v2698, 1
        %v2703 = vrot.slane %v2698, 2
        %v2708 = vadd.f32 %v539, %v2701
        %v2709 = vadd.f32 %v545, %v2698
        %v2710 = vadd.f32 %v551, %v2702
        %v2711 = vadd.f32 %v557, %v2703
        %v2712 = vxor.u32 %v2708, 2147483648
        %v2713 = vxor.u32 %v2709, 2147483648
        %v2714 = vxor.u32 %v2710, 2147483648
        %v2715 = vxor.u32 %v2711, 2147483648
        %v2716 = vmul.f32 %v2712, 1.442695
        %v2717 = vpow.pop %v2716
        %v2718 = vmul.f32 %v2713, 1.442695
        %v2719 = vpow.pop %v2718
        %v2720 = vmul.f32 %v2714, 1.442695
        %v2721 = vpow.pop %v2720
        %v2722 = vmul.f32 %v2715, 1.442695
        %v2723 = vpow.pop %v2722
        %v2724 = vadd.f32 %v2717, 1.0
        %v2725 = vadd.f32 %v2719, 1.0
        %v2726 = vadd.f32 %v2721, 1.0
        %v2727 = vadd.f32 %v2723, 1.0
        %v2728 = vrcp.pop %v2724
        %v2729 = vmul.f32 %v2724, %v2728
        %v2730 = vsub.f32 1.0, %v2729
        %v2731 = vmul.f32 %v2728, %v2730
        %v2732 = vadd.f32 %v2728, %v2731
        %vm2733 = vweird.f32 %v2724
        %vm2734 = vweird.f32 %v2728
        %vm2735 = vmor %vm2733, %vm2734
        %v2736 = vsel %vm2735, %v2728, %v2732
        %v2737 = vand.u32 2147483647, %v2724
        %vm2738 = vcmp.eq.f32.partialorder %v2737, 8.507059e+37
        %v2739 = vand.u32 %v2724, 2147483648
        %v2740 = vor.u32 1.1754944e-38, %v2739
        %v2741 = vsel %vm2738, %v2740, %v2736
        %v2742 = vmul.f32 1.0, %v2741
        %v2743 = vrcp.pop %v2725
        %v2744 = vmul.f32 %v2725, %v2743
        %v2745 = vsub.f32 1.0, %v2744
        %v2746 = vmul.f32 %v2743, %v2745
        %v2747 = vadd.f32 %v2743, %v2746
        %vm2748 = vweird.f32 %v2725
        %vm2749 = vweird.f32 %v2743
        %vm2750 = vmor %vm2748, %vm2749
        %v2751 = vsel %vm2750, %v2743, %v2747
        %v2752 = vand.u32 2147483647, %v2725
        %vm2753 = vcmp.eq.f32.partialorder %v2752, 8.507059e+37
        %v2754 = vand.u32 %v2725, 2147483648
        %v2755 = vor.u32 1.1754944e-38, %v2754
        %v2756 = vsel %vm2753, %v2755, %v2751
        %v2757 = vmul.f32 1.0, %v2756
        %v2758 = vrcp.pop %v2726
        %v2759 = vmul.f32 %v2726, %v2758
        %v2760 = vsub.f32 1.0, %v2759
        %v2761 = vmul.f32 %v2758, %v2760
        %v2762 = vadd.f32 %v2758, %v2761
        %vm2763 = vweird.f32 %v2726
        %vm2764 = vweird.f32 %v2758
        %vm2765 = vmor %vm2763, %vm2764
        %v2766 = vsel %vm2765, %v2758, %v2762
        %v2767 = vand.u32 2147483647, %v2726
        %vm2768 = vcmp.eq.f32.partialorder %v2767, 8.507059e+37
        %v2769 = vand.u32 %v2726, 2147483648
        %v2770 = vor.u32 1.1754944e-38, %v2769
        %v2771 = vsel %vm2768, %v2770, %v2766
        %v2772 = vmul.f32 1.0, %v2771
        %v2773 = vrcp.pop %v2727
        %v2774 = vmul.f32 %v2727, %v2773
        %v2775 = vsub.f32 1.0, %v2774
        %v2776 = vmul.f32 %v2773, %v2775
        %v2777 = vadd.f32 %v2773, %v2776
        %vm2778 = vweird.f32 %v2727
        %vm2779 = vweird.f32 %v2773
        %vm2780 = vmor %vm2778, %vm2779
        %v2781 = vsel %vm2780, %v2773, %v2777
        %v2782 = vand.u32 2147483647, %v2727
        %vm2783 = vcmp.eq.f32.partialorder %v2782, 8.507059e+37
        %v2784 = vand.u32 %v2727, 2147483648
        %v2785 = vor.u32 1.1754944e-38, %v2784
        %v2786 = vsel %vm2783, %v2785, %v2781
        %v2787 = vmul.f32 1.0, %v2786
        %v2788 = vtanh.pop %v2708
        %v2789 = vtanh.pop %v2709
        %v2790 = vtanh.pop %v2710
        %v2791 = vtanh.pop %v2711
        %v2796 = vrot.slane %v2626, 7
        %v2797 = vrot.slane %v2627, 7
        %v2798 = vrot.slane %v2628, 7
        %v2799 = vrot.slane %v2629, 7
        %v2804 = vmul.f32 %v2742, %v2796
        %v2805 = vmul.f32 %v2757, %v2797
        %v2806 = vmul.f32 %v2772, %v2798
        %v2807 = vmul.f32 %v2787, %v2799
        %2812 = vrot.lane.b32.xlu0 %v2788, 64
        %v2813 = vpop.permute.xlu0 %2812
        %2814 = vrot.lane.b32.xlu0 %v2789, 64
        %v2815 = vpop.permute.xlu0 %2814
        %2816 = vrot.lane.b32.xlu0 %v2790, 64
        %v2817 = vpop.permute.xlu0 %2816
        %2818 = vrot.lane.b32.xlu0 %v2791, 64
        %v2819 = vpop.permute.xlu0 %2818
        %v2824 = vmul.f32 %v2742, %v2813
        %v2825 = vmul.f32 %v2757, %v2815
        %v2826 = vmul.f32 %v2772, %v2817
        %v2827 = vmul.f32 %v2787, %v2819
        %2832 = vrot.lane.b32.xlu0 %v2824, 96
        %v2833 = vpop.permute.xlu0 %2832
        %2834 = vrot.lane.b32.xlu0 %v2825, 96
        %v2835 = vpop.permute.xlu0 %2834
        %2836 = vrot.lane.b32.xlu0 %v2826, 96
        %v2837 = vpop.permute.xlu0 %2836
        %2838 = vrot.lane.b32.xlu0 %v2827, 96
        %v2839 = vpop.permute.xlu0 %2838
        %v2844 = vadd.f32 %v2804, %v2833
        %v2845 = vadd.f32 %v2805, %v2835
        %v2846 = vadd.f32 %v2806, %v2837
        %v2847 = vadd.f32 %v2807, %v2839
        %v2848 = vtanh.pop %v2844
        %v2849 = vtanh.pop %v2845
        %v2850 = vtanh.pop %v2846
        %v2851 = vtanh.pop %v2847
        %2856 = vrot.lane.b32.xlu0 %v2848, 64
        %v2857 = vpop.permute.xlu0 %2856
        %2858 = vrot.lane.b32.xlu0 %v2849, 64
        %v2859 = vpop.permute.xlu0 %2858
        %2860 = vrot.lane.b32.xlu0 %v2850, 64
        %v2861 = vpop.permute.xlu0 %2860
        %2862 = vrot.lane.b32.xlu0 %v2851, 64
        %v2863 = vpop.permute.xlu0 %2862
        %v2868 = vmul.f32 %v2742, %v2857
        %v2869 = vmul.f32 %v2757, %v2859
        %v2870 = vmul.f32 %v2772, %v2861
        %v2871 = vmul.f32 %v2787, %v2863
        %v2876 = vrot.slane %v2869, 7
        %v2877 = vsel %vm765, %v2876, %v2868
        %v2878 = vrot.slane %v2870, 6
        %v2879 = vsel %vm768, %v2878, %v2877
        %v2880 = vrot.slane %v2871, 5
        %v2881 = vsel %vm775, %v2880, %v2879
        %2882 = vrot.lane.b32.xlu0 %v2881, 64
        %v2883 = vpop.permute.xlu0 %2882
        %s2885 = scalar_lea.vmem %s453, 36 [#allocation7]
        %2886 = vst.msk [vmem:[%s2885 - $0x1] sm:$0x1e] %vm996, %v2883
        %v2887 = vrot.slane %v2868, 1
        %v2888 = vsel %vm762, %v2869, %v2887
        %v2889 = vsel %vm776, %v2869, %v2888
        %v2890 = vrot.slane %v2870, 7
        %v2891 = vsel %vm765, %v2890, %v2889
        %v2892 = vsel %vm779, %v2890, %v2891
        %v2893 = vrot.slane %v2871, 6
        %v2894 = vsel %vm768, %v2893, %v2892
        %v2895 = vsel %vm782, %v2893, %v2894
        %2896 = vrot.lane.b32.xlu0 %v2895, 96
        %v2897 = vpop.permute.xlu0 %2896
        %2899 = vst.msk [vmem:[%s446 + $0x8] sm:$0xf] %vm1010, %v2897
        %v2900 = vsel %vm765, %v2890, %v2888
        %v2901 = vsel %vm768, %v2893, %v2900
        %2902 = vrot.lane.b32.xlu0 %v2901, 64
        %v2903 = vpop.permute.xlu0 %2902
        %v2904 = vsel %vm565, %v2903, 0
        %2906 = vmatpush.msra.mxu0 0.0
        %2907 = vmatpush.msra.mxu0 0.0
        %2908 = vmatpush.msra.mxu0 0.0
        %2909 = vmatpush.msra.mxu0 0.0
        %2910 = vmatpush.msra.mxu0 0.0
        %2911 = vmatpush.msra.mxu0 0.0
        %2912 = vmatpush.msra.mxu0 0.0
        %2913 = vmatpush.msra.mxu0 0.0
        %2914 = vmatpush.msra.mxu0 0.0
        %2915 = vmatpush.msra.mxu0 0.0
        %2916 = vmatpush.msra.mxu0 0.0
        %2917 = vmatpush.msra.mxu0 0.0
        %2918 = vmatpush.msra.mxu0 %v562
        %2919 = vmatpush.msra.mxu0 %v561
        %2920 = vmatpush.msra.mxu0 %v560
        %2921 = vmatpush.msra.mxu0 %v559
        %2922 = vmatmul.f32.gmra.mxu0 %v2904
        %v2923 = vpop.f32.mrf.mxu0
        %v2924 = vadd.f32 0.0, %v2923
        %2925 = vdwg.mxu0
        %v2927 = vrot.slane %v2924, 6
        %v2928 = vrot.slane %v2924, 7
        %v2929 = vrot.slane %v2924, 1
        %v2934 = vadd.f32 %v539, %v2927
        %v2935 = vadd.f32 %v545, %v2928
        %v2936 = vadd.f32 %v551, %v2924
        %v2937 = vadd.f32 %v557, %v2929
        %v2938 = vxor.u32 %v2934, 2147483648
        %v2939 = vxor.u32 %v2935, 2147483648
        %v2940 = vxor.u32 %v2936, 2147483648
        %v2941 = vxor.u32 %v2937, 2147483648
        %v2942 = vmul.f32 %v2938, 1.442695
        %v2943 = vpow.pop %v2942
        %v2944 = vmul.f32 %v2939, 1.442695
        %v2945 = vpow.pop %v2944
        %v2946 = vmul.f32 %v2940, 1.442695
        %v2947 = vpow.pop %v2946
        %v2948 = vmul.f32 %v2941, 1.442695
        %v2949 = vpow.pop %v2948
        %v2950 = vadd.f32 %v2943, 1.0
        %v2951 = vadd.f32 %v2945, 1.0
        %v2952 = vadd.f32 %v2947, 1.0
        %v2953 = vadd.f32 %v2949, 1.0
        %v2954 = vrcp.pop %v2950
        %v2955 = vmul.f32 %v2950, %v2954
        %v2956 = vsub.f32 1.0, %v2955
        %v2957 = vmul.f32 %v2954, %v2956
        %v2958 = vadd.f32 %v2954, %v2957
        %vm2959 = vweird.f32 %v2950
        %vm2960 = vweird.f32 %v2954
        %vm2961 = vmor %vm2959, %vm2960
        %v2962 = vsel %vm2961, %v2954, %v2958
        %v2963 = vand.u32 2147483647, %v2950
        %vm2964 = vcmp.eq.f32.partialorder %v2963, 8.507059e+37
        %v2965 = vand.u32 %v2950, 2147483648
        %v2966 = vor.u32 1.1754944e-38, %v2965
        %v2967 = vsel %vm2964, %v2966, %v2962
        %v2968 = vmul.f32 1.0, %v2967
        %v2969 = vrcp.pop %v2951
        %v2970 = vmul.f32 %v2951, %v2969
        %v2971 = vsub.f32 1.0, %v2970
        %v2972 = vmul.f32 %v2969, %v2971
        %v2973 = vadd.f32 %v2969, %v2972
        %vm2974 = vweird.f32 %v2951
        %vm2975 = vweird.f32 %v2969
        %vm2976 = vmor %vm2974, %vm2975
        %v2977 = vsel %vm2976, %v2969, %v2973
        %v2978 = vand.u32 2147483647, %v2951
        %vm2979 = vcmp.eq.f32.partialorder %v2978, 8.507059e+37
        %v2980 = vand.u32 %v2951, 2147483648
        %v2981 = vor.u32 1.1754944e-38, %v2980
        %v2982 = vsel %vm2979, %v2981, %v2977
        %v2983 = vmul.f32 1.0, %v2982
        %v2984 = vrcp.pop %v2952
        %v2985 = vmul.f32 %v2952, %v2984
        %v2986 = vsub.f32 1.0, %v2985
        %v2987 = vmul.f32 %v2984, %v2986
        %v2988 = vadd.f32 %v2984, %v2987
        %vm2989 = vweird.f32 %v2952
        %vm2990 = vweird.f32 %v2984
        %vm2991 = vmor %vm2989, %vm2990
        %v2992 = vsel %vm2991, %v2984, %v2988
        %v2993 = vand.u32 2147483647, %v2952
        %vm2994 = vcmp.eq.f32.partialorder %v2993, 8.507059e+37
        %v2995 = vand.u32 %v2952, 2147483648
        %v2996 = vor.u32 1.1754944e-38, %v2995
        %v2997 = vsel %vm2994, %v2996, %v2992
        %v2998 = vmul.f32 1.0, %v2997
        %v2999 = vrcp.pop %v2953
        %v3000 = vmul.f32 %v2953, %v2999
        %v3001 = vsub.f32 1.0, %v3000
        %v3002 = vmul.f32 %v2999, %v3001
        %v3003 = vadd.f32 %v2999, %v3002
        %vm3004 = vweird.f32 %v2953
        %vm3005 = vweird.f32 %v2999
        %vm3006 = vmor %vm3004, %vm3005
        %v3007 = vsel %vm3006, %v2999, %v3003
        %v3008 = vand.u32 2147483647, %v2953
        %vm3009 = vcmp.eq.f32.partialorder %v3008, 8.507059e+37
        %v3010 = vand.u32 %v2953, 2147483648
        %v3011 = vor.u32 1.1754944e-38, %v3010
        %v3012 = vsel %vm3009, %v3011, %v3007
        %v3013 = vmul.f32 1.0, %v3012
        %v3014 = vtanh.pop %v2934
        %v3015 = vtanh.pop %v2935
        %v3016 = vtanh.pop %v2936
        %v3017 = vtanh.pop %v2937
        %v3022 = vrot.slane %v2844, 7
        %v3023 = vrot.slane %v2845, 7
        %v3024 = vrot.slane %v2846, 7
        %v3025 = vrot.slane %v2847, 7
        %v3030 = vmul.f32 %v2968, %v3022
        %v3031 = vmul.f32 %v2983, %v3023
        %v3032 = vmul.f32 %v2998, %v3024
        %v3033 = vmul.f32 %v3013, %v3025
        %3038 = vrot.lane.b32.xlu0 %v3014, 64
        %v3039 = vpop.permute.xlu0 %3038
        %3040 = vrot.lane.b32.xlu0 %v3015, 64
        %v3041 = vpop.permute.xlu0 %3040
        %3042 = vrot.lane.b32.xlu0 %v3016, 64
        %v3043 = vpop.permute.xlu0 %3042
        %3044 = vrot.lane.b32.xlu0 %v3017, 64
        %v3045 = vpop.permute.xlu0 %3044
        %v3050 = vmul.f32 %v2968, %v3039
        %v3051 = vmul.f32 %v2983, %v3041
        %v3052 = vmul.f32 %v2998, %v3043
        %v3053 = vmul.f32 %v3013, %v3045
        %3058 = vrot.lane.b32.xlu0 %v3050, 96
        %v3059 = vpop.permute.xlu0 %3058
        %3060 = vrot.lane.b32.xlu0 %v3051, 96
        %v3061 = vpop.permute.xlu0 %3060
        %3062 = vrot.lane.b32.xlu0 %v3052, 96
        %v3063 = vpop.permute.xlu0 %3062
        %3064 = vrot.lane.b32.xlu0 %v3053, 96
        %v3065 = vpop.permute.xlu0 %3064
        %v3070 = vadd.f32 %v3030, %v3059
        %v3071 = vadd.f32 %v3031, %v3061
        %v3072 = vadd.f32 %v3032, %v3063
        %v3073 = vadd.f32 %v3033, %v3065
        %v3074 = vtanh.pop %v3070
        %v3075 = vtanh.pop %v3071
        %v3076 = vtanh.pop %v3072
        %v3077 = vtanh.pop %v3073
        %3082 = vrot.lane.b32.xlu0 %v3074, 64
        %v3083 = vpop.permute.xlu0 %3082
        %3084 = vrot.lane.b32.xlu0 %v3075, 64
        %v3085 = vpop.permute.xlu0 %3084
        %3086 = vrot.lane.b32.xlu0 %v3076, 64
        %v3087 = vpop.permute.xlu0 %3086
        %3088 = vrot.lane.b32.xlu0 %v3077, 64
        %v3089 = vpop.permute.xlu0 %3088
        %v3094 = vmul.f32 %v2968, %v3083
        %v3095 = vmul.f32 %v2983, %v3085
        %v3096 = vmul.f32 %v2998, %v3087
        %v3097 = vmul.f32 %v3013, %v3089
        %v3102 = vrot.slane %v3095, 7
        %v3103 = vsel %vm768, %v3102, %v3094
        %v3104 = vrot.slane %v3096, 6
        %v3105 = vsel %vm775, %v3104, %v3103
        %v3106 = vrot.slane %v3097, 5
        %v3107 = vsel %vm776, %v3106, %v3105
        %3108 = vrot.lane.b32.xlu0 %v3107, 64
        %v3109 = vpop.permute.xlu0 %3108
        %s3111 = scalar_lea.vmem %s453, 40 [#allocation7]
        %3112 = vst.msk [vmem:[%s3111 - $0x2] sm:$0x3c] %vm1224, %v3109
        %v3113 = vrot.slane %v3094, 2
        %v3114 = vrot.slane %v3095, 1
        %v3115 = vsel %vm762, %v3114, %v3113
        %v3116 = vsel %vm776, %v3114, %v3115
        %v3117 = vsel %vm765, %v3096, %v3116
        %v3118 = vsel %vm779, %v3096, %v3117
        %v3119 = vrot.slane %v3097, 7
        %v3120 = vsel %vm768, %v3119, %v3118
        %v3121 = vsel %vm782, %v3119, %v3120
        %3123 = vst.msk [vmem:[%s446 + $0x8] sm:$0xf] %vm1236, %v3121
        %v3124 = vsel %vm765, %v3096, %v3115
        %v3125 = vsel %vm768, %v3119, %v3124
        %3126 = vrot.lane.b32.xlu0 %v3125, 64
        %v3127 = vpop.permute.xlu0 %3126
        %v3128 = vsel %vm565, %v3127, 0
        %3130 = vmatpush.msra.mxu0 0.0
        %3131 = vmatpush.msra.mxu0 0.0
        %3132 = vmatpush.msra.mxu0 0.0
        %3133 = vmatpush.msra.mxu0 0.0
        %3134 = vmatpush.msra.mxu0 0.0
        %3135 = vmatpush.msra.mxu0 0.0
        %3136 = vmatpush.msra.mxu0 0.0
        %3137 = vmatpush.msra.mxu0 0.0
        %3138 = vmatpush.msra.mxu0 0.0
        %3139 = vmatpush.msra.mxu0 0.0
        %3140 = vmatpush.msra.mxu0 0.0
        %3141 = vmatpush.msra.mxu0 0.0
        %3142 = vmatpush.msra.mxu0 %v562
        %3143 = vmatpush.msra.mxu0 %v561
        %3144 = vmatpush.msra.mxu0 %v560
        %3145 = vmatpush.msra.mxu0 %v559
        %3146 = vmatmul.f32.gmra.mxu0 %v3128
        %v3147 = vpop.f32.mrf.mxu0
        %v3148 = vadd.f32 0.0, %v3147
        %3149 = vdwg.mxu0
        %v3151 = vrot.slane %v3148, 5
        %v3152 = vrot.slane %v3148, 6
        %v3153 = vrot.slane %v3148, 7
        %v3158 = vadd.f32 %v539, %v3151
        %v3159 = vadd.f32 %v545, %v3152
        %v3160 = vadd.f32 %v551, %v3153
        %v3161 = vadd.f32 %v557, %v3148
        %v3162 = vxor.u32 %v3158, 2147483648
        %v3163 = vxor.u32 %v3159, 2147483648
        %v3164 = vxor.u32 %v3160, 2147483648
        %v3165 = vxor.u32 %v3161, 2147483648
        %v3166 = vmul.f32 %v3162, 1.442695
        %v3167 = vpow.pop %v3166
        %v3168 = vmul.f32 %v3163, 1.442695
        %v3169 = vpow.pop %v3168
        %v3170 = vmul.f32 %v3164, 1.442695
        %v3171 = vpow.pop %v3170
        %v3172 = vmul.f32 %v3165, 1.442695
        %v3173 = vpow.pop %v3172
        %v3174 = vadd.f32 %v3167, 1.0
        %v3175 = vadd.f32 %v3169, 1.0
        %v3176 = vadd.f32 %v3171, 1.0
        %v3177 = vadd.f32 %v3173, 1.0
        %v3178 = vrcp.pop %v3174
        %v3179 = vmul.f32 %v3174, %v3178
        %v3180 = vsub.f32 1.0, %v3179
        %v3181 = vmul.f32 %v3178, %v3180
        %v3182 = vadd.f32 %v3178, %v3181
        %vm3183 = vweird.f32 %v3174
        %vm3184 = vweird.f32 %v3178
        %vm3185 = vmor %vm3183, %vm3184
        %v3186 = vsel %vm3185, %v3178, %v3182
        %v3187 = vand.u32 2147483647, %v3174
        %vm3188 = vcmp.eq.f32.partialorder %v3187, 8.507059e+37
        %v3189 = vand.u32 %v3174, 2147483648
        %v3190 = vor.u32 1.1754944e-38, %v3189
        %v3191 = vsel %vm3188, %v3190, %v3186
        %v3192 = vmul.f32 1.0, %v3191
        %v3193 = vrcp.pop %v3175
        %v3194 = vmul.f32 %v3175, %v3193
        %v3195 = vsub.f32 1.0, %v3194
        %v3196 = vmul.f32 %v3193, %v3195
        %v3197 = vadd.f32 %v3193, %v3196
        %vm3198 = vweird.f32 %v3175
        %vm3199 = vweird.f32 %v3193
        %vm3200 = vmor %vm3198, %vm3199
        %v3201 = vsel %vm3200, %v3193, %v3197
        %v3202 = vand.u32 2147483647, %v3175
        %vm3203 = vcmp.eq.f32.partialorder %v3202, 8.507059e+37
        %v3204 = vand.u32 %v3175, 2147483648
        %v3205 = vor.u32 1.1754944e-38, %v3204
        %v3206 = vsel %vm3203, %v3205, %v3201
        %v3207 = vmul.f32 1.0, %v3206
        %v3208 = vrcp.pop %v3176
        %v3209 = vmul.f32 %v3176, %v3208
        %v3210 = vsub.f32 1.0, %v3209
        %v3211 = vmul.f32 %v3208, %v3210
        %v3212 = vadd.f32 %v3208, %v3211
        %vm3213 = vweird.f32 %v3176
        %vm3214 = vweird.f32 %v3208
        %vm3215 = vmor %vm3213, %vm3214
        %v3216 = vsel %vm3215, %v3208, %v3212
        %v3217 = vand.u32 2147483647, %v3176
        %vm3218 = vcmp.eq.f32.partialorder %v3217, 8.507059e+37
        %v3219 = vand.u32 %v3176, 2147483648
        %v3220 = vor.u32 1.1754944e-38, %v3219
        %v3221 = vsel %vm3218, %v3220, %v3216
        %v3222 = vmul.f32 1.0, %v3221
        %v3223 = vrcp.pop %v3177
        %v3224 = vmul.f32 %v3177, %v3223
        %v3225 = vsub.f32 1.0, %v3224
        %v3226 = vmul.f32 %v3223, %v3225
        %v3227 = vadd.f32 %v3223, %v3226
        %vm3228 = vweird.f32 %v3177
        %vm3229 = vweird.f32 %v3223
        %vm3230 = vmor %vm3228, %vm3229
        %v3231 = vsel %vm3230, %v3223, %v3227
        %v3232 = vand.u32 2147483647, %v3177
        %vm3233 = vcmp.eq.f32.partialorder %v3232, 8.507059e+37
        %v3234 = vand.u32 %v3177, 2147483648
        %v3235 = vor.u32 1.1754944e-38, %v3234
        %v3236 = vsel %vm3233, %v3235, %v3231
        %v3237 = vmul.f32 1.0, %v3236
        %v3238 = vtanh.pop %v3158
        %v3239 = vtanh.pop %v3159
        %v3240 = vtanh.pop %v3160
        %v3241 = vtanh.pop %v3161
        %v3246 = vrot.slane %v3070, 7
        %v3247 = vrot.slane %v3071, 7
        %v3248 = vrot.slane %v3072, 7
        %v3249 = vrot.slane %v3073, 7
        %v3254 = vmul.f32 %v3192, %v3246
        %v3255 = vmul.f32 %v3207, %v3247
        %v3256 = vmul.f32 %v3222, %v3248
        %v3257 = vmul.f32 %v3237, %v3249
        %3262 = vrot.lane.b32.xlu0 %v3238, 64
        %v3263 = vpop.permute.xlu0 %3262
        %3264 = vrot.lane.b32.xlu0 %v3239, 64
        %v3265 = vpop.permute.xlu0 %3264
        %3266 = vrot.lane.b32.xlu0 %v3240, 64
        %v3267 = vpop.permute.xlu0 %3266
        %3268 = vrot.lane.b32.xlu0 %v3241, 64
        %v3269 = vpop.permute.xlu0 %3268
        %v3274 = vmul.f32 %v3192, %v3263
        %v3275 = vmul.f32 %v3207, %v3265
        %v3276 = vmul.f32 %v3222, %v3267
        %v3277 = vmul.f32 %v3237, %v3269
        %3282 = vrot.lane.b32.xlu0 %v3274, 96
        %v3283 = vpop.permute.xlu0 %3282
        %3284 = vrot.lane.b32.xlu0 %v3275, 96
        %v3285 = vpop.permute.xlu0 %3284
        %3286 = vrot.lane.b32.xlu0 %v3276, 96
        %v3287 = vpop.permute.xlu0 %3286
        %3288 = vrot.lane.b32.xlu0 %v3277, 96
        %v3289 = vpop.permute.xlu0 %3288
        %v3294 = vadd.f32 %v3254, %v3283
        %v3295 = vadd.f32 %v3255, %v3285
        %v3296 = vadd.f32 %v3256, %v3287
        %v3297 = vadd.f32 %v3257, %v3289
        %v3298 = vtanh.pop %v3294
        %v3299 = vtanh.pop %v3295
        %v3300 = vtanh.pop %v3296
        %v3301 = vtanh.pop %v3297
        %3306 = vrot.lane.b32.xlu0 %v3298, 64
        %v3307 = vpop.permute.xlu0 %3306
        %3308 = vrot.lane.b32.xlu0 %v3299, 64
        %v3309 = vpop.permute.xlu0 %3308
        %3310 = vrot.lane.b32.xlu0 %v3300, 64
        %v3311 = vpop.permute.xlu0 %3310
        %3312 = vrot.lane.b32.xlu0 %v3301, 64
        %v3313 = vpop.permute.xlu0 %3312
        %v3318 = vmul.f32 %v3192, %v3307
        %v3319 = vmul.f32 %v3207, %v3309
        %v3320 = vmul.f32 %v3222, %v3311
        %v3321 = vmul.f32 %v3237, %v3313
        %v3326 = vrot.slane %v3319, 7
        %v3327 = vsel %vm775, %v3326, %v3318
        %v3328 = vrot.slane %v3320, 6
        %v3329 = vsel %vm776, %v3328, %v3327
        %v3330 = vrot.slane %v3321, 5
        %v3331 = vsel %vm779, %v3330, %v3329
        %3332 = vrot.lane.b32.xlu0 %v3331, 64
        %v3333 = vpop.permute.xlu0 %3332
        %s3335 = scalar_lea.vmem %s453, 44 [#allocation7]
        %3336 = vst.msk [vmem:[%s3335 - $0x3] sm:$0x78] %vm1450, %v3333
        %v3337 = vrot.slane %v3318, 3
        %v3338 = vrot.slane %v3319, 2
        %v3339 = vsel %vm762, %v3338, %v3337
        %v3340 = vsel %vm776, %v3338, %v3339
        %v3341 = vrot.slane %v3320, 1
        %v3342 = vsel %vm765, %v3341, %v3340
        %v3343 = vsel %vm779, %v3341, %v3342
        %v3344 = vsel %vm768, %v3321, %v3343
        %v3345 = vsel %vm782, %v3321, %v3344
        %3346 = vrot.lane.b32.xlu0 %v3345, 32
        %v3347 = vpop.permute.xlu0 %3346
        %3349 = vst.msk [vmem:[%s446 + $0x8] sm:$0xf] %vm1464, %v3347
        %v3350 = vsel %vm765, %v3341, %v3339
        %v3351 = vsel %vm768, %v3321, %v3350
        %3352 = vrot.lane.b32.xlu0 %v3351, 64
        %v3353 = vpop.permute.xlu0 %3352
        %v3354 = vsel %vm565, %v3353, 0
        %3356 = vmatpush.msra.mxu0 0.0
        %3357 = vmatpush.msra.mxu0 0.0
        %3358 = vmatpush.msra.mxu0 0.0
        %3359 = vmatpush.msra.mxu0 0.0
        %3360 = vmatpush.msra.mxu0 0.0
        %3361 = vmatpush.msra.mxu0 0.0
        %3362 = vmatpush.msra.mxu0 0.0
        %3363 = vmatpush.msra.mxu0 0.0
        %3364 = vmatpush.msra.mxu0 0.0
        %3365 = vmatpush.msra.mxu0 0.0
        %3366 = vmatpush.msra.mxu0 0.0
        %3367 = vmatpush.msra.mxu0 0.0
        %3368 = vmatpush.msra.mxu0 %v562
        %3369 = vmatpush.msra.mxu0 %v561
        %3370 = vmatpush.msra.mxu0 %v560
        %3371 = vmatpush.msra.mxu0 %v559
        %3372 = vmatmul.f32.gmra.mxu0 %v3354
        %v3373 = vpop.f32.mrf.mxu0
        %v3374 = vadd.f32 0.0, %v3373
        %3375 = vdwg.mxu0
        %v3377 = vrot.slane %v3374, 4
        %v3378 = vrot.slane %v3374, 5
        %v3379 = vrot.slane %v3374, 6
        %v3380 = vrot.slane %v3374, 7
        %v3385 = vadd.f32 %v539, %v3377
        %v3386 = vadd.f32 %v545, %v3378
        %v3387 = vadd.f32 %v551, %v3379
        %v3388 = vadd.f32 %v557, %v3380
        %v3389 = vxor.u32 %v3385, 2147483648
        %v3390 = vxor.u32 %v3386, 2147483648
        %v3391 = vxor.u32 %v3387, 2147483648
        %v3392 = vxor.u32 %v3388, 2147483648
        %v3393 = vmul.f32 %v3389, 1.442695
        %v3394 = vpow.pop %v3393
        %v3395 = vmul.f32 %v3390, 1.442695
        %v3396 = vpow.pop %v3395
        %v3397 = vmul.f32 %v3391, 1.442695
        %v3398 = vpow.pop %v3397
        %v3399 = vmul.f32 %v3392, 1.442695
        %v3400 = vpow.pop %v3399
        %v3401 = vadd.f32 %v3394, 1.0
        %v3402 = vadd.f32 %v3396, 1.0
        %v3403 = vadd.f32 %v3398, 1.0
        %v3404 = vadd.f32 %v3400, 1.0
        %v3405 = vrcp.pop %v3401
        %v3406 = vmul.f32 %v3401, %v3405
        %v3407 = vsub.f32 1.0, %v3406
        %v3408 = vmul.f32 %v3405, %v3407
        %v3409 = vadd.f32 %v3405, %v3408
        %vm3410 = vweird.f32 %v3401
        %vm3411 = vweird.f32 %v3405
        %vm3412 = vmor %vm3410, %vm3411
        %v3413 = vsel %vm3412, %v3405, %v3409
        %v3414 = vand.u32 2147483647, %v3401
        %vm3415 = vcmp.eq.f32.partialorder %v3414, 8.507059e+37
        %v3416 = vand.u32 %v3401, 2147483648
        %v3417 = vor.u32 1.1754944e-38, %v3416
        %v3418 = vsel %vm3415, %v3417, %v3413
        %v3419 = vmul.f32 1.0, %v3418
        %v3420 = vrcp.pop %v3402
        %v3421 = vmul.f32 %v3402, %v3420
        %v3422 = vsub.f32 1.0, %v3421
        %v3423 = vmul.f32 %v3420, %v3422
        %v3424 = vadd.f32 %v3420, %v3423
        %vm3425 = vweird.f32 %v3402
        %vm3426 = vweird.f32 %v3420
        %vm3427 = vmor %vm3425, %vm3426
        %v3428 = vsel %vm3427, %v3420, %v3424
        %v3429 = vand.u32 2147483647, %v3402
        %vm3430 = vcmp.eq.f32.partialorder %v3429, 8.507059e+37
        %v3431 = vand.u32 %v3402, 2147483648
        %v3432 = vor.u32 1.1754944e-38, %v3431
        %v3433 = vsel %vm3430, %v3432, %v3428
        %v3434 = vmul.f32 1.0, %v3433
        %v3435 = vrcp.pop %v3403
        %v3436 = vmul.f32 %v3403, %v3435
        %v3437 = vsub.f32 1.0, %v3436
        %v3438 = vmul.f32 %v3435, %v3437
        %v3439 = vadd.f32 %v3435, %v3438
        %vm3440 = vweird.f32 %v3403
        %vm3441 = vweird.f32 %v3435
        %vm3442 = vmor %vm3440, %vm3441
        %v3443 = vsel %vm3442, %v3435, %v3439
        %v3444 = vand.u32 2147483647, %v3403
        %vm3445 = vcmp.eq.f32.partialorder %v3444, 8.507059e+37
        %v3446 = vand.u32 %v3403, 2147483648
        %v3447 = vor.u32 1.1754944e-38, %v3446
        %v3448 = vsel %vm3445, %v3447, %v3443
        %v3449 = vmul.f32 1.0, %v3448
        %v3450 = vrcp.pop %v3404
        %v3451 = vmul.f32 %v3404, %v3450
        %v3452 = vsub.f32 1.0, %v3451
        %v3453 = vmul.f32 %v3450, %v3452
        %v3454 = vadd.f32 %v3450, %v3453
        %vm3455 = vweird.f32 %v3404
        %vm3456 = vweird.f32 %v3450
        %vm3457 = vmor %vm3455, %vm3456
        %v3458 = vsel %vm3457, %v3450, %v3454
        %v3459 = vand.u32 2147483647, %v3404
        %vm3460 = vcmp.eq.f32.partialorder %v3459, 8.507059e+37
        %v3461 = vand.u32 %v3404, 2147483648
        %v3462 = vor.u32 1.1754944e-38, %v3461
        %v3463 = vsel %vm3460, %v3462, %v3458
        %v3464 = vmul.f32 1.0, %v3463
        %v3465 = vtanh.pop %v3385
        %v3466 = vtanh.pop %v3386
        %v3467 = vtanh.pop %v3387
        %v3468 = vtanh.pop %v3388
        %v3473 = vrot.slane %v3294, 7
        %v3474 = vrot.slane %v3295, 7
        %v3475 = vrot.slane %v3296, 7
        %v3476 = vrot.slane %v3297, 7
        %v3481 = vmul.f32 %v3419, %v3473
        %v3482 = vmul.f32 %v3434, %v3474
        %v3483 = vmul.f32 %v3449, %v3475
        %v3484 = vmul.f32 %v3464, %v3476
        %3489 = vrot.lane.b32.xlu0 %v3465, 64
        %v3490 = vpop.permute.xlu0 %3489
        %3491 = vrot.lane.b32.xlu0 %v3466, 64
        %v3492 = vpop.permute.xlu0 %3491
        %3493 = vrot.lane.b32.xlu0 %v3467, 64
        %v3494 = vpop.permute.xlu0 %3493
        %3495 = vrot.lane.b32.xlu0 %v3468, 64
        %v3496 = vpop.permute.xlu0 %3495
        %v3501 = vmul.f32 %v3419, %v3490
        %v3502 = vmul.f32 %v3434, %v3492
        %v3503 = vmul.f32 %v3449, %v3494
        %v3504 = vmul.f32 %v3464, %v3496
        %3509 = vrot.lane.b32.xlu0 %v3501, 96
        %v3510 = vpop.permute.xlu0 %3509
        %3511 = vrot.lane.b32.xlu0 %v3502, 96
        %v3512 = vpop.permute.xlu0 %3511
        %3513 = vrot.lane.b32.xlu0 %v3503, 96
        %v3514 = vpop.permute.xlu0 %3513
        %3515 = vrot.lane.b32.xlu0 %v3504, 96
        %v3516 = vpop.permute.xlu0 %3515
        %v3521 = vadd.f32 %v3481, %v3510
        %v3522 = vadd.f32 %v3482, %v3512
        %v3523 = vadd.f32 %v3483, %v3514
        %v3524 = vadd.f32 %v3484, %v3516
        %v3525 = vtanh.pop %v3521
        %v3526 = vtanh.pop %v3522
        %v3527 = vtanh.pop %v3523
        %v3528 = vtanh.pop %v3524
        %3533 = vrot.lane.b32.xlu0 %v3525, 64
        %v3534 = vpop.permute.xlu0 %3533
        %3535 = vrot.lane.b32.xlu0 %v3526, 64
        %v3536 = vpop.permute.xlu0 %3535
        %3537 = vrot.lane.b32.xlu0 %v3527, 64
        %v3538 = vpop.permute.xlu0 %3537
        %3539 = vrot.lane.b32.xlu0 %v3528, 64
        %v3540 = vpop.permute.xlu0 %3539
        %v3545 = vmul.f32 %v3419, %v3534
        %v3546 = vmul.f32 %v3434, %v3536
        %v3547 = vmul.f32 %v3449, %v3538
        %v3548 = vmul.f32 %v3464, %v3540
        %v3553 = vrot.slane %v3546, 7
        %v3554 = vsel %vm776, %v3553, %v3545
        %v3555 = vrot.slane %v3547, 6
        %v3556 = vsel %vm779, %v3555, %v3554
        %v3557 = vrot.slane %v3548, 5
        %v3558 = vsel %vm782, %v3557, %v3556
        %3559 = vrot.lane.b32.xlu0 %v3558, 64
        %v3560 = vpop.permute.xlu0 %3559
        %s3562 = scalar_lea.vmem %s453, 48 [#allocation7]
        %3563 = vst.msk [vmem:[%s3562 - $0x4] sm:$0xf0] %vm1679, %v3560
        %3564 = vst.sshfl [vmem:[#allocation1] sm:$0xff pattern:$0x75316420] %v3545
        %s3565 = scalar_lea.vmem [#allocation1], 1
        %v3566 = vld [vmem:[%s3565] ss:$2 sm:$0xff]
        %3567 = vst.sshfl [vmem:[#allocation1 + $0x10] sm:$0xff pattern:$0x75316420] %v3546
        %s3568 = scalar_lea.vmem [#allocation1], 17
        %v3569 = vld [vmem:[%s3568] ss:$2 sm:$0xff]
        %3570 = vst.sshfl [vmem:[#allocation1 + $0x20] sm:$0xff pattern:$0x75316420] %v3547
        %s3571 = scalar_lea.vmem [#allocation1], 33
        %v3572 = vld [vmem:[%s3571] ss:$2 sm:$0xff]
        %3573 = vst.sshfl [vmem:[#allocation1 + $0x30] sm:$0xff pattern:$0x75316420] %v3548
        %s3574 = scalar_lea.vmem [#allocation1], 49
        %v3575 = vld [vmem:[%s3574] ss:$2 sm:$0xff]
        %v3576 = vrot.slane %v3569, 7
        %v3577 = vsel %vm762, %v3576, %v3566
        %v3578 = vsel %vm776, %v3576, %v3577
        %v3579 = vrot.slane %v3572, 6
        %v3580 = vsel %vm765, %v3579, %v3578
        %v3581 = vsel %vm779, %v3579, %v3580
        %v3582 = vrot.slane %v3575, 5
        %v3583 = vsel %vm768, %v3582, %v3581
        %v3584 = vsel %vm782, %v3582, %v3583
        %3585 = vrot.lane.b32.xlu0 %v3584, 64
        %v3586 = vpop.permute.xlu0 %3585
        %3588 = vst.msk [vmem:[%s446 + $0xc] sm:$0xf] %vm773, %v3586
        %v3589 = vrot.slane %v3545, 4
        %v3590 = vrot.slane %v3546, 3
        %v3591 = vsel %vm762, %v3590, %v3589
        %v3592 = vrot.slane %v3547, 2
        %v3593 = vsel %vm765, %v3592, %v3591
        %v3594 = vrot.slane %v3548, 1
        %v3595 = vsel %vm768, %v3594, %v3593
        %3596 = vrot.lane.b32.xlu0 %v3595, 64
        %v3597 = vpop.permute.xlu0 %3596
        %v3598 = vsel %vm565, %v3597, 0
        %3600 = vmatpush.msra.mxu0 0.0
        %3601 = vmatpush.msra.mxu0 0.0
        %3602 = vmatpush.msra.mxu0 0.0
        %3603 = vmatpush.msra.mxu0 0.0
        %3604 = vmatpush.msra.mxu0 0.0
        %3605 = vmatpush.msra.mxu0 0.0
        %3606 = vmatpush.msra.mxu0 0.0
        %3607 = vmatpush.msra.mxu0 0.0
        %3608 = vmatpush.msra.mxu0 0.0
        %3609 = vmatpush.msra.mxu0 0.0
        %3610 = vmatpush.msra.mxu0 0.0
        %3611 = vmatpush.msra.mxu0 0.0
        %3612 = vmatpush.msra.mxu0 %v562
        %3613 = vmatpush.msra.mxu0 %v561
        %3614 = vmatpush.msra.mxu0 %v560
        %3615 = vmatpush.msra.mxu0 %v559
        %3616 = vmatmul.f32.gmra.mxu0 %v3598
        %v3617 = vpop.f32.mrf.mxu0
        %v3618 = vadd.f32 0.0, %v3617
        %3619 = vdwg.mxu0
        %v3621 = vrot.slane %v3618, 3
        %v3622 = vrot.slane %v3618, 4
        %v3623 = vrot.slane %v3618, 5
        %v3624 = vrot.slane %v3618, 6
        %v3629 = vadd.f32 %v539, %v3621
        %v3630 = vadd.f32 %v545, %v3622
        %v3631 = vadd.f32 %v551, %v3623
        %v3632 = vadd.f32 %v557, %v3624
        %v3633 = vxor.u32 %v3629, 2147483648
        %v3634 = vxor.u32 %v3630, 2147483648
        %v3635 = vxor.u32 %v3631, 2147483648
        %v3636 = vxor.u32 %v3632, 2147483648
        %v3637 = vmul.f32 %v3633, 1.442695
        %v3638 = vpow.pop %v3637
        %v3639 = vmul.f32 %v3634, 1.442695
        %v3640 = vpow.pop %v3639
        %v3641 = vmul.f32 %v3635, 1.442695
        %v3642 = vpow.pop %v3641
        %v3643 = vmul.f32 %v3636, 1.442695
        %v3644 = vpow.pop %v3643
        %v3645 = vadd.f32 %v3638, 1.0
        %v3646 = vadd.f32 %v3640, 1.0
        %v3647 = vadd.f32 %v3642, 1.0
        %v3648 = vadd.f32 %v3644, 1.0
        %v3649 = vrcp.pop %v3645
        %v3650 = vmul.f32 %v3645, %v3649
        %v3651 = vsub.f32 1.0, %v3650
        %v3652 = vmul.f32 %v3649, %v3651
        %v3653 = vadd.f32 %v3649, %v3652
        %vm3654 = vweird.f32 %v3645
        %vm3655 = vweird.f32 %v3649
        %vm3656 = vmor %vm3654, %vm3655
        %v3657 = vsel %vm3656, %v3649, %v3653
        %v3658 = vand.u32 2147483647, %v3645
        %vm3659 = vcmp.eq.f32.partialorder %v3658, 8.507059e+37
        %v3660 = vand.u32 %v3645, 2147483648
        %v3661 = vor.u32 1.1754944e-38, %v3660
        %v3662 = vsel %vm3659, %v3661, %v3657
        %v3663 = vmul.f32 1.0, %v3662
        %v3664 = vrcp.pop %v3646
        %v3665 = vmul.f32 %v3646, %v3664
        %v3666 = vsub.f32 1.0, %v3665
        %v3667 = vmul.f32 %v3664, %v3666
        %v3668 = vadd.f32 %v3664, %v3667
        %vm3669 = vweird.f32 %v3646
        %vm3670 = vweird.f32 %v3664
        %vm3671 = vmor %vm3669, %vm3670
        %v3672 = vsel %vm3671, %v3664, %v3668
        %v3673 = vand.u32 2147483647, %v3646
        %vm3674 = vcmp.eq.f32.partialorder %v3673, 8.507059e+37
        %v3675 = vand.u32 %v3646, 2147483648
        %v3676 = vor.u32 1.1754944e-38, %v3675
        %v3677 = vsel %vm3674, %v3676, %v3672
        %v3678 = vmul.f32 1.0, %v3677
        %v3679 = vrcp.pop %v3647
        %v3680 = vmul.f32 %v3647, %v3679
        %v3681 = vsub.f32 1.0, %v3680
        %v3682 = vmul.f32 %v3679, %v3681
        %v3683 = vadd.f32 %v3679, %v3682
        %vm3684 = vweird.f32 %v3647
        %vm3685 = vweird.f32 %v3679
        %vm3686 = vmor %vm3684, %vm3685
        %v3687 = vsel %vm3686, %v3679, %v3683
        %v3688 = vand.u32 2147483647, %v3647
        %vm3689 = vcmp.eq.f32.partialorder %v3688, 8.507059e+37
        %v3690 = vand.u32 %v3647, 2147483648
        %v3691 = vor.u32 1.1754944e-38, %v3690
        %v3692 = vsel %vm3689, %v3691, %v3687
        %v3693 = vmul.f32 1.0, %v3692
        %v3694 = vrcp.pop %v3648
        %v3695 = vmul.f32 %v3648, %v3694
        %v3696 = vsub.f32 1.0, %v3695
        %v3697 = vmul.f32 %v3694, %v3696
        %v3698 = vadd.f32 %v3694, %v3697
        %vm3699 = vweird.f32 %v3648
        %vm3700 = vweird.f32 %v3694
        %vm3701 = vmor %vm3699, %vm3700
        %v3702 = vsel %vm3701, %v3694, %v3698
        %v3703 = vand.u32 2147483647, %v3648
        %vm3704 = vcmp.eq.f32.partialorder %v3703, 8.507059e+37
        %v3705 = vand.u32 %v3648, 2147483648
        %v3706 = vor.u32 1.1754944e-38, %v3705
        %v3707 = vsel %vm3704, %v3706, %v3702
        %v3708 = vmul.f32 1.0, %v3707
        %v3709 = vtanh.pop %v3629
        %v3710 = vtanh.pop %v3630
        %v3711 = vtanh.pop %v3631
        %v3712 = vtanh.pop %v3632
        %v3717 = vrot.slane %v3521, 7
        %v3718 = vrot.slane %v3522, 7
        %v3719 = vrot.slane %v3523, 7
        %v3720 = vrot.slane %v3524, 7
        %v3725 = vmul.f32 %v3663, %v3717
        %v3726 = vmul.f32 %v3678, %v3718
        %v3727 = vmul.f32 %v3693, %v3719
        %v3728 = vmul.f32 %v3708, %v3720
        %3733 = vrot.lane.b32.xlu0 %v3709, 64
        %v3734 = vpop.permute.xlu0 %3733
        %3735 = vrot.lane.b32.xlu0 %v3710, 64
        %v3736 = vpop.permute.xlu0 %3735
        %3737 = vrot.lane.b32.xlu0 %v3711, 64
        %v3738 = vpop.permute.xlu0 %3737
        %3739 = vrot.lane.b32.xlu0 %v3712, 64
        %v3740 = vpop.permute.xlu0 %3739
        %v3745 = vmul.f32 %v3663, %v3734
        %v3746 = vmul.f32 %v3678, %v3736
        %v3747 = vmul.f32 %v3693, %v3738
        %v3748 = vmul.f32 %v3708, %v3740
        %3753 = vrot.lane.b32.xlu0 %v3745, 96
        %v3754 = vpop.permute.xlu0 %3753
        %3755 = vrot.lane.b32.xlu0 %v3746, 96
        %v3756 = vpop.permute.xlu0 %3755
        %3757 = vrot.lane.b32.xlu0 %v3747, 96
        %v3758 = vpop.permute.xlu0 %3757
        %3759 = vrot.lane.b32.xlu0 %v3748, 96
        %v3760 = vpop.permute.xlu0 %3759
        %v3765 = vadd.f32 %v3725, %v3754
        %v3766 = vadd.f32 %v3726, %v3756
        %v3767 = vadd.f32 %v3727, %v3758
        %v3768 = vadd.f32 %v3728, %v3760
        %v3769 = vtanh.pop %v3765
        %v3770 = vtanh.pop %v3766
        %v3771 = vtanh.pop %v3767
        %v3772 = vtanh.pop %v3768
        %3777 = vrot.lane.b32.xlu0 %v3769, 64
        %v3778 = vpop.permute.xlu0 %3777
        %3779 = vrot.lane.b32.xlu0 %v3770, 64
        %v3780 = vpop.permute.xlu0 %3779
        %3781 = vrot.lane.b32.xlu0 %v3771, 64
        %v3782 = vpop.permute.xlu0 %3781
        %3783 = vrot.lane.b32.xlu0 %v3772, 64
        %v3784 = vpop.permute.xlu0 %3783
        %v3789 = vmul.f32 %v3663, %v3778
        %v3790 = vmul.f32 %v3678, %v3780
        %v3791 = vmul.f32 %v3693, %v3782
        %v3792 = vmul.f32 %v3708, %v3784
        %v3797 = vrot.slane %v3790, 7
        %v3798 = vsel %vm779, %v3797, %v3789
        %v3799 = vrot.slane %v3791, 6
        %v3800 = vsel %vm782, %v3799, %v3798
        %v3801 = vrot.slane %v3792, 5
        %3802 = vrot.lane.b32.xlu0 %v3800, 64
        %v3803 = vpop.permute.xlu0 %3802
        %3804 = vrot.lane.b32.xlu0 %v3801, 64
        %v3805 = vpop.permute.xlu0 %3804
        %s3808 = scalar_lea.vmem %s453, 52 [#allocation7]
        %3809 = vst.msk [vmem:[%s3808 - $0x5] sm:$0xe0] %vm1926, %v3803
        %3810 = vst.msk [vmem:[%s3808 + $0x3] sm:$0x1] %vm1928, %v3805
        %3811 = vst.sshfl [vmem:[#allocation1] sm:$0xff pattern:$0x75316420] %v3789
        %s3812 = scalar_lea.vmem [#allocation1], 1
        %v3813 = vld [vmem:[%s3812] ss:$2 sm:$0xff]
        %3814 = vst.sshfl [vmem:[#allocation1 + $0x10] sm:$0xff pattern:$0x75316420] %v3790
        %s3815 = scalar_lea.vmem [#allocation1], 17
        %v3816 = vld [vmem:[%s3815] ss:$2 sm:$0xff]
        %3817 = vst.sshfl [vmem:[#allocation1 + $0x20] sm:$0xff pattern:$0x75316420] %v3791
        %s3818 = scalar_lea.vmem [#allocation1], 33
        %v3819 = vld [vmem:[%s3818] ss:$2 sm:$0xff]
        %3820 = vst.sshfl [vmem:[#allocation1 + $0x30] sm:$0xff pattern:$0x75316420] %v3792
        %s3821 = scalar_lea.vmem [#allocation1], 49
        %v3822 = vld [vmem:[%s3821] ss:$2 sm:$0xff]
        %v3823 = vrot.slane %v3813, 1
        %v3824 = vsel %vm762, %v3816, %v3823
        %v3825 = vsel %vm776, %v3816, %v3824
        %v3826 = vrot.slane %v3819, 7
        %v3827 = vsel %vm765, %v3826, %v3825
        %v3828 = vsel %vm779, %v3826, %v3827
        %v3829 = vrot.slane %v3822, 6
        %v3830 = vsel %vm768, %v3829, %v3828
        %v3831 = vsel %vm782, %v3829, %v3830
        %3832 = vrot.lane.b32.xlu0 %v3831, 96
        %v3833 = vpop.permute.xlu0 %3832
        %3835 = vst.msk [vmem:[%s446 + $0xc] sm:$0xf] %vm1010, %v3833
        %v3836 = vrot.slane %v3789, 5
        %v3837 = vrot.slane %v3790, 4
        %v3838 = vsel %vm762, %v3837, %v3836
        %v3839 = vrot.slane %v3791, 3
        %v3840 = vsel %vm765, %v3839, %v3838
        %v3841 = vrot.slane %v3792, 2
        %v3842 = vsel %vm768, %v3841, %v3840
        %3843 = vrot.lane.b32.xlu0 %v3842, 64
        %v3844 = vpop.permute.xlu0 %3843
        %v3845 = vsel %vm565, %v3844, 0
        %3847 = vmatpush.msra.mxu0 0.0
        %3848 = vmatpush.msra.mxu0 0.0
        %3849 = vmatpush.msra.mxu0 0.0
        %3850 = vmatpush.msra.mxu0 0.0
        %3851 = vmatpush.msra.mxu0 0.0
        %3852 = vmatpush.msra.mxu0 0.0
        %3853 = vmatpush.msra.mxu0 0.0
        %3854 = vmatpush.msra.mxu0 0.0
        %3855 = vmatpush.msra.mxu0 0.0
        %3856 = vmatpush.msra.mxu0 0.0
        %3857 = vmatpush.msra.mxu0 0.0
        %3858 = vmatpush.msra.mxu0 0.0
        %3859 = vmatpush.msra.mxu0 %v562
        %3860 = vmatpush.msra.mxu0 %v561
        %3861 = vmatpush.msra.mxu0 %v560
        %3862 = vmatpush.msra.mxu0 %v559
        %3863 = vmatmul.f32.gmra.mxu0 %v3845
        %v3864 = vpop.f32.mrf.mxu0
        %v3865 = vadd.f32 0.0, %v3864
        %3866 = vdwg.mxu0
        %v3868 = vrot.slane %v3865, 2
        %v3869 = vrot.slane %v3865, 3
        %v3870 = vrot.slane %v3865, 4
        %v3871 = vrot.slane %v3865, 5
        %v3876 = vadd.f32 %v539, %v3868
        %v3877 = vadd.f32 %v545, %v3869
        %v3878 = vadd.f32 %v551, %v3870
        %v3879 = vadd.f32 %v557, %v3871
        %v3880 = vxor.u32 %v3876, 2147483648
        %v3881 = vxor.u32 %v3877, 2147483648
        %v3882 = vxor.u32 %v3878, 2147483648
        %v3883 = vxor.u32 %v3879, 2147483648
        %v3884 = vmul.f32 %v3880, 1.442695
        %v3885 = vpow.pop %v3884
        %v3886 = vmul.f32 %v3881, 1.442695
        %v3887 = vpow.pop %v3886
        %v3888 = vmul.f32 %v3882, 1.442695
        %v3889 = vpow.pop %v3888
        %v3890 = vmul.f32 %v3883, 1.442695
        %v3891 = vpow.pop %v3890
        %v3892 = vadd.f32 %v3885, 1.0
        %v3893 = vadd.f32 %v3887, 1.0
        %v3894 = vadd.f32 %v3889, 1.0
        %v3895 = vadd.f32 %v3891, 1.0
        %v3896 = vrcp.pop %v3892
        %v3897 = vmul.f32 %v3892, %v3896
        %v3898 = vsub.f32 1.0, %v3897
        %v3899 = vmul.f32 %v3896, %v3898
        %v3900 = vadd.f32 %v3896, %v3899
        %vm3901 = vweird.f32 %v3892
        %vm3902 = vweird.f32 %v3896
        %vm3903 = vmor %vm3901, %vm3902
        %v3904 = vsel %vm3903, %v3896, %v3900
        %v3905 = vand.u32 2147483647, %v3892
        %vm3906 = vcmp.eq.f32.partialorder %v3905, 8.507059e+37
        %v3907 = vand.u32 %v3892, 2147483648
        %v3908 = vor.u32 1.1754944e-38, %v3907
        %v3909 = vsel %vm3906, %v3908, %v3904
        %v3910 = vmul.f32 1.0, %v3909
        %v3911 = vrcp.pop %v3893
        %v3912 = vmul.f32 %v3893, %v3911
        %v3913 = vsub.f32 1.0, %v3912
        %v3914 = vmul.f32 %v3911, %v3913
        %v3915 = vadd.f32 %v3911, %v3914
        %vm3916 = vweird.f32 %v3893
        %vm3917 = vweird.f32 %v3911
        %vm3918 = vmor %vm3916, %vm3917
        %v3919 = vsel %vm3918, %v3911, %v3915
        %v3920 = vand.u32 2147483647, %v3893
        %vm3921 = vcmp.eq.f32.partialorder %v3920, 8.507059e+37
        %v3922 = vand.u32 %v3893, 2147483648
        %v3923 = vor.u32 1.1754944e-38, %v3922
        %v3924 = vsel %vm3921, %v3923, %v3919
        %v3925 = vmul.f32 1.0, %v3924
        %v3926 = vrcp.pop %v3894
        %v3927 = vmul.f32 %v3894, %v3926
        %v3928 = vsub.f32 1.0, %v3927
        %v3929 = vmul.f32 %v3926, %v3928
        %v3930 = vadd.f32 %v3926, %v3929
        %vm3931 = vweird.f32 %v3894
        %vm3932 = vweird.f32 %v3926
        %vm3933 = vmor %vm3931, %vm3932
        %v3934 = vsel %vm3933, %v3926, %v3930
        %v3935 = vand.u32 2147483647, %v3894
        %vm3936 = vcmp.eq.f32.partialorder %v3935, 8.507059e+37
        %v3937 = vand.u32 %v3894, 2147483648
        %v3938 = vor.u32 1.1754944e-38, %v3937
        %v3939 = vsel %vm3936, %v3938, %v3934
        %v3940 = vmul.f32 1.0, %v3939
        %v3941 = vrcp.pop %v3895
        %v3942 = vmul.f32 %v3895, %v3941
        %v3943 = vsub.f32 1.0, %v3942
        %v3944 = vmul.f32 %v3941, %v3943
        %v3945 = vadd.f32 %v3941, %v3944
        %vm3946 = vweird.f32 %v3895
        %vm3947 = vweird.f32 %v3941
        %vm3948 = vmor %vm3946, %vm3947
        %v3949 = vsel %vm3948, %v3941, %v3945
        %v3950 = vand.u32 2147483647, %v3895
        %vm3951 = vcmp.eq.f32.partialorder %v3950, 8.507059e+37
        %v3952 = vand.u32 %v3895, 2147483648
        %v3953 = vor.u32 1.1754944e-38, %v3952
        %v3954 = vsel %vm3951, %v3953, %v3949
        %v3955 = vmul.f32 1.0, %v3954
        %v3956 = vtanh.pop %v3876
        %v3957 = vtanh.pop %v3877
        %v3958 = vtanh.pop %v3878
        %v3959 = vtanh.pop %v3879
        %v3964 = vrot.slane %v3765, 7
        %v3965 = vrot.slane %v3766, 7
        %v3966 = vrot.slane %v3767, 7
        %v3967 = vrot.slane %v3768, 7
        %v3972 = vmul.f32 %v3910, %v3964
        %v3973 = vmul.f32 %v3925, %v3965
        %v3974 = vmul.f32 %v3940, %v3966
        %v3975 = vmul.f32 %v3955, %v3967
        %3980 = vrot.lane.b32.xlu0 %v3956, 64
        %v3981 = vpop.permute.xlu0 %3980
        %3982 = vrot.lane.b32.xlu0 %v3957, 64
        %v3983 = vpop.permute.xlu0 %3982
        %3984 = vrot.lane.b32.xlu0 %v3958, 64
        %v3985 = vpop.permute.xlu0 %3984
        %3986 = vrot.lane.b32.xlu0 %v3959, 64
        %v3987 = vpop.permute.xlu0 %3986
        %v3992 = vmul.f32 %v3910, %v3981
        %v3993 = vmul.f32 %v3925, %v3983
        %v3994 = vmul.f32 %v3940, %v3985
        %v3995 = vmul.f32 %v3955, %v3987
        %4000 = vrot.lane.b32.xlu0 %v3992, 96
        %v4001 = vpop.permute.xlu0 %4000
        %4002 = vrot.lane.b32.xlu0 %v3993, 96
        %v4003 = vpop.permute.xlu0 %4002
        %4004 = vrot.lane.b32.xlu0 %v3994, 96
        %v4005 = vpop.permute.xlu0 %4004
        %4006 = vrot.lane.b32.xlu0 %v3995, 96
        %v4007 = vpop.permute.xlu0 %4006
        %v4012 = vadd.f32 %v3972, %v4001
        %v4013 = vadd.f32 %v3973, %v4003
        %v4014 = vadd.f32 %v3974, %v4005
        %v4015 = vadd.f32 %v3975, %v4007
        %v4016 = vtanh.pop %v4012
        %v4017 = vtanh.pop %v4013
        %v4018 = vtanh.pop %v4014
        %v4019 = vtanh.pop %v4015
        %4024 = vrot.lane.b32.xlu0 %v4016, 64
        %v4025 = vpop.permute.xlu0 %4024
        %4026 = vrot.lane.b32.xlu0 %v4017, 64
        %v4027 = vpop.permute.xlu0 %4026
        %4028 = vrot.lane.b32.xlu0 %v4018, 64
        %v4029 = vpop.permute.xlu0 %4028
        %4030 = vrot.lane.b32.xlu0 %v4019, 64
        %v4031 = vpop.permute.xlu0 %4030
        %v4036 = vmul.f32 %v3910, %v4025
        %v4037 = vmul.f32 %v3925, %v4027
        %v4038 = vmul.f32 %v3940, %v4029
        %v4039 = vmul.f32 %v3955, %v4031
        %v4044 = vrot.slane %v4037, 7
        %v4045 = vsel %vm782, %v4044, %v4036
        %v4046 = vrot.slane %v4038, 6
        %v4047 = vrot.slane %v4039, 5
        %v4048 = vsel %vm762, %v4047, %v4046
        %4049 = vrot.lane.b32.xlu0 %v4045, 64
        %v4050 = vpop.permute.xlu0 %4049
        %4051 = vrot.lane.b32.xlu0 %v4048, 64
        %v4052 = vpop.permute.xlu0 %4051
        %s4055 = scalar_lea.vmem %s453, 56 [#allocation7]
        %4056 = vst.msk [vmem:[%s4055 - $0x6] sm:$0xc0] %vm2175, %v4050
        %4057 = vst.msk [vmem:[%s4055 + $0x2] sm:$0x3] %vm2177, %v4052
        %4058 = vst.sshfl [vmem:[#allocation1] sm:$0xff pattern:$0x75316420] %v4036
        %s4059 = scalar_lea.vmem [#allocation1], 1
        %v4060 = vld [vmem:[%s4059] ss:$2 sm:$0xff]
        %4061 = vst.sshfl [vmem:[#allocation1 + $0x10] sm:$0xff pattern:$0x75316420] %v4037
        %s4062 = scalar_lea.vmem [#allocation1], 17
        %v4063 = vld [vmem:[%s4062] ss:$2 sm:$0xff]
        %4064 = vst.sshfl [vmem:[#allocation1 + $0x20] sm:$0xff pattern:$0x75316420] %v4038
        %s4065 = scalar_lea.vmem [#allocation1], 33
        %v4066 = vld [vmem:[%s4065] ss:$2 sm:$0xff]
        %4067 = vst.sshfl [vmem:[#allocation1 + $0x30] sm:$0xff pattern:$0x75316420] %v4039
        %s4068 = scalar_lea.vmem [#allocation1], 49
        %v4069 = vld [vmem:[%s4068] ss:$2 sm:$0xff]
        %v4070 = vrot.slane %v4060, 2
        %v4071 = vrot.slane %v4063, 1
        %v4072 = vsel %vm762, %v4071, %v4070
        %v4073 = vsel %vm776, %v4071, %v4072
        %v4074 = vsel %vm765, %v4066, %v4073
        %v4075 = vsel %vm779, %v4066, %v4074
        %v4076 = vrot.slane %v4069, 7
        %v4077 = vsel %vm768, %v4076, %v4075
        %v4078 = vsel %vm782, %v4076, %v4077
        %4080 = vst.msk [vmem:[%s446 + $0xc] sm:$0xf] %vm1236, %v4078
        %v4081 = vrot.slane %v4036, 6
        %v4082 = vrot.slane %v4037, 5
        %v4083 = vsel %vm762, %v4082, %v4081
        %v4084 = vrot.slane %v4038, 4
        %v4085 = vsel %vm765, %v4084, %v4083
        %v4086 = vrot.slane %v4039, 3
        %v4087 = vsel %vm768, %v4086, %v4085
        %4088 = vrot.lane.b32.xlu0 %v4087, 64
        %v4089 = vpop.permute.xlu0 %4088
        %v4090 = vsel %vm565, %v4089, 0
        %4092 = vmatpush.msra.mxu0 0.0
        %4093 = vmatpush.msra.mxu0 0.0
        %4094 = vmatpush.msra.mxu0 0.0
        %4095 = vmatpush.msra.mxu0 0.0
        %4096 = vmatpush.msra.mxu0 0.0
        %4097 = vmatpush.msra.mxu0 0.0
        %4098 = vmatpush.msra.mxu0 0.0
        %4099 = vmatpush.msra.mxu0 0.0
        %4100 = vmatpush.msra.mxu0 0.0
        %4101 = vmatpush.msra.mxu0 0.0
        %4102 = vmatpush.msra.mxu0 0.0
        %4103 = vmatpush.msra.mxu0 0.0
        %4104 = vmatpush.msra.mxu0 %v562
        %4105 = vmatpush.msra.mxu0 %v561
        %4106 = vmatpush.msra.mxu0 %v560
        %4107 = vmatpush.msra.mxu0 %v559
        %4108 = vmatmul.f32.gmra.mxu0 %v4090
        %v4109 = vpop.f32.mrf.mxu0
        %v4110 = vadd.f32 0.0, %v4109
        %4111 = vdwg.mxu0
        %v4113 = vrot.slane %v4110, 1
        %v4114 = vrot.slane %v4110, 2
        %v4115 = vrot.slane %v4110, 3
        %v4116 = vrot.slane %v4110, 4
        %v4121 = vadd.f32 %v539, %v4113
        %v4122 = vadd.f32 %v545, %v4114
        %v4123 = vadd.f32 %v551, %v4115
        %v4124 = vadd.f32 %v557, %v4116
        %v4125 = vxor.u32 %v4121, 2147483648
        %v4126 = vxor.u32 %v4122, 2147483648
        %v4127 = vxor.u32 %v4123, 2147483648
        %v4128 = vxor.u32 %v4124, 2147483648
        %v4129 = vmul.f32 %v4125, 1.442695
        %v4130 = vpow.pop %v4129
        %v4131 = vmul.f32 %v4126, 1.442695
        %v4132 = vpow.pop %v4131
        %v4133 = vmul.f32 %v4127, 1.442695
        %v4134 = vpow.pop %v4133
        %v4135 = vmul.f32 %v4128, 1.442695
        %v4136 = vpow.pop %v4135
        %v4137 = vadd.f32 %v4130, 1.0
        %v4138 = vadd.f32 %v4132, 1.0
        %v4139 = vadd.f32 %v4134, 1.0
        %v4140 = vadd.f32 %v4136, 1.0
        %v4141 = vrcp.pop %v4137
        %v4142 = vmul.f32 %v4137, %v4141
        %v4143 = vsub.f32 1.0, %v4142
        %v4144 = vmul.f32 %v4141, %v4143
        %v4145 = vadd.f32 %v4141, %v4144
        %vm4146 = vweird.f32 %v4137
        %vm4147 = vweird.f32 %v4141
        %vm4148 = vmor %vm4146, %vm4147
        %v4149 = vsel %vm4148, %v4141, %v4145
        %v4150 = vand.u32 2147483647, %v4137
        %vm4151 = vcmp.eq.f32.partialorder %v4150, 8.507059e+37
        %v4152 = vand.u32 %v4137, 2147483648
        %v4153 = vor.u32 1.1754944e-38, %v4152
        %v4154 = vsel %vm4151, %v4153, %v4149
        %v4155 = vmul.f32 1.0, %v4154
        %v4156 = vrcp.pop %v4138
        %v4157 = vmul.f32 %v4138, %v4156
        %v4158 = vsub.f32 1.0, %v4157
        %v4159 = vmul.f32 %v4156, %v4158
        %v4160 = vadd.f32 %v4156, %v4159
        %vm4161 = vweird.f32 %v4138
        %vm4162 = vweird.f32 %v4156
        %vm4163 = vmor %vm4161, %vm4162
        %v4164 = vsel %vm4163, %v4156, %v4160
        %v4165 = vand.u32 2147483647, %v4138
        %vm4166 = vcmp.eq.f32.partialorder %v4165, 8.507059e+37
        %v4167 = vand.u32 %v4138, 2147483648
        %v4168 = vor.u32 1.1754944e-38, %v4167
        %v4169 = vsel %vm4166, %v4168, %v4164
        %v4170 = vmul.f32 1.0, %v4169
        %v4171 = vrcp.pop %v4139
        %v4172 = vmul.f32 %v4139, %v4171
        %v4173 = vsub.f32 1.0, %v4172
        %v4174 = vmul.f32 %v4171, %v4173
        %v4175 = vadd.f32 %v4171, %v4174
        %vm4176 = vweird.f32 %v4139
        %vm4177 = vweird.f32 %v4171
        %vm4178 = vmor %vm4176, %vm4177
        %v4179 = vsel %vm4178, %v4171, %v4175
        %v4180 = vand.u32 2147483647, %v4139
        %vm4181 = vcmp.eq.f32.partialorder %v4180, 8.507059e+37
        %v4182 = vand.u32 %v4139, 2147483648
        %v4183 = vor.u32 1.1754944e-38, %v4182
        %v4184 = vsel %vm4181, %v4183, %v4179
        %v4185 = vmul.f32 1.0, %v4184
        %v4186 = vrcp.pop %v4140
        %v4187 = vmul.f32 %v4140, %v4186
        %v4188 = vsub.f32 1.0, %v4187
        %v4189 = vmul.f32 %v4186, %v4188
        %v4190 = vadd.f32 %v4186, %v4189
        %vm4191 = vweird.f32 %v4140
        %vm4192 = vweird.f32 %v4186
        %vm4193 = vmor %vm4191, %vm4192
        %v4194 = vsel %vm4193, %v4186, %v4190
        %v4195 = vand.u32 2147483647, %v4140
        %vm4196 = vcmp.eq.f32.partialorder %v4195, 8.507059e+37
        %v4197 = vand.u32 %v4140, 2147483648
        %v4198 = vor.u32 1.1754944e-38, %v4197
        %v4199 = vsel %vm4196, %v4198, %v4194
        %v4200 = vmul.f32 1.0, %v4199
        %v4201 = vtanh.pop %v4121
        %v4202 = vtanh.pop %v4122
        %v4203 = vtanh.pop %v4123
        %v4204 = vtanh.pop %v4124
        %v4209 = vrot.slane %v4012, 7
        %v4210 = vrot.slane %v4013, 7
        %v4211 = vrot.slane %v4014, 7
        %v4212 = vrot.slane %v4015, 7
        %v4217 = vmul.f32 %v4155, %v4209
        %v4218 = vmul.f32 %v4170, %v4210
        %v4219 = vmul.f32 %v4185, %v4211
        %v4220 = vmul.f32 %v4200, %v4212
        %4225 = vrot.lane.b32.xlu0 %v4201, 64
        %v4226 = vpop.permute.xlu0 %4225
        %4227 = vrot.lane.b32.xlu0 %v4202, 64
        %v4228 = vpop.permute.xlu0 %4227
        %4229 = vrot.lane.b32.xlu0 %v4203, 64
        %v4230 = vpop.permute.xlu0 %4229
        %4231 = vrot.lane.b32.xlu0 %v4204, 64
        %v4232 = vpop.permute.xlu0 %4231
        %v4237 = vmul.f32 %v4155, %v4226
        %v4238 = vmul.f32 %v4170, %v4228
        %v4239 = vmul.f32 %v4185, %v4230
        %v4240 = vmul.f32 %v4200, %v4232
        %4245 = vrot.lane.b32.xlu0 %v4237, 96
        %v4246 = vpop.permute.xlu0 %4245
        %4247 = vrot.lane.b32.xlu0 %v4238, 96
        %v4248 = vpop.permute.xlu0 %4247
        %4249 = vrot.lane.b32.xlu0 %v4239, 96
        %v4250 = vpop.permute.xlu0 %4249
        %4251 = vrot.lane.b32.xlu0 %v4240, 96
        %v4252 = vpop.permute.xlu0 %4251
        %v4257 = vadd.f32 %v4217, %v4246
        %v4258 = vadd.f32 %v4218, %v4248
        %v4259 = vadd.f32 %v4219, %v4250
        %v4260 = vadd.f32 %v4220, %v4252
        %v4261 = vtanh.pop %v4257
        %v4262 = vtanh.pop %v4258
        %v4263 = vtanh.pop %v4259
        %v4264 = vtanh.pop %v4260
        %4269 = vrot.lane.b32.xlu0 %v4261, 64
        %v4270 = vpop.permute.xlu0 %4269
        %4271 = vrot.lane.b32.xlu0 %v4262, 64
        %v4272 = vpop.permute.xlu0 %4271
        %4273 = vrot.lane.b32.xlu0 %v4263, 64
        %v4274 = vpop.permute.xlu0 %4273
        %4275 = vrot.lane.b32.xlu0 %v4264, 64
        %v4276 = vpop.permute.xlu0 %4275
        %v4281 = vmul.f32 %v4155, %v4270
        %v4282 = vmul.f32 %v4170, %v4272
        %v4283 = vmul.f32 %v4185, %v4274
        %v4284 = vmul.f32 %v4200, %v4276
        %v4289 = vrot.slane %v4282, 7
        %v4290 = vrot.slane %v4283, 6
        %v4291 = vsel %vm762, %v4290, %v4289
        %v4292 = vrot.slane %v4284, 5
        %v4293 = vsel %vm765, %v4292, %v4291
        %4294 = vrot.lane.b32.xlu0 %v4281, 64
        %v4295 = vpop.permute.xlu0 %4294
        %4296 = vrot.lane.b32.xlu0 %v4293, 64
        %v4297 = vpop.permute.xlu0 %4296
        %s4300 = scalar_lea.vmem %s453, 60 [#allocation7]
        %4301 = vst.msk [vmem:[%s4300 - $0x7] sm:$0x80] %vm2422, %v4295
        %4302 = vst.msk [vmem:[%s4300 + $0x1] sm:$0x7] %vm2424, %v4297
        %4303 = vst.sshfl [vmem:[#allocation1] sm:$0xff pattern:$0x75316420] %v4281
        %s4304 = scalar_lea.vmem [#allocation1], 1
        %v4305 = vld [vmem:[%s4304] ss:$2 sm:$0xff]
        %4306 = vst.sshfl [vmem:[#allocation1 + $0x10] sm:$0xff pattern:$0x75316420] %v4282
        %s4307 = scalar_lea.vmem [#allocation1], 17
        %v4308 = vld [vmem:[%s4307] ss:$2 sm:$0xff]
        %4309 = vst.sshfl [vmem:[#allocation1 + $0x20] sm:$0xff pattern:$0x75316420] %v4283
        %s4310 = scalar_lea.vmem [#allocation1], 33
        %v4311 = vld [vmem:[%s4310] ss:$2 sm:$0xff]
        %4312 = vst.sshfl [vmem:[#allocation1 + $0x30] sm:$0xff pattern:$0x75316420] %v4284
        %s4313 = scalar_lea.vmem [#allocation1], 49
        %v4314 = vld [vmem:[%s4313] ss:$2 sm:$0xff]
        %v4315 = vrot.slane %v4305, 3
        %v4316 = vrot.slane %v4308, 2
        %v4317 = vsel %vm762, %v4316, %v4315
        %v4318 = vsel %vm776, %v4316, %v4317
        %v4319 = vrot.slane %v4311, 1
        %v4320 = vsel %vm765, %v4319, %v4318
        %v4321 = vsel %vm779, %v4319, %v4320
        %v4322 = vsel %vm768, %v4314, %v4321
        %v4323 = vsel %vm782, %v4314, %v4322
        %4324 = vrot.lane.b32.xlu0 %v4323, 32
        %v4325 = vpop.permute.xlu0 %4324
        %4327 = vst.msk [vmem:[%s446 + $0xc] sm:$0xf] %vm1464, %v4325
        %4328 = vst.msk [vmem:[#allocation2 - $0x7] sm:$0x80] %vm2422, %v4295
        %4329 = vst.msk [vmem:[#allocation2 + $0x1] sm:$0x7] %vm2424, %v4297
        %v4334 = vrot.slane %v4258, 7
        %v4335 = vrot.slane %v4259, 6
        %v4336 = vsel %vm762, %v4335, %v4334
        %v4337 = vrot.slane %v4260, 5
        %v4338 = vsel %vm765, %v4337, %v4336
        %4341 = vst.msk [vmem:[#allocation3 - $0x7] sm:$0x80] %vm2422, %v4257
        %4342 = vst.msk [vmem:[#allocation3 + $0x1] sm:$0x7] %vm2424, %v4338
        %p4343 = scmp.eq.s32.totalorder %s33, 1
        // Predicated region
        $region87: #{tpu_custom_call.1} parent=77 // pred_check
          %p4344 = pneg %p4343
        $region88: #{tpu_custom_call.1} parent=77 // pred_check_branch
          %4346 = sbr.rel (%p4344) target = $region90
        $region89: #{tpu_custom_call.1} parent=77 // pred_region
          %4347 = vst.msk [vmem:[#allocation9 - $0x7] sm:$0x80] %vm2422, %v4295
          %4348 = vst.msk [vmem:[#allocation9 + $0x1] sm:$0x7] %vm2424, %v4297
          %4349 = vst.msk [vmem:[#allocation10 - $0x7] sm:$0x80] %vm2422, %v4257
          %4350 = vst.msk [vmem:[#allocation10 + $0x1] sm:$0x7] %vm2424, %v4338
        $region90: #{tpu_custom_call.1} parent=77 // pred_fallthru
          _
        %s4351 = sand.u32 %s193, 1
        %s4352 = scalar_lea.sflag [#allocation6], %s4351
        %s4353 = sand.u32 %s193, 1
        %s4354 = smul.addr %s4353, 16
        %s4355 = scalar_lea.vmem [#allocation5], %s4354
        %s4356 = sand.u32 %s28, 1
        %s4357 = scalar_lea.sflag [#allocation8], %s4356
        %s4358 = sand.u32 %s221, 1
        %s4359 = smul.addr %s4358, 64
        %s4360 = scalar_lea.vmem [#allocation7], %s4359
        // Predicated region
        $region91: #{tpu_custom_call.1} parent=77 // pred_check
          %p4361 = pneg %p203
        $region92: #{tpu_custom_call.1} parent=77 // pred_check_branch
          %4363 = sbr.rel (%p4361) target = $region94
        $region93: #{tpu_custom_call.1} parent=77 // pred_region
          %s4364 = smul.u32 4, %s33
          %4366 = vsyncadd %s4352, 0
          %s4367 = smul.addr %s32, 8
          %s4368 = sadd.s32 %s4364, %s4367
          %s4369 = smul.addr %s4368, 4
          %s4370 = scalar_lea.hbm %s6, %s4369
          %s4372 = sshll.u32 %s4355, 4
          %s4373 = int_to_ptr.vmem [resolvable:$true] %s4372
          %s4374 = sshll.u32 %s4370, 4
          %s4375 = int_to_ptr.hbm [resolvable:$true] %s4374
          %4377 = dma.vmem_to_hbm [thread:$0]  %s4373, 256, %s4375, %s4352
        $region94: #{tpu_custom_call.1} parent=77 // pred_fallthru
          _
        // Predicated region
        $region95: #{tpu_custom_call.1} parent=77 // pred_check
          %p4378 = pneg %p231
        $region96: #{tpu_custom_call.1} parent=77 // pred_check_branch
          %4380 = sbr.rel (%p4378) target = $region98
        $region97: #{tpu_custom_call.1} parent=77 // pred_region
          %s4381 = smul.u32 16, %s33
          %4383 = vsyncadd %s4357, 0
          %s4384 = sadd.s32 %s32, %s4381
          %s4385 = smul.addr %s4384, 4
          %s4386 = scalar_lea.hbm %s7, %s4385
          %s4387 = sshll.u32 %s4360, 4
          %s4388 = int_to_ptr.vmem [resolvable:$true] %s4387
          %s4389 = sshll.u32 %s4386, 4
          %s4390 = int_to_ptr.hbm [resolvable:$true] %s4389
          %4395 = dma.vmem_to_hbm [thread:$0]  %s4388, 1024, %s4390, %s4357, 64, 64, 4
        $region98: #{tpu_custom_call.1} parent=77 // pred_fallthru
          _
        // Predicated region
        $region99: #{tpu_custom_call.1} parent=77 // pred_check
          %p4396 = pneg %p257
        $region100: #{tpu_custom_call.1} parent=77 // pred_check_branch
          %4398 = sbr.rel (%p4396) target = $region102
        $region101: #{tpu_custom_call.1} parent=77 // pred_region
          %4400 = vsyncadd [#allocation8], 0
          %s4401 = smul.addr %s32, 4
          %s4402 = scalar_lea.hbm %s8, %s4401
          %s4404 = sshll.u32 [#allocation9], 4
          %s4405 = int_to_ptr.vmem [resolvable:$true] %s4404
          %s4406 = sshll.u32 %s4402, 4
          %s4407 = int_to_ptr.hbm [resolvable:$true] %s4406
          %4409 = dma.vmem_to_hbm [thread:$0]  %s4405, 64, %s4407, [#allocation8]
        $region102: #{tpu_custom_call.1} parent=77 // pred_fallthru
          _
        // Predicated region
        $region103: #{tpu_custom_call.1} parent=77 // pred_check
          %p4410 = pneg %p283
        $region104: #{tpu_custom_call.1} parent=77 // pred_check_branch
          %4412 = sbr.rel (%p4410) target = $region106
        $region105: #{tpu_custom_call.1} parent=77 // pred_region
          %4414 = vsyncadd [#allocation11], 0
          %s4415 = smul.addr %s32, 4
          %s4416 = scalar_lea.hbm %s9, %s4415
          %s4418 = sshll.u32 [#allocation10], 4
          %s4419 = int_to_ptr.vmem [resolvable:$true] %s4418
          %s4420 = sshll.u32 %s4416, 4
          %s4421 = int_to_ptr.hbm [resolvable:$true] %s4420
          %4423 = dma.vmem_to_hbm [thread:$0]  %s4419, 64, %s4421, [#allocation11]
        $region106: #{tpu_custom_call.1} parent=77 // pred_fallthru
          _
        // Predicated region
        $region107: #{tpu_custom_call.1} parent=77 // pred_check
          %p4424 = pneg %p257
        $region108: #{tpu_custom_call.1} parent=77 // pred_check_branch
          %4426 = sbr.rel (%p4424) target = $region110
        $region109: #{tpu_custom_call.1} parent=77 // pred_region
          %4428 = dma.done [#allocation8], 64
        $region110: #{tpu_custom_call.1} parent=77 // pred_fallthru
          _
        // Predicated region
        $region111: #{tpu_custom_call.1} parent=77 // pred_check
          %p4429 = pneg %p283
        $region112: #{tpu_custom_call.1} parent=77 // pred_check_branch
          %4431 = sbr.rel (%p4429) target = $region114
        $region113: #{tpu_custom_call.1} parent=77 // pred_region
          %4433 = dma.done [#allocation11], 64
        $region114: #{tpu_custom_call.1} parent=77 // pred_fallthru
          _
      $region78: #{tpu_custom_call.1} parent=5 // pred_fallthru
        _
      %p4434 = scmp.le.s32.totalorder 2, %s23
      // Predicated region
      $region115: #{tpu_custom_call.1} parent=5 // pred_check
        %p4435 = pneg %p4434
      $region116: #{tpu_custom_call.1} parent=5 // pred_check_branch
        %4437 = sbr.rel (%p4435) target = $region118
      $region117: #{tpu_custom_call.1} parent=5 // pred_region
        %s4438 = ssub.s32 %s23, 2
        // Predicated region
        $region119: #{tpu_custom_call.1} parent=117 // pred_check
          %p4439 = pneg %p209
        $region120: #{tpu_custom_call.1} parent=117 // pred_check_branch
          %4441 = sbr.rel (%p4439) target = $region122
        $region121: #{tpu_custom_call.1} parent=117 // pred_region
          %s4442 = sand.u32 %s194, 1
          %s4443 = scalar_lea.sflag [#allocation6], %s4442
          %s4444 = sand.u32 %s194, 1
          %s4445 = smul.addr %s4444, 16
          %s4446 = scalar_lea.vmem [#allocation5], %s4445
          %4448 = dma.done %s4443, 256
        $region122: #{tpu_custom_call.1} parent=117 // pred_fallthru
          _
        // Predicated region
        $region123: #{tpu_custom_call.1} parent=117 // pred_check
          %p4449 = pneg %p237
        $region124: #{tpu_custom_call.1} parent=117 // pred_check_branch
          %4451 = sbr.rel (%p4449) target = $region126
        $region125: #{tpu_custom_call.1} parent=117 // pred_region
          %s4452 = sand.u32 %s29, 1
          %s4453 = scalar_lea.sflag [#allocation8], %s4452
          %s4454 = sand.u32 %s222, 1
          %s4455 = smul.addr %s4454, 64
          %s4456 = scalar_lea.vmem [#allocation7], %s4455
          %4458 = dma.done %s4453, 1024
        $region126: #{tpu_custom_call.1} parent=117 // pred_fallthru
          _
      $region118: #{tpu_custom_call.1} parent=5 // pred_fallthru
        _
    $region6: #{tpu_custom_call.1} parent=1 // loop_footer
      %s27 = sadd.s32 1, %s23
    $region7: #{tpu_custom_call.1} parent=1 // loop_footer_branch
      %22 = sbr.rel target = $region3
    $region8: #{tpu_custom_call.1} parent=1 // loop_exit
      _
    %4459 = vsyncpa [#allocation6], 1
    %s4460 = scalar_lea.sflag [#allocation6], 1
    %4461 = vsyncpa %s4460, 1
    %4462 = vsyncpa [#allocation8], 1
    %s4463 = scalar_lea.sflag [#allocation8], 1
    %4464 = vsyncpa %s4463, 1
    %4465 = vsyncpa [#allocation11], 1

</llo_original>
